<compile_context>
chip_gen: v7x
topology: tpu7x:2x2x1
jax: 0.10.0
libtpu: 0.0.40
codegen_flags: <defaults>
</compile_context>

<pallas_src>
import functools

import jax
import jax.numpy as jnp
from jax.experimental import pallas as pl
from jax.experimental.pallas import tpu as pltpu

# ----------------------------- model config ---------------------------------
VOCAB = 100
MAX_POS = 16
TYPE_VOCAB = 2
HIDDEN = 32
HEADS = 2
HEAD_DIM = HIDDEN // HEADS
FFN = 64
LAYERS = 2
NUM_LABELS = 118
PAD_LABELS = 128            # lane-dense classifier width (118 -> 128)
LN_EPS = 1e-12
NEG_INF = -1e9


# ----------------------------- fused Pallas kernel ---------------------------
def _layer_norm(x, g, b):
    mu = jnp.mean(x, axis=-1, keepdims=True)
    var = jnp.mean(jnp.square(x - mu), axis=-1, keepdims=True)
    return (x - mu) * jax.lax.rsqrt(var + LN_EPS) * g + b


def _encoder_kernel(xid_ref, seg_ref, mask_ref,
                    wemb_ref, temb_ref, pemb_ref, eg_ref, eb_ref,
                    wqkv_ref, bqkv_ref, wo_ref, bo_ref,
                    w1_ref, b1_ref, w2_ref, b2_ref,
                    l1g_ref, l1b_ref, l2g_ref, l2b_ref,
                    pool_w_ref, pool_b_ref, cls_w_ref, cls_b_ref,
                    out_ref, ctx_ref, *, batch, seq):
    """Embeddings + whole encoder + pooler + classifier, VMEM-resident."""
    bs = batch * seq

    # ---- embeddings (fused in-kernel) -------------------------------------
    ids = xid_ref[...]                                            # (BS, 1) int32
    onehot = jnp.where(
        ids == jax.lax.broadcasted_iota(jnp.int32, (bs, VOCAB), 1),
        1.0, 0.0)                                                 # (BS, VOCAB)
    word = jnp.dot(onehot, wemb_ref[...],
                   preferred_element_type=jnp.float32)            # (BS, H)

    seg = seg_ref[...]                                            # (BS, 1) f32 in {0,1}
    t0 = temb_ref[0:1, :]
    t1 = temb_ref[1:2, :]
    typ = t0 + seg * (t1 - t0)                                    # (BS, H)

    pos_s = pemb_ref[0:seq, :]                                    # (S, H)
    pos = jnp.concatenate([pos_s] * batch, axis=0)                # (BS, H)

    h = _layer_norm(word + typ + pos, eg_ref[...], eb_ref[...])

    # Additive attention-mask bias built in-kernel from the (B, S) mask.
    neg_bias = (1.0 - mask_ref[...].astype(jnp.float32)) * NEG_INF   # (B, S)

    # ---- transformer layers (static unroll: 2) -----------------------------
    for l in range(LAYERS):
        # Fused QKV projection: one (B*S, H) @ (H, 3H) matmul.
        qkv = jnp.dot(h, wqkv_ref[l],
                      preferred_element_type=jnp.float32) + bqkv_ref[l]
        q = qkv[:, 0:HIDDEN]              # 1/sqrt(HEAD_DIM) folded into wq/bq
        k = qkv[:, HIDDEN:2 * HIDDEN]
        v = qkv[:, 2 * HIDDEN:3 * HIDDEN]

        # Per-(batch, head) attention; head split is a static lane slice.
        for b in range(batch):
            row = b * seq
            bias_b = neg_bias[b:b + 1, :]                         # (1, S)
            for hd in range(HEADS):
                c0 = hd * HEAD_DIM
                qh = q[row:row + seq, c0:c0 + HEAD_DIM]           # (S, D)
                kh = k[row:row + seq, c0:c0 + HEAD_DIM]
                vh = v[row:row + seq, c0:c0 + HEAD_DIM]
                s = jax.lax.dot_general(qh, kh, (((1,), (1,)), ((), ())),
                                        preferred_element_type=jnp.float32)
                s = s + bias_b                                    # (S, S)
                m = jnp.max(s, axis=-1, keepdims=True)
                p = jnp.exp(s - m)
                p = p / jnp.sum(p, axis=-1, keepdims=True)
                ctx_ref[pl.ds(row, seq), pl.ds(c0, HEAD_DIM)] = jnp.dot(
                    p, vh, preferred_element_type=jnp.float32)

        attn_out = jnp.dot(ctx_ref[...], wo_ref[l],
                           preferred_element_type=jnp.float32) + bo_ref[l]
        h = _layer_norm(h + attn_out, l1g_ref[l], l1b_ref[l])

        f = jnp.dot(h, w1_ref[l], preferred_element_type=jnp.float32) + b1_ref[l]
        f = jax.nn.gelu(f, approximate=True)   # TODO(synk): HF BERT uses exact erf-GELU; no erf lowering, tanh approx used.
        f = jnp.dot(f, w2_ref[l], preferred_element_type=jnp.float32) + b2_ref[l]
        h = _layer_norm(h + f, l2g_ref[l], l2b_ref[l])

    # ---- pooler + classifier, batched -------------------------------------
    # Gather the [CLS] rows with a one-hot selection matmul (MXU gather).
    sel = jnp.where(
        jax.lax.broadcasted_iota(jnp.int32, (batch, bs), 1)
        == seq * jax.lax.broadcasted_iota(jnp.int32, (batch, bs), 0),
        1.0, 0.0)                                                 # (B, BS)
    cls_rows = jnp.dot(sel, h, preferred_element_type=jnp.float32)   # (B, H)
    pooled = jnp.tanh(
        jnp.dot(cls_rows, pool_w_ref[...],
                preferred_element_type=jnp.float32) + pool_b_ref[...])
    out_ref[...] = (
        jnp.dot(pooled, cls_w_ref[...],
                preferred_element_type=jnp.float32) + cls_b_ref[...]
    ).astype(out_ref.dtype)                       # single lane-dense (B,128) store


def _full_spec(shape):
    zeros = (0,) * len(shape)
    return pl.BlockSpec(shape, lambda i: zeros)


# ----------------------------- parameters ------------------------------------
def init_params(key):
    def nrm(k, shape):
        return 0.02 * jax.random.normal(k, shape, jnp.float32)

    keys = iter(jax.random.split(key, 64))
    scale = 1.0 / float(HEAD_DIM) ** 0.5

    wqkv, bqkv, wo, bo, w1, b1, w2, b2 = ([] for _ in range(8))
    for _ in range(LAYERS):
        wq = nrm(next(keys), (HIDDEN, HIDDEN)) * scale   # fold 1/sqrt(d) into Q
        wk = nrm(next(keys), (HIDDEN, HIDDEN))
        wv = nrm(next(keys), (HIDDEN, HIDDEN))
        wqkv.append(jnp.concatenate([wq, wk, wv], axis=1))
        bqkv.append(jnp.zeros((1, 3 * HIDDEN), jnp.float32))
        wo.append(nrm(next(keys), (HIDDEN, HIDDEN)))
        bo.append(jnp.zeros((1, HIDDEN), jnp.float32))
        w1.append(nrm(next(keys), (HIDDEN, FFN)))
        b1.append(jnp.zeros((1, FFN), jnp.float32))
        w2.append(nrm(next(keys), (FFN, HIDDEN)))
        b2.append(jnp.zeros((1, HIDDEN), jnp.float32))

    cls_w = nrm(next(keys), (HIDDEN, NUM_LABELS))
    cls_w = jnp.pad(cls_w, ((0, 0), (0, PAD_LABELS - NUM_LABELS)))

    params = {
        "word_emb": nrm(next(keys), (VOCAB, HIDDEN)),
        "pos_emb": nrm(next(keys), (MAX_POS, HIDDEN)),
        "type_emb": nrm(next(keys), (TYPE_VOCAB, HIDDEN)),
        "emb_ln_g": jnp.ones((1, HIDDEN), jnp.float32),
        "emb_ln_b": jnp.zeros((1, HIDDEN), jnp.float32),
        "wqkv": jnp.stack(wqkv), "bqkv": jnp.stack(bqkv),
        "wo": jnp.stack(wo), "bo": jnp.stack(bo),
        "w1": jnp.stack(w1), "b1": jnp.stack(b1),
        "w2": jnp.stack(w2), "b2": jnp.stack(b2),
        "ln1_g": jnp.ones((LAYERS, 1, HIDDEN), jnp.float32),
        "ln1_b": jnp.zeros((LAYERS, 1, HIDDEN), jnp.float32),
        "ln2_g": jnp.ones((LAYERS, 1, HIDDEN), jnp.float32),
        "ln2_b": jnp.zeros((LAYERS, 1, HIDDEN), jnp.float32),
        "pool_w": nrm(next(keys), (HIDDEN, HIDDEN)),
        "pool_b": jnp.zeros((1, HIDDEN), jnp.float32),
        "cls_w": cls_w,
        "cls_b": jnp.zeros((1, PAD_LABELS), jnp.float32),
    }
    return params


# ----------------------------- forward pass -----------------------------------
def intent_classifier_forward(params, x, mask, segs, target=None):
    """Mirrors IntentClassifier.forward: x=input_ids, mask=attention_mask,
    segs=token_type_ids, optional target -> {loss, logits} else {logits}."""
    x = x.astype(jnp.int32)            # x.long()
    mask = mask.astype(jnp.float32)    # mask.float()
    segs = segs.astype(jnp.int32)      # segs.long()
    B, S = x.shape
    assert S <= MAX_POS, "sequence length exceeds positional table"

    x_ids = x.reshape(B * S, 1)
    seg_f = segs.astype(jnp.float32).reshape(B * S, 1)

    operands = [
        x_ids, seg_f, mask,
        params["word_emb"], params["type_emb"], params["pos_emb"],
        params["emb_ln_g"], params["emb_ln_b"],
        params["wqkv"], params["bqkv"], params["wo"], params["bo"],
        params["w1"], params["b1"], params["w2"], params["b2"],
        params["ln1_g"], params["ln1_b"], params["ln2_g"], params["ln2_b"],
        params["pool_w"], params["pool_b"], params["cls_w"], params["cls_b"],
    ]

    logits_pad = pl.pallas_call(
        functools.partial(_encoder_kernel, batch=B, seq=S),
        out_shape=jax.ShapeDtypeStruct((B, PAD_LABELS), jnp.float32),
        grid=(1,),
        in_specs=[_full_spec(a.shape) for a in operands],
        out_specs=_full_spec((B, PAD_LABELS)),
        scratch_shapes=[pltpu.VMEM((B * S, HIDDEN), jnp.float32)],
        compiler_params=pltpu.CompilerParams(
            dimension_semantics=("arbitrary",)),
    )(*operands)

    logits = logits_pad[:, :NUM_LABELS]                         # (B, 118)

    if target is not None:
        # HF single-label classification: CrossEntropy over logits.
        labels = target.reshape(-1).astype(jnp.int32)
        logp = jax.nn.log_softmax(logits.astype(jnp.float32), axis=-1)
        loss = -jnp.mean(jnp.take_along_axis(logp, labels[:, None], axis=-1))
        return {"loss": loss, "logits": logits}
    return {"logits": logits}


# ----------------------------- main -------------------------------------------
if __name__ == "__main__":
    key = jax.random.PRNGKey(0)
    k_param, k_x, k_tgt = jax.random.split(key, 3)

    params = init_params(k_param)

    B, S = 2, 8
    x = jax.random.randint(k_x, (B, S), 0, VOCAB, dtype=jnp.int32)
    mask = jnp.ones((B, S), jnp.float32)
    segs = jnp.zeros((B, S), jnp.int32)
    target = jax.random.randint(k_tgt, (B,), 0, NUM_LABELS, dtype=jnp.int32)

    fwd = jax.jit(functools.partial(intent_classifier_forward, params))
    out = fwd(x, mask, segs)
    jax.block_until_ready(out["logits"])
    assert out["logits"].shape == (B, NUM_LABELS)

    out_loss = jax.jit(
        functools.partial(intent_classifier_forward, params)
    )(x, mask, segs, target)
    jax.block_until_ready(out_loss["loss"])

    print("KERNEL_OK")
</pallas_src>

<mosaic_0001>
module attributes {stable_mosaic.version = 11 : i64} {
  func.func @_encoder_kernel(%arg0: i32, %arg1: memref<16x1xi32, #tpu.memory_space<vmem>>, %arg2: memref<16x1xf32, #tpu.memory_space<vmem>>, %arg3: memref<2x8xf32, #tpu.memory_space<vmem>>, %arg4: memref<100x32xf32, #tpu.memory_space<vmem>>, %arg5: memref<2x32xf32, #tpu.memory_space<vmem>>, %arg6: memref<16x32xf32, #tpu.memory_space<vmem>>, %arg7: memref<1x32xf32, #tpu.memory_space<vmem>>, %arg8: memref<1x32xf32, #tpu.memory_space<vmem>>, %arg9: memref<2x32x96xf32, #tpu.memory_space<vmem>>, %arg10: memref<2x1x96xf32, #tpu.memory_space<vmem>>, %arg11: memref<2x32x32xf32, #tpu.memory_space<vmem>>, %arg12: memref<2x1x32xf32, #tpu.memory_space<vmem>>, %arg13: memref<2x32x64xf32, #tpu.memory_space<vmem>>, %arg14: memref<2x1x64xf32, #tpu.memory_space<vmem>>, %arg15: memref<2x64x32xf32, #tpu.memory_space<vmem>>, %arg16: memref<2x1x32xf32, #tpu.memory_space<vmem>>, %arg17: memref<2x1x32xf32, #tpu.memory_space<vmem>>, %arg18: memref<2x1x32xf32, #tpu.memory_space<vmem>>, %arg19: memref<2x1x32xf32, #tpu.memory_space<vmem>>, %arg20: memref<2x1x32xf32, #tpu.memory_space<vmem>>, %arg21: memref<32x32xf32, #tpu.memory_space<vmem>>, %arg22: memref<1x32xf32, #tpu.memory_space<vmem>>, %arg23: memref<32x128xf32, #tpu.memory_space<vmem>>, %arg24: memref<1x128xf32, #tpu.memory_space<vmem>>, %arg25: memref<2x128xf32, #tpu.memory_space<vmem>>, %arg26: memref<16x32xf32, #tpu.memory_space<vmem>>) attributes {dimension_semantics = [#tpu.dimension_semantics<arbitrary>], iteration_bounds = array<i64: 1>, scalar_prefetch = 0 : i64, scratch_operands = 1 : i64, tpu.core_type = #tpu.core_type<tc>, window_params = [{pipeline_mode = #tpu.pipeline_mode<synchronous>, transform_indices = @transform_0, window_bounds = array<i64: 16, 1>}, {pipeline_mode = #tpu.pipeline_mode<synchronous>, transform_indices = @transform_1, window_bounds = array<i64: 16, 1>}, {pipeline_mode = #tpu.pipeline_mode<synchronous>, transform_indices = @transform_2, window_bounds = array<i64: 2, 8>}, {pipeline_mode = #tpu.pipeline_mode<synchronous>, transform_indices = @transform_3, window_bounds = array<i64: 100, 32>}, {pipeline_mode = #tpu.pipeline_mode<synchronous>, transform_indices = @transform_4, window_bounds = array<i64: 2, 32>}, {pipeline_mode = #tpu.pipeline_mode<synchronous>, transform_indices = @transform_5, window_bounds = array<i64: 16, 32>}, {pipeline_mode = #tpu.pipeline_mode<synchronous>, transform_indices = @transform_6, window_bounds = array<i64: 1, 32>}, {pipeline_mode = #tpu.pipeline_mode<synchronous>, transform_indices = @transform_7, window_bounds = array<i64: 1, 32>}, {pipeline_mode = #tpu.pipeline_mode<synchronous>, transform_indices = @transform_8, window_bounds = array<i64: 2, 32, 96>}, {pipeline_mode = #tpu.pipeline_mode<synchronous>, transform_indices = @transform_9, window_bounds = array<i64: 2, 1, 96>}, {pipeline_mode = #tpu.pipeline_mode<synchronous>, transform_indices = @transform_10, window_bounds = array<i64: 2, 32, 32>}, {pipeline_mode = #tpu.pipeline_mode<synchronous>, transform_indices = @transform_11, window_bounds = array<i64: 2, 1, 32>}, {pipeline_mode = #tpu.pipeline_mode<synchronous>, transform_indices = @transform_12, window_bounds = array<i64: 2, 32, 64>}, {pipeline_mode = #tpu.pipeline_mode<synchronous>, transform_indices = @transform_13, window_bounds = array<i64: 2, 1, 64>}, {pipeline_mode = #tpu.pipeline_mode<synchronous>, transform_indices = @transform_14, window_bounds = array<i64: 2, 64, 32>}, {pipeline_mode = #tpu.pipeline_mode<synchronous>, transform_indices = @transform_15, window_bounds = array<i64: 2, 1, 32>}, {pipeline_mode = #tpu.pipeline_mode<synchronous>, transform_indices = @transform_16, window_bounds = array<i64: 2, 1, 32>}, {pipeline_mode = #tpu.pipeline_mode<synchronous>, transform_indices = @transform_17, window_bounds = array<i64: 2, 1, 32>}, {pipeline_mode = #tpu.pipeline_mode<synchronous>, transform_indices = @transform_18, window_bounds = array<i64: 2, 1, 32>}, {pipeline_mode = #tpu.pipeline_mode<synchronous>, transform_indices = @transform_19, window_bounds = array<i64: 2, 1, 32>}, {pipeline_mode = #tpu.pipeline_mode<synchronous>, transform_indices = @transform_20, window_bounds = array<i64: 32, 32>}, {pipeline_mode = #tpu.pipeline_mode<synchronous>, transform_indices = @transform_21, window_bounds = array<i64: 1, 32>}, {pipeline_mode = #tpu.pipeline_mode<synchronous>, transform_indices = @transform_22, window_bounds = array<i64: 32, 128>}, {pipeline_mode = #tpu.pipeline_mode<synchronous>, transform_indices = @transform_23, window_bounds = array<i64: 1, 128>}, {pipeline_mode = #tpu.pipeline_mode<synchronous>, transform_indices = @transform_24, window_bounds = array<i64: 2, 128>}]} {
    %c0 = arith.constant 0 : index
    %c0_0 = arith.constant 0 : index
    %0 = vector.load %arg1[%c0, %c0_0] : memref<16x1xi32, #tpu.memory_space<vmem>>, vector<16x1xi32>
    %1 = tpu.iota {dimensions = array<i32: 1>} : vector<16x100xi32>
    %2 = vector.broadcast %0 : vector<16x1xi32> to vector<16x100xi32>
    %3 = arith.cmpi eq, %2, %1 : vector<16x100xi32>
    %cst = arith.constant 1.000000e+00 : f32
    %cst_1 = arith.constant 0.000000e+00 : f32
    %4 = vector.broadcast %cst : f32 to vector<16x100xf32>
    %5 = vector.broadcast %cst_1 : f32 to vector<16x100xf32>
    %6 = arith.select %3, %4, %5 : vector<16x100xi1>, vector<16x100xf32>
    %c0_2 = arith.constant 0 : index
    %c0_3 = arith.constant 0 : index
    %7 = vector.load %arg4[%c0_2, %c0_3] : memref<100x32xf32, #tpu.memory_space<vmem>>, vector<100x32xf32>
    %cst_4 = arith.constant dense<0.000000e+00> : vector<16x32xf32>
    %8 = tpu.matmul %6, %7, %cst_4 {dimension_numbers = #tpu.dot_dimension_numbers<[1], [0], [0], [1], [0, 0, 1, 1], [], []>} : vector<16x100xf32>, vector<100x32xf32>, vector<16x32xf32> -> vector<16x32xf32>
    %c0_5 = arith.constant 0 : index
    %c0_6 = arith.constant 0 : index
    %9 = vector.load %arg2[%c0_5, %c0_6] : memref<16x1xf32, #tpu.memory_space<vmem>>, vector<16x1xf32>
    %c0_7 = arith.constant 0 : index
    %c0_8 = arith.constant 0 : index
    %10 = vector.load %arg5[%c0_7, %c0_8] : memref<2x32xf32, #tpu.memory_space<vmem>>, vector<1x32xf32>
    %c1 = arith.constant 1 : index
    %c0_9 = arith.constant 0 : index
    %11 = vector.load %arg5[%c1, %c0_9] : memref<2x32xf32, #tpu.memory_space<vmem>>, vector<1x32xf32>
    %12 = arith.subf %11, %10 : vector<1x32xf32>
    %13 = vector.broadcast %9 : vector<16x1xf32> to vector<16x32xf32>
    %14 = vector.broadcast %12 : vector<1x32xf32> to vector<16x32xf32>
    %15 = arith.mulf %13, %14 : vector<16x32xf32>
    %16 = vector.broadcast %10 : vector<1x32xf32> to vector<16x32xf32>
    %17 = arith.addf %16, %15 : vector<16x32xf32>
    %c0_10 = arith.constant 0 : index
    %c0_11 = arith.constant 0 : index
    %18 = vector.load %arg6[%c0_10, %c0_11] : memref<16x32xf32, #tpu.memory_space<vmem>>, vector<8x32xf32>
    %19 = tpu.concatenate %18, %18 in 0 : vector<8x32xf32>, vector<8x32xf32> -> vector<16x32xf32>
    %20 = arith.addf %8, %17 : vector<16x32xf32>
    %21 = arith.addf %20, %19 : vector<16x32xf32>
    %c0_12 = arith.constant 0 : index
    %c0_13 = arith.constant 0 : index
    %22 = vector.load %arg7[%c0_12, %c0_13] : memref<1x32xf32, #tpu.memory_space<vmem>>, vector<1x32xf32>
    %c0_14 = arith.constant 0 : index
    %c0_15 = arith.constant 0 : index
    %23 = vector.load %arg8[%c0_14, %c0_15] : memref<1x32xf32, #tpu.memory_space<vmem>>, vector<1x32xf32>
    %cst_16 = arith.constant dense<0.000000e+00> : vector<16xf32>
    %24 = vector.multi_reduction <add>, %21, %cst_16 [1] : vector<16x32xf32> to vector<16xf32>
    %25 = vector.shape_cast %24 : vector<16xf32> to vector<16x1xf32>
    %cst_17 = arith.constant 3.200000e+01 : f32
    %26 = vector.broadcast %cst_17 : f32 to vector<16x1xf32>
    %27 = arith.divf %25, %26 : vector<16x1xf32>
    %28 = vector.broadcast %27 : vector<16x1xf32> to vector<16x32xf32>
    %29 = arith.subf %21, %28 : vector<16x32xf32>
    %30 = arith.mulf %29, %29 : vector<16x32xf32>
    %cst_18 = arith.constant dense<0.000000e+00> : vector<16xf32>
    %31 = vector.multi_reduction <add>, %30, %cst_18 [1] : vector<16x32xf32> to vector<16xf32>
    %32 = vector.shape_cast %31 : vector<16xf32> to vector<16x1xf32>
    %cst_19 = arith.constant 3.200000e+01 : f32
    %33 = vector.broadcast %cst_19 : f32 to vector<16x1xf32>
    %34 = arith.divf %32, %33 : vector<16x1xf32>
    %35 = vector.broadcast %27 : vector<16x1xf32> to vector<16x32xf32>
    %36 = arith.subf %21, %35 : vector<16x32xf32>
    %cst_20 = arith.constant 9.99999996E-13 : f32
    %37 = vector.broadcast %cst_20 : f32 to vector<16x1xf32>
    %38 = arith.addf %34, %37 : vector<16x1xf32>
    %39 = math.rsqrt %38 : vector<16x1xf32>
    %40 = vector.broadcast %39 : vector<16x1xf32> to vector<16x32xf32>
    %41 = arith.mulf %36, %40 : vector<16x32xf32>
    %42 = vector.broadcast %22 : vector<1x32xf32> to vector<16x32xf32>
    %43 = arith.mulf %41, %42 : vector<16x32xf32>
    %44 = vector.broadcast %23 : vector<1x32xf32> to vector<16x32xf32>
    %45 = arith.addf %43, %44 : vector<16x32xf32>
    %c0_21 = arith.constant 0 : index
    %c0_22 = arith.constant 0 : index
    %46 = vector.load %arg3[%c0_21, %c0_22] : memref<2x8xf32, #tpu.memory_space<vmem>>, vector<2x8xf32>
    %cst_23 = arith.constant 1.000000e+00 : f32
    %47 = vector.broadcast %cst_23 : f32 to vector<2x8xf32>
    %48 = arith.subf %47, %46 : vector<2x8xf32>
    %cst_24 = arith.constant -1.000000e+09 : f32
    %49 = vector.broadcast %cst_24 : f32 to vector<2x8xf32>
    %50 = arith.mulf %48, %49 : vector<2x8xf32>
    %c0_25 = arith.constant 0 : index
    %c0_26 = arith.constant 0 : index
    %c0_27 = arith.constant 0 : index
    %51 = vector.load %arg9[%c0_25, %c0_26, %c0_27] : memref<2x32x96xf32, #tpu.memory_space<vmem>>, vector<1x32x96xf32>
    %52 = vector.shape_cast %51 : vector<1x32x96xf32> to vector<32x96xf32>
    %cst_28 = arith.constant dense<0.000000e+00> : vector<16x96xf32>
    %53 = tpu.matmul %45, %52, %cst_28 {dimension_numbers = #tpu.dot_dimension_numbers<[1], [0], [0], [1], [0, 0, 1, 1], [], []>} : vector<16x32xf32>, vector<32x96xf32>, vector<16x96xf32> -> vector<16x96xf32>
    %c0_29 = arith.constant 0 : index
    %c0_30 = arith.constant 0 : index
    %c0_31 = arith.constant 0 : index
    %54 = vector.load %arg10[%c0_29, %c0_30, %c0_31] : memref<2x1x96xf32, #tpu.memory_space<vmem>>, vector<1x1x96xf32>
    %55 = vector.shape_cast %54 : vector<1x1x96xf32> to vector<1x96xf32>
    %56 = vector.broadcast %55 : vector<1x96xf32> to vector<16x96xf32>
    %57 = arith.addf %53, %56 : vector<16x96xf32>
    %58 = vector.extract_strided_slice %57 {offsets = [0, 0], sizes = [16, 32], strides = [1, 1]} : vector<16x96xf32> to vector<16x32xf32>
    %59 = vector.extract_strided_slice %57 {offsets = [0, 32], sizes = [16, 32], strides = [1, 1]} : vector<16x96xf32> to vector<16x32xf32>
    %60 = vector.extract_strided_slice %57 {offsets = [0, 64], sizes = [16, 32], strides = [1, 1]} : vector<16x96xf32> to vector<16x32xf32>
    %61 = vector.extract_strided_slice %50 {offsets = [0, 0], sizes = [1, 8], strides = [1, 1]} : vector<2x8xf32> to vector<1x8xf32>
    %62 = vector.extract_strided_slice %58 {offsets = [0, 0], sizes = [8, 16], strides = [1, 1]} : vector<16x32xf32> to vector<8x16xf32>
    %63 = vector.extract_strided_slice %59 {offsets = [0, 0], sizes = [8, 16], strides = [1, 1]} : vector<16x32xf32> to vector<8x16xf32>
    %64 = vector.extract_strided_slice %60 {offsets = [0, 0], sizes = [8, 16], strides = [1, 1]} : vector<16x32xf32> to vector<8x16xf32>
    %cst_32 = arith.constant dense<0.000000e+00> : vector<8x8xf32>
    %65 = tpu.matmul %62, %63, %cst_32 {dimension_numbers = #tpu.dot_dimension_numbers<[1], [1], [0], [0], [0, 0, 1, 0], [], []>} : vector<8x16xf32>, vector<8x16xf32>, vector<8x8xf32> -> vector<8x8xf32>
    %66 = vector.broadcast %61 : vector<1x8xf32> to vector<8x8xf32>
    %67 = arith.addf %65, %66 : vector<8x8xf32>
    %cst_33 = arith.constant dense<0xFF800000> : vector<8xf32>
    %68 = vector.multi_reduction <maximumf>, %67, %cst_33 [1] : vector<8x8xf32> to vector<8xf32>
    %69 = vector.shape_cast %68 : vector<8xf32> to vector<8x1xf32>
    %70 = vector.broadcast %69 : vector<8x1xf32> to vector<8x8xf32>
    %71 = arith.subf %67, %70 : vector<8x8xf32>
    %72 = math.exp %71 : vector<8x8xf32>
    %cst_34 = arith.constant dense<0.000000e+00> : vector<8xf32>
    %73 = vector.multi_reduction <add>, %72, %cst_34 [1] : vector<8x8xf32> to vector<8xf32>
    %74 = vector.shape_cast %73 : vector<8xf32> to vector<8x1xf32>
    %75 = vector.broadcast %74 : vector<8x1xf32> to vector<8x8xf32>
    %76 = arith.divf %72, %75 : vector<8x8xf32>
    %cst_35 = arith.constant dense<0.000000e+00> : vector<8x16xf32>
    %77 = tpu.matmul %76, %64, %cst_35 {dimension_numbers = #tpu.dot_dimension_numbers<[1], [0], [0], [1], [0, 0, 1, 1], [], []>} : vector<8x8xf32>, vector<8x16xf32>, vector<8x16xf32> -> vector<8x16xf32>
    %c0_36 = arith.constant 0 : index
    %c0_37 = arith.constant 0 : index
    %78 = vector.load %arg26[%c0_36, %c0_37] : memref<16x32xf32, #tpu.memory_space<vmem>>, vector<8x16xf32>
    tpu.vector_store %arg26[%c0_36, %c0_37], %77 {strides = array<i32>} : memref<16x32xf32, #tpu.memory_space<vmem>>, vector<8x16xf32>,
    %79 = vector.extract_strided_slice %58 {offsets = [0, 16], sizes = [8, 16], strides = [1, 1]} : vector<16x32xf32> to vector<8x16xf32>
    %80 = vector.extract_strided_slice %59 {offsets = [0, 16], sizes = [8, 16], strides = [1, 1]} : vector<16x32xf32> to vector<8x16xf32>
    %81 = vector.extract_strided_slice %60 {offsets = [0, 16], sizes = [8, 16], strides = [1, 1]} : vector<16x32xf32> to vector<8x16xf32>
    %cst_38 = arith.constant dense<0.000000e+00> : vector<8x8xf32>
    %82 = tpu.matmul %79, %80, %cst_38 {dimension_numbers = #tpu.dot_dimension_numbers<[1], [1], [0], [0], [0, 0, 1, 0], [], []>} : vector<8x16xf32>, vector<8x16xf32>, vector<8x8xf32> -> vector<8x8xf32>
    %83 = vector.broadcast %61 : vector<1x8xf32> to vector<8x8xf32>
    %84 = arith.addf %82, %83 : vector<8x8xf32>
    %cst_39 = arith.constant dense<0xFF800000> : vector<8xf32>
    %85 = vector.multi_reduction <maximumf>, %84, %cst_39 [1] : vector<8x8xf32> to vector<8xf32>
    %86 = vector.shape_cast %85 : vector<8xf32> to vector<8x1xf32>
    %87 = vector.broadcast %86 : vector<8x1xf32> to vector<8x8xf32>
    %88 = arith.subf %84, %87 : vector<8x8xf32>
    %89 = math.exp %88 : vector<8x8xf32>
    %cst_40 = arith.constant dense<0.000000e+00> : vector<8xf32>
    %90 = vector.multi_reduction <add>, %89, %cst_40 [1] : vector<8x8xf32> to vector<8xf32>
    %91 = vector.shape_cast %90 : vector<8xf32> to vector<8x1xf32>
    %92 = vector.broadcast %91 : vector<8x1xf32> to vector<8x8xf32>
    %93 = arith.divf %89, %92 : vector<8x8xf32>
    %cst_41 = arith.constant dense<0.000000e+00> : vector<8x16xf32>
    %94 = tpu.matmul %93, %81, %cst_41 {dimension_numbers = #tpu.dot_dimension_numbers<[1], [0], [0], [1], [0, 0, 1, 1], [], []>} : vector<8x8xf32>, vector<8x16xf32>, vector<8x16xf32> -> vector<8x16xf32>
    %c0_42 = arith.constant 0 : index
    %c16 = arith.constant 16 : index
    %95 = vector.load %arg26[%c0_42, %c16] : memref<16x32xf32, #tpu.memory_space<vmem>>, vector<8x16xf32>
    tpu.vector_store %arg26[%c0_42, %c16], %94 {strides = array<i32>} : memref<16x32xf32, #tpu.memory_space<vmem>>, vector<8x16xf32>,
    %96 = vector.extract_strided_slice %50 {offsets = [1, 0], sizes = [1, 8], strides = [1, 1]} : vector<2x8xf32> to vector<1x8xf32>
    %97 = vector.extract_strided_slice %58 {offsets = [8, 0], sizes = [8, 16], strides = [1, 1]} : vector<16x32xf32> to vector<8x16xf32>
    %98 = vector.extract_strided_slice %59 {offsets = [8, 0], sizes = [8, 16], strides = [1, 1]} : vector<16x32xf32> to vector<8x16xf32>
    %99 = vector.extract_strided_slice %60 {offsets = [8, 0], sizes = [8, 16], strides = [1, 1]} : vector<16x32xf32> to vector<8x16xf32>
    %cst_43 = arith.constant dense<0.000000e+00> : vector<8x8xf32>
    %100 = tpu.matmul %97, %98, %cst_43 {dimension_numbers = #tpu.dot_dimension_numbers<[1], [1], [0], [0], [0, 0, 1, 0], [], []>} : vector<8x16xf32>, vector<8x16xf32>, vector<8x8xf32> -> vector<8x8xf32>
    %101 = vector.broadcast %96 : vector<1x8xf32> to vector<8x8xf32>
    %102 = arith.addf %100, %101 : vector<8x8xf32>
    %cst_44 = arith.constant dense<0xFF800000> : vector<8xf32>
    %103 = vector.multi_reduction <maximumf>, %102, %cst_44 [1] : vector<8x8xf32> to vector<8xf32>
    %104 = vector.shape_cast %103 : vector<8xf32> to vector<8x1xf32>
    %105 = vector.broadcast %104 : vector<8x1xf32> to vector<8x8xf32>
    %106 = arith.subf %102, %105 : vector<8x8xf32>
    %107 = math.exp %106 : vector<8x8xf32>
    %cst_45 = arith.constant dense<0.000000e+00> : vector<8xf32>
    %108 = vector.multi_reduction <add>, %107, %cst_45 [1] : vector<8x8xf32> to vector<8xf32>
    %109 = vector.shape_cast %108 : vector<8xf32> to vector<8x1xf32>
    %110 = vector.broadcast %109 : vector<8x1xf32> to vector<8x8xf32>
    %111 = arith.divf %107, %110 : vector<8x8xf32>
    %cst_46 = arith.constant dense<0.000000e+00> : vector<8x16xf32>
    %112 = tpu.matmul %111, %99, %cst_46 {dimension_numbers = #tpu.dot_dimension_numbers<[1], [0], [0], [1], [0, 0, 1, 1], [], []>} : vector<8x8xf32>, vector<8x16xf32>, vector<8x16xf32> -> vector<8x16xf32>
    %c8 = arith.constant 8 : index
    %c0_47 = arith.constant 0 : index
    %113 = vector.load %arg26[%c8, %c0_47] : memref<16x32xf32, #tpu.memory_space<vmem>>, vector<8x16xf32>
    tpu.vector_store %arg26[%c8, %c0_47], %112 {strides = array<i32>} : memref<16x32xf32, #tpu.memory_space<vmem>>, vector<8x16xf32>,
    %114 = vector.extract_strided_slice %58 {offsets = [8, 16], sizes = [8, 16], strides = [1, 1]} : vector<16x32xf32> to vector<8x16xf32>
    %115 = vector.extract_strided_slice %59 {offsets = [8, 16], sizes = [8, 16], strides = [1, 1]} : vector<16x32xf32> to vector<8x16xf32>
    %116 = vector.extract_strided_slice %60 {offsets = [8, 16], sizes = [8, 16], strides = [1, 1]} : vector<16x32xf32> to vector<8x16xf32>
    %cst_48 = arith.constant dense<0.000000e+00> : vector<8x8xf32>
    %117 = tpu.matmul %114, %115, %cst_48 {dimension_numbers = #tpu.dot_dimension_numbers<[1], [1], [0], [0], [0, 0, 1, 0], [], []>} : vector<8x16xf32>, vector<8x16xf32>, vector<8x8xf32> -> vector<8x8xf32>
    %118 = vector.broadcast %96 : vector<1x8xf32> to vector<8x8xf32>
    %119 = arith.addf %117, %118 : vector<8x8xf32>
    %cst_49 = arith.constant dense<0xFF800000> : vector<8xf32>
    %120 = vector.multi_reduction <maximumf>, %119, %cst_49 [1] : vector<8x8xf32> to vector<8xf32>
    %121 = vector.shape_cast %120 : vector<8xf32> to vector<8x1xf32>
    %122 = vector.broadcast %121 : vector<8x1xf32> to vector<8x8xf32>
    %123 = arith.subf %119, %122 : vector<8x8xf32>
    %124 = math.exp %123 : vector<8x8xf32>
    %cst_50 = arith.constant dense<0.000000e+00> : vector<8xf32>
    %125 = vector.multi_reduction <add>, %124, %cst_50 [1] : vector<8x8xf32> to vector<8xf32>
    %126 = vector.shape_cast %125 : vector<8xf32> to vector<8x1xf32>
    %127 = vector.broadcast %126 : vector<8x1xf32> to vector<8x8xf32>
    %128 = arith.divf %124, %127 : vector<8x8xf32>
    %cst_51 = arith.constant dense<0.000000e+00> : vector<8x16xf32>
    %129 = tpu.matmul %128, %116, %cst_51 {dimension_numbers = #tpu.dot_dimension_numbers<[1], [0], [0], [1], [0, 0, 1, 1], [], []>} : vector<8x8xf32>, vector<8x16xf32>, vector<8x16xf32> -> vector<8x16xf32>
    %c8_52 = arith.constant 8 : index
    %c16_53 = arith.constant 16 : index
    %130 = vector.load %arg26[%c8_52, %c16_53] : memref<16x32xf32, #tpu.memory_space<vmem>>, vector<8x16xf32>
    tpu.vector_store %arg26[%c8_52, %c16_53], %129 {strides = array<i32>} : memref<16x32xf32, #tpu.memory_space<vmem>>, vector<8x16xf32>,
    %c0_54 = arith.constant 0 : index
    %c0_55 = arith.constant 0 : index
    %131 = vector.load %arg26[%c0_54, %c0_55] : memref<16x32xf32, #tpu.memory_space<vmem>>, vector<16x32xf32>
    %c0_56 = arith.constant 0 : index
    %c0_57 = arith.constant 0 : index
    %c0_58 = arith.constant 0 : index
    %132 = vector.load %arg11[%c0_56, %c0_57, %c0_58] : memref<2x32x32xf32, #tpu.memory_space<vmem>>, vector<1x32x32xf32>
    %133 = vector.shape_cast %132 : vector<1x32x32xf32> to vector<32x32xf32>
    %cst_59 = arith.constant dense<0.000000e+00> : vector<16x32xf32>
    %134 = tpu.matmul %131, %133, %cst_59 {dimension_numbers = #tpu.dot_dimension_numbers<[1], [0], [0], [1], [0, 0, 1, 1], [], []>} : vector<16x32xf32>, vector<32x32xf32>, vector<16x32xf32> -> vector<16x32xf32>
    %c0_60 = arith.constant 0 : index
    %c0_61 = arith.constant 0 : index
    %c0_62 = arith.constant 0 : index
    %135 = vector.load %arg12[%c0_60, %c0_61, %c0_62] : memref<2x1x32xf32, #tpu.memory_space<vmem>>, vector<1x1x32xf32>
    %136 = vector.shape_cast %135 : vector<1x1x32xf32> to vector<1x32xf32>
    %137 = vector.broadcast %136 : vector<1x32xf32> to vector<16x32xf32>
    %138 = arith.addf %134, %137 : vector<16x32xf32>
    %139 = arith.addf %45, %138 : vector<16x32xf32>
    %c0_63 = arith.constant 0 : index
    %c0_64 = arith.constant 0 : index
    %c0_65 = arith.constant 0 : index
    %140 = vector.load %arg17[%c0_63, %c0_64, %c0_65] : memref<2x1x32xf32, #tpu.memory_space<vmem>>, vector<1x1x32xf32>
    %141 = vector.shape_cast %140 : vector<1x1x32xf32> to vector<1x32xf32>
    %c0_66 = arith.constant 0 : index
    %c0_67 = arith.constant 0 : index
    %c0_68 = arith.constant 0 : index
    %142 = vector.load %arg18[%c0_66, %c0_67, %c0_68] : memref<2x1x32xf32, #tpu.memory_space<vmem>>, vector<1x1x32xf32>
    %143 = vector.shape_cast %142 : vector<1x1x32xf32> to vector<1x32xf32>
    %cst_69 = arith.constant dense<0.000000e+00> : vector<16xf32>
    %144 = vector.multi_reduction <add>, %139, %cst_69 [1] : vector<16x32xf32> to vector<16xf32>
    %145 = vector.shape_cast %144 : vector<16xf32> to vector<16x1xf32>
    %cst_70 = arith.constant 3.200000e+01 : f32
    %146 = vector.broadcast %cst_70 : f32 to vector<16x1xf32>
    %147 = arith.divf %145, %146 : vector<16x1xf32>
    %148 = vector.broadcast %147 : vector<16x1xf32> to vector<16x32xf32>
    %149 = arith.subf %139, %148 : vector<16x32xf32>
    %150 = arith.mulf %149, %149 : vector<16x32xf32>
    %cst_71 = arith.constant dense<0.000000e+00> : vector<16xf32>
    %151 = vector.multi_reduction <add>, %150, %cst_71 [1] : vector<16x32xf32> to vector<16xf32>
    %152 = vector.shape_cast %151 : vector<16xf32> to vector<16x1xf32>
    %cst_72 = arith.constant 3.200000e+01 : f32
    %153 = vector.broadcast %cst_72 : f32 to vector<16x1xf32>
    %154 = arith.divf %152, %153 : vector<16x1xf32>
    %155 = vector.broadcast %147 : vector<16x1xf32> to vector<16x32xf32>
    %156 = arith.subf %139, %155 : vector<16x32xf32>
    %cst_73 = arith.constant 9.99999996E-13 : f32
    %157 = vector.broadcast %cst_73 : f32 to vector<16x1xf32>
    %158 = arith.addf %154, %157 : vector<16x1xf32>
    %159 = math.rsqrt %158 : vector<16x1xf32>
    %160 = vector.broadcast %159 : vector<16x1xf32> to vector<16x32xf32>
    %161 = arith.mulf %156, %160 : vector<16x32xf32>
    %162 = vector.broadcast %141 : vector<1x32xf32> to vector<16x32xf32>
    %163 = arith.mulf %161, %162 : vector<16x32xf32>
    %164 = vector.broadcast %143 : vector<1x32xf32> to vector<16x32xf32>
    %165 = arith.addf %163, %164 : vector<16x32xf32>
    %c0_74 = arith.constant 0 : index
    %c0_75 = arith.constant 0 : index
    %c0_76 = arith.constant 0 : index
    %166 = vector.load %arg13[%c0_74, %c0_75, %c0_76] : memref<2x32x64xf32, #tpu.memory_space<vmem>>, vector<1x32x64xf32>
    %167 = vector.shape_cast %166 : vector<1x32x64xf32> to vector<32x64xf32>
    %cst_77 = arith.constant dense<0.000000e+00> : vector<16x64xf32>
    %168 = tpu.matmul %165, %167, %cst_77 {dimension_numbers = #tpu.dot_dimension_numbers<[1], [0], [0], [1], [0, 0, 1, 1], [], []>} : vector<16x32xf32>, vector<32x64xf32>, vector<16x64xf32> -> vector<16x64xf32>
    %c0_78 = arith.constant 0 : index
    %c0_79 = arith.constant 0 : index
    %c0_80 = arith.constant 0 : index
    %169 = vector.load %arg14[%c0_78, %c0_79, %c0_80] : memref<2x1x64xf32, #tpu.memory_space<vmem>>, vector<1x1x64xf32>
    %170 = vector.shape_cast %169 : vector<1x1x64xf32> to vector<1x64xf32>
    %171 = vector.broadcast %170 : vector<1x64xf32> to vector<16x64xf32>
    %172 = arith.addf %168, %171 : vector<16x64xf32>
    %173 = arith.mulf %172, %172 : vector<16x64xf32>
    %174 = arith.mulf %172, %173 : vector<16x64xf32>
    %cst_81 = arith.constant 4.471500e-02 : f32
    %175 = vector.broadcast %cst_81 : f32 to vector<16x64xf32>
    %176 = arith.mulf %175, %174 : vector<16x64xf32>
    %177 = arith.addf %172, %176 : vector<16x64xf32>
    %cst_82 = arith.constant 0.797884583 : f32
    %178 = vector.broadcast %cst_82 : f32 to vector<16x64xf32>
    %179 = arith.mulf %178, %177 : vector<16x64xf32>
    %180 = math.tanh %179 : vector<16x64xf32>
    %cst_83 = arith.constant 1.000000e+00 : f32
    %181 = vector.broadcast %cst_83 : f32 to vector<16x64xf32>
    %182 = arith.addf %181, %180 : vector<16x64xf32>
    %cst_84 = arith.constant 5.000000e-01 : f32
    %183 = vector.broadcast %cst_84 : f32 to vector<16x64xf32>
    %184 = arith.mulf %183, %182 : vector<16x64xf32>
    %185 = arith.mulf %172, %184 : vector<16x64xf32>
    %c0_85 = arith.constant 0 : index
    %c0_86 = arith.constant 0 : index
    %c0_87 = arith.constant 0 : index
    %186 = vector.load %arg15[%c0_85, %c0_86, %c0_87] : memref<2x64x32xf32, #tpu.memory_space<vmem>>, vector<1x64x32xf32>
    %187 = vector.shape_cast %186 : vector<1x64x32xf32> to vector<64x32xf32>
    %cst_88 = arith.constant dense<0.000000e+00> : vector<16x32xf32>
    %188 = tpu.matmul %185, %187, %cst_88 {dimension_numbers = #tpu.dot_dimension_numbers<[1], [0], [0], [1], [0, 0, 1, 1], [], []>} : vector<16x64xf32>, vector<64x32xf32>, vector<16x32xf32> -> vector<16x32xf32>
    %c0_89 = arith.constant 0 : index
    %c0_90 = arith.constant 0 : index
    %c0_91 = arith.constant 0 : index
    %189 = vector.load %arg16[%c0_89, %c0_90, %c0_91] : memref<2x1x32xf32, #tpu.memory_space<vmem>>, vector<1x1x32xf32>
    %190 = vector.shape_cast %189 : vector<1x1x32xf32> to vector<1x32xf32>
    %191 = vector.broadcast %190 : vector<1x32xf32> to vector<16x32xf32>
    %192 = arith.addf %188, %191 : vector<16x32xf32>
    %193 = arith.addf %165, %192 : vector<16x32xf32>
    %c0_92 = arith.constant 0 : index
    %c0_93 = arith.constant 0 : index
    %c0_94 = arith.constant 0 : index
    %194 = vector.load %arg19[%c0_92, %c0_93, %c0_94] : memref<2x1x32xf32, #tpu.memory_space<vmem>>, vector<1x1x32xf32>
    %195 = vector.shape_cast %194 : vector<1x1x32xf32> to vector<1x32xf32>
    %c0_95 = arith.constant 0 : index
    %c0_96 = arith.constant 0 : index
    %c0_97 = arith.constant 0 : index
    %196 = vector.load %arg20[%c0_95, %c0_96, %c0_97] : memref<2x1x32xf32, #tpu.memory_space<vmem>>, vector<1x1x32xf32>
    %197 = vector.shape_cast %196 : vector<1x1x32xf32> to vector<1x32xf32>
    %cst_98 = arith.constant dense<0.000000e+00> : vector<16xf32>
    %198 = vector.multi_reduction <add>, %193, %cst_98 [1] : vector<16x32xf32> to vector<16xf32>
    %199 = vector.shape_cast %198 : vector<16xf32> to vector<16x1xf32>
    %cst_99 = arith.constant 3.200000e+01 : f32
    %200 = vector.broadcast %cst_99 : f32 to vector<16x1xf32>
    %201 = arith.divf %199, %200 : vector<16x1xf32>
    %202 = vector.broadcast %201 : vector<16x1xf32> to vector<16x32xf32>
    %203 = arith.subf %193, %202 : vector<16x32xf32>
    %204 = arith.mulf %203, %203 : vector<16x32xf32>
    %cst_100 = arith.constant dense<0.000000e+00> : vector<16xf32>
    %205 = vector.multi_reduction <add>, %204, %cst_100 [1] : vector<16x32xf32> to vector<16xf32>
    %206 = vector.shape_cast %205 : vector<16xf32> to vector<16x1xf32>
    %cst_101 = arith.constant 3.200000e+01 : f32
    %207 = vector.broadcast %cst_101 : f32 to vector<16x1xf32>
    %208 = arith.divf %206, %207 : vector<16x1xf32>
    %209 = vector.broadcast %201 : vector<16x1xf32> to vector<16x32xf32>
    %210 = arith.subf %193, %209 : vector<16x32xf32>
    %cst_102 = arith.constant 9.99999996E-13 : f32
    %211 = vector.broadcast %cst_102 : f32 to vector<16x1xf32>
    %212 = arith.addf %208, %211 : vector<16x1xf32>
    %213 = math.rsqrt %212 : vector<16x1xf32>
    %214 = vector.broadcast %213 : vector<16x1xf32> to vector<16x32xf32>
    %215 = arith.mulf %210, %214 : vector<16x32xf32>
    %216 = vector.broadcast %195 : vector<1x32xf32> to vector<16x32xf32>
    %217 = arith.mulf %215, %216 : vector<16x32xf32>
    %218 = vector.broadcast %197 : vector<1x32xf32> to vector<16x32xf32>
    %219 = arith.addf %217, %218 : vector<16x32xf32>
    %c1_103 = arith.constant 1 : index
    %c0_104 = arith.constant 0 : index
    %c0_105 = arith.constant 0 : index
    %220 = vector.load %arg9[%c1_103, %c0_104, %c0_105] : memref<2x32x96xf32, #tpu.memory_space<vmem>>, vector<1x32x96xf32>
    %221 = vector.shape_cast %220 : vector<1x32x96xf32> to vector<32x96xf32>
    %cst_106 = arith.constant dense<0.000000e+00> : vector<16x96xf32>
    %222 = tpu.matmul %219, %221, %cst_106 {dimension_numbers = #tpu.dot_dimension_numbers<[1], [0], [0], [1], [0, 0, 1, 1], [], []>} : vector<16x32xf32>, vector<32x96xf32>, vector<16x96xf32> -> vector<16x96xf32>
    %c1_107 = arith.constant 1 : index
    %c0_108 = arith.constant 0 : index
    %c0_109 = arith.constant 0 : index
    %223 = vector.load %arg10[%c1_107, %c0_108, %c0_109] : memref<2x1x96xf32, #tpu.memory_space<vmem>>, vector<1x1x96xf32>
    %224 = vector.shape_cast %223 : vector<1x1x96xf32> to vector<1x96xf32>
    %225 = vector.broadcast %224 : vector<1x96xf32> to vector<16x96xf32>
    %226 = arith.addf %222, %225 : vector<16x96xf32>
    %227 = vector.extract_strided_slice %226 {offsets = [0, 0], sizes = [16, 32], strides = [1, 1]} : vector<16x96xf32> to vector<16x32xf32>
    %228 = vector.extract_strided_slice %226 {offsets = [0, 32], sizes = [16, 32], strides = [1, 1]} : vector<16x96xf32> to vector<16x32xf32>
    %229 = vector.extract_strided_slice %226 {offsets = [0, 64], sizes = [16, 32], strides = [1, 1]} : vector<16x96xf32> to vector<16x32xf32>
    %230 = vector.extract_strided_slice %50 {offsets = [0, 0], sizes = [1, 8], strides = [1, 1]} : vector<2x8xf32> to vector<1x8xf32>
    %231 = vector.extract_strided_slice %227 {offsets = [0, 0], sizes = [8, 16], strides = [1, 1]} : vector<16x32xf32> to vector<8x16xf32>
    %232 = vector.extract_strided_slice %228 {offsets = [0, 0], sizes = [8, 16], strides = [1, 1]} : vector<16x32xf32> to vector<8x16xf32>
    %233 = vector.extract_strided_slice %229 {offsets = [0, 0], sizes = [8, 16], strides = [1, 1]} : vector<16x32xf32> to vector<8x16xf32>
    %cst_110 = arith.constant dense<0.000000e+00> : vector<8x8xf32>
    %234 = tpu.matmul %231, %232, %cst_110 {dimension_numbers = #tpu.dot_dimension_numbers<[1], [1], [0], [0], [0, 0, 1, 0], [], []>} : vector<8x16xf32>, vector<8x16xf32>, vector<8x8xf32> -> vector<8x8xf32>
    %235 = vector.broadcast %230 : vector<1x8xf32> to vector<8x8xf32>
    %236 = arith.addf %234, %235 : vector<8x8xf32>
    %cst_111 = arith.constant dense<0xFF800000> : vector<8xf32>
    %237 = vector.multi_reduction <maximumf>, %236, %cst_111 [1] : vector<8x8xf32> to vector<8xf32>
    %238 = vector.shape_cast %237 : vector<8xf32> to vector<8x1xf32>
    %239 = vector.broadcast %238 : vector<8x1xf32> to vector<8x8xf32>
    %240 = arith.subf %236, %239 : vector<8x8xf32>
    %241 = math.exp %240 : vector<8x8xf32>
    %cst_112 = arith.constant dense<0.000000e+00> : vector<8xf32>
    %242 = vector.multi_reduction <add>, %241, %cst_112 [1] : vector<8x8xf32> to vector<8xf32>
    %243 = vector.shape_cast %242 : vector<8xf32> to vector<8x1xf32>
    %244 = vector.broadcast %243 : vector<8x1xf32> to vector<8x8xf32>
    %245 = arith.divf %241, %244 : vector<8x8xf32>
    %cst_113 = arith.constant dense<0.000000e+00> : vector<8x16xf32>
    %246 = tpu.matmul %245, %233, %cst_113 {dimension_numbers = #tpu.dot_dimension_numbers<[1], [0], [0], [1], [0, 0, 1, 1], [], []>} : vector<8x8xf32>, vector<8x16xf32>, vector<8x16xf32> -> vector<8x16xf32>
    %c0_114 = arith.constant 0 : index
    %c0_115 = arith.constant 0 : index
    %247 = vector.load %arg26[%c0_114, %c0_115] : memref<16x32xf32, #tpu.memory_space<vmem>>, vector<8x16xf32>
    tpu.vector_store %arg26[%c0_114, %c0_115], %246 {strides = array<i32>} : memref<16x32xf32, #tpu.memory_space<vmem>>, vector<8x16xf32>,
    %248 = vector.extract_strided_slice %227 {offsets = [0, 16], sizes = [8, 16], strides = [1, 1]} : vector<16x32xf32> to vector<8x16xf32>
    %249 = vector.extract_strided_slice %228 {offsets = [0, 16], sizes = [8, 16], strides = [1, 1]} : vector<16x32xf32> to vector<8x16xf32>
    %250 = vector.extract_strided_slice %229 {offsets = [0, 16], sizes = [8, 16], strides = [1, 1]} : vector<16x32xf32> to vector<8x16xf32>
    %cst_116 = arith.constant dense<0.000000e+00> : vector<8x8xf32>
    %251 = tpu.matmul %248, %249, %cst_116 {dimension_numbers = #tpu.dot_dimension_numbers<[1], [1], [0], [0], [0, 0, 1, 0], [], []>} : vector<8x16xf32>, vector<8x16xf32>, vector<8x8xf32> -> vector<8x8xf32>
    %252 = vector.broadcast %230 : vector<1x8xf32> to vector<8x8xf32>
    %253 = arith.addf %251, %252 : vector<8x8xf32>
    %cst_117 = arith.constant dense<0xFF800000> : vector<8xf32>
    %254 = vector.multi_reduction <maximumf>, %253, %cst_117 [1] : vector<8x8xf32> to vector<8xf32>
    %255 = vector.shape_cast %254 : vector<8xf32> to vector<8x1xf32>
    %256 = vector.broadcast %255 : vector<8x1xf32> to vector<8x8xf32>
    %257 = arith.subf %253, %256 : vector<8x8xf32>
    %258 = math.exp %257 : vector<8x8xf32>
    %cst_118 = arith.constant dense<0.000000e+00> : vector<8xf32>
    %259 = vector.multi_reduction <add>, %258, %cst_118 [1] : vector<8x8xf32> to vector<8xf32>
    %260 = vector.shape_cast %259 : vector<8xf32> to vector<8x1xf32>
    %261 = vector.broadcast %260 : vector<8x1xf32> to vector<8x8xf32>
    %262 = arith.divf %258, %261 : vector<8x8xf32>
    %cst_119 = arith.constant dense<0.000000e+00> : vector<8x16xf32>
    %263 = tpu.matmul %262, %250, %cst_119 {dimension_numbers = #tpu.dot_dimension_numbers<[1], [0], [0], [1], [0, 0, 1, 1], [], []>} : vector<8x8xf32>, vector<8x16xf32>, vector<8x16xf32> -> vector<8x16xf32>
    %c0_120 = arith.constant 0 : index
    %c16_121 = arith.constant 16 : index
    %264 = vector.load %arg26[%c0_120, %c16_121] : memref<16x32xf32, #tpu.memory_space<vmem>>, vector<8x16xf32>
    tpu.vector_store %arg26[%c0_120, %c16_121], %263 {strides = array<i32>} : memref<16x32xf32, #tpu.memory_space<vmem>>, vector<8x16xf32>,
    %265 = vector.extract_strided_slice %50 {offsets = [1, 0], sizes = [1, 8], strides = [1, 1]} : vector<2x8xf32> to vector<1x8xf32>
    %266 = vector.extract_strided_slice %227 {offsets = [8, 0], sizes = [8, 16], strides = [1, 1]} : vector<16x32xf32> to vector<8x16xf32>
    %267 = vector.extract_strided_slice %228 {offsets = [8, 0], sizes = [8, 16], strides = [1, 1]} : vector<16x32xf32> to vector<8x16xf32>
    %268 = vector.extract_strided_slice %229 {offsets = [8, 0], sizes = [8, 16], strides = [1, 1]} : vector<16x32xf32> to vector<8x16xf32>
    %cst_122 = arith.constant dense<0.000000e+00> : vector<8x8xf32>
    %269 = tpu.matmul %266, %267, %cst_122 {dimension_numbers = #tpu.dot_dimension_numbers<[1], [1], [0], [0], [0, 0, 1, 0], [], []>} : vector<8x16xf32>, vector<8x16xf32>, vector<8x8xf32> -> vector<8x8xf32>
    %270 = vector.broadcast %265 : vector<1x8xf32> to vector<8x8xf32>
    %271 = arith.addf %269, %270 : vector<8x8xf32>
    %cst_123 = arith.constant dense<0xFF800000> : vector<8xf32>
    %272 = vector.multi_reduction <maximumf>, %271, %cst_123 [1] : vector<8x8xf32> to vector<8xf32>
    %273 = vector.shape_cast %272 : vector<8xf32> to vector<8x1xf32>
    %274 = vector.broadcast %273 : vector<8x1xf32> to vector<8x8xf32>
    %275 = arith.subf %271, %274 : vector<8x8xf32>
    %276 = math.exp %275 : vector<8x8xf32>
    %cst_124 = arith.constant dense<0.000000e+00> : vector<8xf32>
    %277 = vector.multi_reduction <add>, %276, %cst_124 [1] : vector<8x8xf32> to vector<8xf32>
    %278 = vector.shape_cast %277 : vector<8xf32> to vector<8x1xf32>
    %279 = vector.broadcast %278 : vector<8x1xf32> to vector<8x8xf32>
    %280 = arith.divf %276, %279 : vector<8x8xf32>
    %cst_125 = arith.constant dense<0.000000e+00> : vector<8x16xf32>
    %281 = tpu.matmul %280, %268, %cst_125 {dimension_numbers = #tpu.dot_dimension_numbers<[1], [0], [0], [1], [0, 0, 1, 1], [], []>} : vector<8x8xf32>, vector<8x16xf32>, vector<8x16xf32> -> vector<8x16xf32>
    %c8_126 = arith.constant 8 : index
    %c0_127 = arith.constant 0 : index
    %282 = vector.load %arg26[%c8_126, %c0_127] : memref<16x32xf32, #tpu.memory_space<vmem>>, vector<8x16xf32>
    tpu.vector_store %arg26[%c8_126, %c0_127], %281 {strides = array<i32>} : memref<16x32xf32, #tpu.memory_space<vmem>>, vector<8x16xf32>,
    %283 = vector.extract_strided_slice %227 {offsets = [8, 16], sizes = [8, 16], strides = [1, 1]} : vector<16x32xf32> to vector<8x16xf32>
    %284 = vector.extract_strided_slice %228 {offsets = [8, 16], sizes = [8, 16], strides = [1, 1]} : vector<16x32xf32> to vector<8x16xf32>
    %285 = vector.extract_strided_slice %229 {offsets = [8, 16], sizes = [8, 16], strides = [1, 1]} : vector<16x32xf32> to vector<8x16xf32>
    %cst_128 = arith.constant dense<0.000000e+00> : vector<8x8xf32>
    %286 = tpu.matmul %283, %284, %cst_128 {dimension_numbers = #tpu.dot_dimension_numbers<[1], [1], [0], [0], [0, 0, 1, 0], [], []>} : vector<8x16xf32>, vector<8x16xf32>, vector<8x8xf32> -> vector<8x8xf32>
    %287 = vector.broadcast %265 : vector<1x8xf32> to vector<8x8xf32>
    %288 = arith.addf %286, %287 : vector<8x8xf32>
    %cst_129 = arith.constant dense<0xFF800000> : vector<8xf32>
    %289 = vector.multi_reduction <maximumf>, %288, %cst_129 [1] : vector<8x8xf32> to vector<8xf32>
    %290 = vector.shape_cast %289 : vector<8xf32> to vector<8x1xf32>
    %291 = vector.broadcast %290 : vector<8x1xf32> to vector<8x8xf32>
    %292 = arith.subf %288, %291 : vector<8x8xf32>
    %293 = math.exp %292 : vector<8x8xf32>
    %cst_130 = arith.constant dense<0.000000e+00> : vector<8xf32>
    %294 = vector.multi_reduction <add>, %293, %cst_130 [1] : vector<8x8xf32> to vector<8xf32>
    %295 = vector.shape_cast %294 : vector<8xf32> to vector<8x1xf32>
    %296 = vector.broadcast %295 : vector<8x1xf32> to vector<8x8xf32>
    %297 = arith.divf %293, %296 : vector<8x8xf32>
    %cst_131 = arith.constant dense<0.000000e+00> : vector<8x16xf32>
    %298 = tpu.matmul %297, %285, %cst_131 {dimension_numbers = #tpu.dot_dimension_numbers<[1], [0], [0], [1], [0, 0, 1, 1], [], []>} : vector<8x8xf32>, vector<8x16xf32>, vector<8x16xf32> -> vector<8x16xf32>
    %c8_132 = arith.constant 8 : index
    %c16_133 = arith.constant 16 : index
    %299 = vector.load %arg26[%c8_132, %c16_133] : memref<16x32xf32, #tpu.memory_space<vmem>>, vector<8x16xf32>
    tpu.vector_store %arg26[%c8_132, %c16_133], %298 {strides = array<i32>} : memref<16x32xf32, #tpu.memory_space<vmem>>, vector<8x16xf32>,
    %c0_134 = arith.constant 0 : index
    %c0_135 = arith.constant 0 : index
    %300 = vector.load %arg26[%c0_134, %c0_135] : memref<16x32xf32, #tpu.memory_space<vmem>>, vector<16x32xf32>
    %c1_136 = arith.constant 1 : index
    %c0_137 = arith.constant 0 : index
    %c0_138 = arith.constant 0 : index
    %301 = vector.load %arg11[%c1_136, %c0_137, %c0_138] : memref<2x32x32xf32, #tpu.memory_space<vmem>>, vector<1x32x32xf32>
    %302 = vector.shape_cast %301 : vector<1x32x32xf32> to vector<32x32xf32>
    %cst_139 = arith.constant dense<0.000000e+00> : vector<16x32xf32>
    %303 = tpu.matmul %300, %302, %cst_139 {dimension_numbers = #tpu.dot_dimension_numbers<[1], [0], [0], [1], [0, 0, 1, 1], [], []>} : vector<16x32xf32>, vector<32x32xf32>, vector<16x32xf32> -> vector<16x32xf32>
    %c1_140 = arith.constant 1 : index
    %c0_141 = arith.constant 0 : index
    %c0_142 = arith.constant 0 : index
    %304 = vector.load %arg12[%c1_140, %c0_141, %c0_142] : memref<2x1x32xf32, #tpu.memory_space<vmem>>, vector<1x1x32xf32>
    %305 = vector.shape_cast %304 : vector<1x1x32xf32> to vector<1x32xf32>
    %306 = vector.broadcast %305 : vector<1x32xf32> to vector<16x32xf32>
    %307 = arith.addf %303, %306 : vector<16x32xf32>
    %308 = arith.addf %219, %307 : vector<16x32xf32>
    %c1_143 = arith.constant 1 : index
    %c0_144 = arith.constant 0 : index
    %c0_145 = arith.constant 0 : index
    %309 = vector.load %arg17[%c1_143, %c0_144, %c0_145] : memref<2x1x32xf32, #tpu.memory_space<vmem>>, vector<1x1x32xf32>
    %310 = vector.shape_cast %309 : vector<1x1x32xf32> to vector<1x32xf32>
    %c1_146 = arith.constant 1 : index
    %c0_147 = arith.constant 0 : index
    %c0_148 = arith.constant 0 : index
    %311 = vector.load %arg18[%c1_146, %c0_147, %c0_148] : memref<2x1x32xf32, #tpu.memory_space<vmem>>, vector<1x1x32xf32>
    %312 = vector.shape_cast %311 : vector<1x1x32xf32> to vector<1x32xf32>
    %cst_149 = arith.constant dense<0.000000e+00> : vector<16xf32>
    %313 = vector.multi_reduction <add>, %308, %cst_149 [1] : vector<16x32xf32> to vector<16xf32>
    %314 = vector.shape_cast %313 : vector<16xf32> to vector<16x1xf32>
    %cst_150 = arith.constant 3.200000e+01 : f32
    %315 = vector.broadcast %cst_150 : f32 to vector<16x1xf32>
    %316 = arith.divf %314, %315 : vector<16x1xf32>
    %317 = vector.broadcast %316 : vector<16x1xf32> to vector<16x32xf32>
    %318 = arith.subf %308, %317 : vector<16x32xf32>
    %319 = arith.mulf %318, %318 : vector<16x32xf32>
    %cst_151 = arith.constant dense<0.000000e+00> : vector<16xf32>
    %320 = vector.multi_reduction <add>, %319, %cst_151 [1] : vector<16x32xf32> to vector<16xf32>
    %321 = vector.shape_cast %320 : vector<16xf32> to vector<16x1xf32>
    %cst_152 = arith.constant 3.200000e+01 : f32
    %322 = vector.broadcast %cst_152 : f32 to vector<16x1xf32>
    %323 = arith.divf %321, %322 : vector<16x1xf32>
    %324 = vector.broadcast %316 : vector<16x1xf32> to vector<16x32xf32>
    %325 = arith.subf %308, %324 : vector<16x32xf32>
    %cst_153 = arith.constant 9.99999996E-13 : f32
    %326 = vector.broadcast %cst_153 : f32 to vector<16x1xf32>
    %327 = arith.addf %323, %326 : vector<16x1xf32>
    %328 = math.rsqrt %327 : vector<16x1xf32>
    %329 = vector.broadcast %328 : vector<16x1xf32> to vector<16x32xf32>
    %330 = arith.mulf %325, %329 : vector<16x32xf32>
    %331 = vector.broadcast %310 : vector<1x32xf32> to vector<16x32xf32>
    %332 = arith.mulf %330, %331 : vector<16x32xf32>
    %333 = vector.broadcast %312 : vector<1x32xf32> to vector<16x32xf32>
    %334 = arith.addf %332, %333 : vector<16x32xf32>
    %c1_154 = arith.constant 1 : index
    %c0_155 = arith.constant 0 : index
    %c0_156 = arith.constant 0 : index
    %335 = vector.load %arg13[%c1_154, %c0_155, %c0_156] : memref<2x32x64xf32, #tpu.memory_space<vmem>>, vector<1x32x64xf32>
    %336 = vector.shape_cast %335 : vector<1x32x64xf32> to vector<32x64xf32>
    %cst_157 = arith.constant dense<0.000000e+00> : vector<16x64xf32>
    %337 = tpu.matmul %334, %336, %cst_157 {dimension_numbers = #tpu.dot_dimension_numbers<[1], [0], [0], [1], [0, 0, 1, 1], [], []>} : vector<16x32xf32>, vector<32x64xf32>, vector<16x64xf32> -> vector<16x64xf32>
    %c1_158 = arith.constant 1 : index
    %c0_159 = arith.constant 0 : index
    %c0_160 = arith.constant 0 : index
    %338 = vector.load %arg14[%c1_158, %c0_159, %c0_160] : memref<2x1x64xf32, #tpu.memory_space<vmem>>, vector<1x1x64xf32>
    %339 = vector.shape_cast %338 : vector<1x1x64xf32> to vector<1x64xf32>
    %340 = vector.broadcast %339 : vector<1x64xf32> to vector<16x64xf32>
    %341 = arith.addf %337, %340 : vector<16x64xf32>
    %342 = arith.mulf %341, %341 : vector<16x64xf32>
    %343 = arith.mulf %341, %342 : vector<16x64xf32>
    %cst_161 = arith.constant 4.471500e-02 : f32
    %344 = vector.broadcast %cst_161 : f32 to vector<16x64xf32>
    %345 = arith.mulf %344, %343 : vector<16x64xf32>
    %346 = arith.addf %341, %345 : vector<16x64xf32>
    %cst_162 = arith.constant 0.797884583 : f32
    %347 = vector.broadcast %cst_162 : f32 to vector<16x64xf32>
    %348 = arith.mulf %347, %346 : vector<16x64xf32>
    %349 = math.tanh %348 : vector<16x64xf32>
    %cst_163 = arith.constant 1.000000e+00 : f32
    %350 = vector.broadcast %cst_163 : f32 to vector<16x64xf32>
    %351 = arith.addf %350, %349 : vector<16x64xf32>
    %cst_164 = arith.constant 5.000000e-01 : f32
    %352 = vector.broadcast %cst_164 : f32 to vector<16x64xf32>
    %353 = arith.mulf %352, %351 : vector<16x64xf32>
    %354 = arith.mulf %341, %353 : vector<16x64xf32>
    %c1_165 = arith.constant 1 : index
    %c0_166 = arith.constant 0 : index
    %c0_167 = arith.constant 0 : index
    %355 = vector.load %arg15[%c1_165, %c0_166, %c0_167] : memref<2x64x32xf32, #tpu.memory_space<vmem>>, vector<1x64x32xf32>
    %356 = vector.shape_cast %355 : vector<1x64x32xf32> to vector<64x32xf32>
    %cst_168 = arith.constant dense<0.000000e+00> : vector<16x32xf32>
    %357 = tpu.matmul %354, %356, %cst_168 {dimension_numbers = #tpu.dot_dimension_numbers<[1], [0], [0], [1], [0, 0, 1, 1], [], []>} : vector<16x64xf32>, vector<64x32xf32>, vector<16x32xf32> -> vector<16x32xf32>
    %c1_169 = arith.constant 1 : index
    %c0_170 = arith.constant 0 : index
    %c0_171 = arith.constant 0 : index
    %358 = vector.load %arg16[%c1_169, %c0_170, %c0_171] : memref<2x1x32xf32, #tpu.memory_space<vmem>>, vector<1x1x32xf32>
    %359 = vector.shape_cast %358 : vector<1x1x32xf32> to vector<1x32xf32>
    %360 = vector.broadcast %359 : vector<1x32xf32> to vector<16x32xf32>
    %361 = arith.addf %357, %360 : vector<16x32xf32>
    %362 = arith.addf %334, %361 : vector<16x32xf32>
    %c1_172 = arith.constant 1 : index
    %c0_173 = arith.constant 0 : index
    %c0_174 = arith.constant 0 : index
    %363 = vector.load %arg19[%c1_172, %c0_173, %c0_174] : memref<2x1x32xf32, #tpu.memory_space<vmem>>, vector<1x1x32xf32>
    %364 = vector.shape_cast %363 : vector<1x1x32xf32> to vector<1x32xf32>
    %c1_175 = arith.constant 1 : index
    %c0_176 = arith.constant 0 : index
    %c0_177 = arith.constant 0 : index
    %365 = vector.load %arg20[%c1_175, %c0_176, %c0_177] : memref<2x1x32xf32, #tpu.memory_space<vmem>>, vector<1x1x32xf32>
    %366 = vector.shape_cast %365 : vector<1x1x32xf32> to vector<1x32xf32>
    %cst_178 = arith.constant dense<0.000000e+00> : vector<16xf32>
    %367 = vector.multi_reduction <add>, %362, %cst_178 [1] : vector<16x32xf32> to vector<16xf32>
    %368 = vector.shape_cast %367 : vector<16xf32> to vector<16x1xf32>
    %cst_179 = arith.constant 3.200000e+01 : f32
    %369 = vector.broadcast %cst_179 : f32 to vector<16x1xf32>
    %370 = arith.divf %368, %369 : vector<16x1xf32>
    %371 = vector.broadcast %370 : vector<16x1xf32> to vector<16x32xf32>
    %372 = arith.subf %362, %371 : vector<16x32xf32>
    %373 = arith.mulf %372, %372 : vector<16x32xf32>
    %cst_180 = arith.constant dense<0.000000e+00> : vector<16xf32>
    %374 = vector.multi_reduction <add>, %373, %cst_180 [1] : vector<16x32xf32> to vector<16xf32>
    %375 = vector.shape_cast %374 : vector<16xf32> to vector<16x1xf32>
    %cst_181 = arith.constant 3.200000e+01 : f32
    %376 = vector.broadcast %cst_181 : f32 to vector<16x1xf32>
    %377 = arith.divf %375, %376 : vector<16x1xf32>
    %378 = vector.broadcast %370 : vector<16x1xf32> to vector<16x32xf32>
    %379 = arith.subf %362, %378 : vector<16x32xf32>
    %cst_182 = arith.constant 9.99999996E-13 : f32
    %380 = vector.broadcast %cst_182 : f32 to vector<16x1xf32>
    %381 = arith.addf %377, %380 : vector<16x1xf32>
    %382 = math.rsqrt %381 : vector<16x1xf32>
    %383 = vector.broadcast %382 : vector<16x1xf32> to vector<16x32xf32>
    %384 = arith.mulf %379, %383 : vector<16x32xf32>
    %385 = vector.broadcast %364 : vector<1x32xf32> to vector<16x32xf32>
    %386 = arith.mulf %384, %385 : vector<16x32xf32>
    %387 = vector.broadcast %366 : vector<1x32xf32> to vector<16x32xf32>
    %388 = arith.addf %386, %387 : vector<16x32xf32>
    %389 = tpu.iota {dimensions = array<i32: 1>} : vector<2x16xi32>
    %390 = tpu.iota {dimensions = array<i32: 0>} : vector<2x16xi32>
    %c8_i32 = arith.constant 8 : i32
    %391 = vector.broadcast %c8_i32 : i32 to vector<2x16xi32>
    %392 = arith.muli %391, %390 : vector<2x16xi32>
    %393 = arith.cmpi eq, %389, %392 : vector<2x16xi32>
    %cst_183 = arith.constant 1.000000e+00 : f32
    %cst_184 = arith.constant 0.000000e+00 : f32
    %394 = vector.broadcast %cst_183 : f32 to vector<2x16xf32>
    %395 = vector.broadcast %cst_184 : f32 to vector<2x16xf32>
    %396 = arith.select %393, %394, %395 : vector<2x16xi1>, vector<2x16xf32>
    %cst_185 = arith.constant dense<0.000000e+00> : vector<2x32xf32>
    %397 = tpu.matmul %396, %388, %cst_185 {dimension_numbers = #tpu.dot_dimension_numbers<[1], [0], [0], [1], [0, 0, 1, 1], [], []>} : vector<2x16xf32>, vector<16x32xf32>, vector<2x32xf32> -> vector<2x32xf32>
    %c0_186 = arith.constant 0 : index
    %c0_187 = arith.constant 0 : index
    %398 = vector.load %arg21[%c0_186, %c0_187] : memref<32x32xf32, #tpu.memory_space<vmem>>, vector<32x32xf32>
    %cst_188 = arith.constant dense<0.000000e+00> : vector<2x32xf32>
    %399 = tpu.matmul %397, %398, %cst_188 {dimension_numbers = #tpu.dot_dimension_numbers<[1], [0], [0], [1], [0, 0, 1, 1], [], []>} : vector<2x32xf32>, vector<32x32xf32>, vector<2x32xf32> -> vector<2x32xf32>
    %c0_189 = arith.constant 0 : index
    %c0_190 = arith.constant 0 : index
    %400 = vector.load %arg22[%c0_189, %c0_190] : memref<1x32xf32, #tpu.memory_space<vmem>>, vector<1x32xf32>
    %401 = vector.broadcast %400 : vector<1x32xf32> to vector<2x32xf32>
    %402 = arith.addf %399, %401 : vector<2x32xf32>
    %403 = math.tanh %402 : vector<2x32xf32>
    %c0_191 = arith.constant 0 : index
    %c0_192 = arith.constant 0 : index
    %404 = vector.load %arg23[%c0_191, %c0_192] : memref<32x128xf32, #tpu.memory_space<vmem>>, vector<32x128xf32>
    %cst_193 = arith.constant dense<0.000000e+00> : vector<2x128xf32>
    %405 = tpu.matmul %403, %404, %cst_193 {dimension_numbers = #tpu.dot_dimension_numbers<[1], [0], [0], [1], [0, 0, 1, 1], [], []>} : vector<2x32xf32>, vector<32x128xf32>, vector<2x128xf32> -> vector<2x128xf32>
    %c0_194 = arith.constant 0 : index
    %c0_195 = arith.constant 0 : index
    %406 = vector.load %arg24[%c0_194, %c0_195] : memref<1x128xf32, #tpu.memory_space<vmem>>, vector<1x128xf32>
    %407 = vector.broadcast %406 : vector<1x128xf32> to vector<2x128xf32>
    %408 = arith.addf %405, %407 : vector<2x128xf32>
    %c0_196 = arith.constant 0 : index
    %c0_197 = arith.constant 0 : index
    %409 = vector.load %arg25[%c0_196, %c0_197] : memref<2x128xf32, #tpu.memory_space<vmem>>, vector<2x128xf32>
    tpu.vector_store %arg25[%c0_196, %c0_197], %408 {strides = array<i32>} : memref<2x128xf32, #tpu.memory_space<vmem>>, vector<2x128xf32>,
    return
  }
  func.func @transform_0(%arg0: i32) -> (i32, i32) {
    %c0_i32 = arith.constant 0 : i32
    %c0_i32_0 = arith.constant 0 : i32
    %c0_i32_1 = arith.constant 0 : i32
    return %c0_i32, %c0_i32_0 : i32, i32
  }
  func.func @transform_1(%arg0: i32) -> (i32, i32) {
    %c0_i32 = arith.constant 0 : i32
    %c0_i32_0 = arith.constant 0 : i32
    %c0_i32_1 = arith.constant 0 : i32
    return %c0_i32, %c0_i32_0 : i32, i32
  }
  func.func @transform_2(%arg0: i32) -> (i32, i32) {
    %c0_i32 = arith.constant 0 : i32
    %c0_i32_0 = arith.constant 0 : i32
    %c0_i32_1 = arith.constant 0 : i32
    return %c0_i32, %c0_i32_0 : i32, i32
  }
  func.func @transform_3(%arg0: i32) -> (i32, i32) {
    %c0_i32 = arith.constant 0 : i32
    %c0_i32_0 = arith.constant 0 : i32
    %c0_i32_1 = arith.constant 0 : i32
    return %c0_i32, %c0_i32_0 : i32, i32
  }
  func.func @transform_4(%arg0: i32) -> (i32, i32) {
    %c0_i32 = arith.constant 0 : i32
    %c0_i32_0 = arith.constant 0 : i32
    %c0_i32_1 = arith.constant 0 : i32
    return %c0_i32, %c0_i32_0 : i32, i32
  }
  func.func @transform_5(%arg0: i32) -> (i32, i32) {
    %c0_i32 = arith.constant 0 : i32
    %c0_i32_0 = arith.constant 0 : i32
    %c0_i32_1 = arith.constant 0 : i32
    return %c0_i32, %c0_i32_0 : i32, i32
  }
  func.func @transform_6(%arg0: i32) -> (i32, i32) {
    %c0_i32 = arith.constant 0 : i32
    %c0_i32_0 = arith.constant 0 : i32
    %c0_i32_1 = arith.constant 0 : i32
    return %c0_i32, %c0_i32_0 : i32, i32
  }
  func.func @transform_7(%arg0: i32) -> (i32, i32) {
    %c0_i32 = arith.constant 0 : i32
    %c0_i32_0 = arith.constant 0 : i32
    %c0_i32_1 = arith.constant 0 : i32
    return %c0_i32, %c0_i32_0 : i32, i32
  }
  func.func @transform_8(%arg0: i32) -> (i32, i32, i32) {
    %c0_i32 = arith.constant 0 : i32
    %c0_i32_0 = arith.constant 0 : i32
    %c0_i32_1 = arith.constant 0 : i32
    %c0_i32_2 = arith.constant 0 : i32
    return %c0_i32, %c0_i32_0, %c0_i32_1 : i32, i32, i32
  }
  func.func @transform_9(%arg0: i32) -> (i32, i32, i32) {
    %c0_i32 = arith.constant 0 : i32
    %c0_i32_0 = arith.constant 0 : i32
    %c0_i32_1 = arith.constant 0 : i32
    %c0_i32_2 = arith.constant 0 : i32
    return %c0_i32, %c0_i32_0, %c0_i32_1 : i32, i32, i32
  }
  func.func @transform_10(%arg0: i32) -> (i32, i32, i32) {
    %c0_i32 = arith.constant 0 : i32
    %c0_i32_0 = arith.constant 0 : i32
    %c0_i32_1 = arith.constant 0 : i32
    %c0_i32_2 = arith.constant 0 : i32
    return %c0_i32, %c0_i32_0, %c0_i32_1 : i32, i32, i32
  }
  func.func @transform_11(%arg0: i32) -> (i32, i32, i32) {
    %c0_i32 = arith.constant 0 : i32
    %c0_i32_0 = arith.constant 0 : i32
    %c0_i32_1 = arith.constant 0 : i32
    %c0_i32_2 = arith.constant 0 : i32
    return %c0_i32, %c0_i32_0, %c0_i32_1 : i32, i32, i32
  }
  func.func @transform_12(%arg0: i32) -> (i32, i32, i32) {
    %c0_i32 = arith.constant 0 : i32
    %c0_i32_0 = arith.constant 0 : i32
    %c0_i32_1 = arith.constant 0 : i32
    %c0_i32_2 = arith.constant 0 : i32
    return %c0_i32, %c0_i32_0, %c0_i32_1 : i32, i32, i32
  }
  func.func @transform_13(%arg0: i32) -> (i32, i32, i32) {
    %c0_i32 = arith.constant 0 : i32
    %c0_i32_0 = arith.constant 0 : i32
    %c0_i32_1 = arith.constant 0 : i32
    %c0_i32_2 = arith.constant 0 : i32
    return %c0_i32, %c0_i32_0, %c0_i32_1 : i32, i32, i32
  }
  func.func @transform_14(%arg0: i32) -> (i32, i32, i32) {
    %c0_i32 = arith.constant 0 : i32
    %c0_i32_0 = arith.constant 0 : i32
    %c0_i32_1 = arith.constant 0 : i32
    %c0_i32_2 = arith.constant 0 : i32
    return %c0_i32, %c0_i32_0, %c0_i32_1 : i32, i32, i32
  }
  func.func @transform_15(%arg0: i32) -> (i32, i32, i32) {
    %c0_i32 = arith.constant 0 : i32
    %c0_i32_0 = arith.constant 0 : i32
    %c0_i32_1 = arith.constant 0 : i32
    %c0_i32_2 = arith.constant 0 : i32
    return %c0_i32, %c0_i32_0, %c0_i32_1 : i32, i32, i32
  }
  func.func @transform_16(%arg0: i32) -> (i32, i32, i32) {
    %c0_i32 = arith.constant 0 : i32
    %c0_i32_0 = arith.constant 0 : i32
    %c0_i32_1 = arith.constant 0 : i32
    %c0_i32_2 = arith.constant 0 : i32
    return %c0_i32, %c0_i32_0, %c0_i32_1 : i32, i32, i32
  }
  func.func @transform_17(%arg0: i32) -> (i32, i32, i32) {
    %c0_i32 = arith.constant 0 : i32
    %c0_i32_0 = arith.constant 0 : i32
    %c0_i32_1 = arith.constant 0 : i32
    %c0_i32_2 = arith.constant 0 : i32
    return %c0_i32, %c0_i32_0, %c0_i32_1 : i32, i32, i32
  }
  func.func @transform_18(%arg0: i32) -> (i32, i32, i32) {
    %c0_i32 = arith.constant 0 : i32
    %c0_i32_0 = arith.constant 0 : i32
    %c0_i32_1 = arith.constant 0 : i32
    %c0_i32_2 = arith.constant 0 : i32
    return %c0_i32, %c0_i32_0, %c0_i32_1 : i32, i32, i32
  }
  func.func @transform_19(%arg0: i32) -> (i32, i32, i32) {
    %c0_i32 = arith.constant 0 : i32
    %c0_i32_0 = arith.constant 0 : i32
    %c0_i32_1 = arith.constant 0 : i32
    %c0_i32_2 = arith.constant 0 : i32
    return %c0_i32, %c0_i32_0, %c0_i32_1 : i32, i32, i32
  }
  func.func @transform_20(%arg0: i32) -> (i32, i32) {
    %c0_i32 = arith.constant 0 : i32
    %c0_i32_0 = arith.constant 0 : i32
    %c0_i32_1 = arith.constant 0 : i32
    return %c0_i32, %c0_i32_0 : i32, i32
  }
  func.func @transform_21(%arg0: i32) -> (i32, i32) {
    %c0_i32 = arith.constant 0 : i32
    %c0_i32_0 = arith.constant 0 : i32
    %c0_i32_1 = arith.constant 0 : i32
    return %c0_i32, %c0_i32_0 : i32, i32
  }
  func.func @transform_22(%arg0: i32) -> (i32, i32) {
    %c0_i32 = arith.constant 0 : i32
    %c0_i32_0 = arith.constant 0 : i32
    %c0_i32_1 = arith.constant 0 : i32
    return %c0_i32, %c0_i32_0 : i32, i32
  }
  func.func @transform_23(%arg0: i32) -> (i32, i32) {
    %c0_i32 = arith.constant 0 : i32
    %c0_i32_0 = arith.constant 0 : i32
    %c0_i32_1 = arith.constant 0 : i32
    return %c0_i32, %c0_i32_0 : i32, i32
  }
  func.func @transform_24(%arg0: i32) -> (i32, i32) {
    %c0_i32 = arith.constant 0 : i32
    %c0_i32_0 = arith.constant 0 : i32
    %c0_i32_1 = arith.constant 0 : i32
    return %c0_i32, %c0_i32_0 : i32, i32
  }
}

</mosaic_0001>

<llo_original>
// kernel: intent_classifier_forward.1
$region0: #{intent_classifier_forward.1}
  #allocation0 [shape = 'u32[]', space=smem, size = 0x4, offset = 0x4, fixed_abs, tag = 'smem constant byte address 0x4 - core index']
  #allocation1 [shape = 'u32[144,128]{1,0:T(1,128)}', space=vmem, size = 0x12000, scoped, tag = 'internal scratch']
  #allocation2 [shape = 'f32[16,32]{1,0:T(8,128)}', space=vmem, size = 0x2000, scoped, tag = 'scratch operand']
  %s0 = inlined_call_operand.vmem [shape: s32[16,1], index: 0, kind: input, shape index: {}]
  %s1 = inlined_call_operand.vmem [shape: f32[16,1], index: 1, kind: input, shape index: {}]
  %s2 = inlined_call_operand.vmem [shape: f32[2,8], index: 2, kind: input, shape index: {}]
  %s3 = inlined_call_operand.hbm [shape: f32[100,32], index: 3, kind: input, shape index: {}]
  %s4 = inlined_call_operand.vmem [shape: f32[2,32], index: 4, kind: input, shape index: {}]
  %s5 = inlined_call_operand.hbm [shape: f32[16,32], index: 5, kind: input, shape index: {}]
  %s6 = inlined_call_operand.vmem [shape: f32[1,32], index: 6, kind: input, shape index: {}]
  %s7 = inlined_call_operand.vmem [shape: f32[1,32], index: 7, kind: input, shape index: {}, may-alias: {7,21}]
  %s8 = inlined_call_operand.hbm [shape: f32[2,32,96], index: 8, kind: input, shape index: {}]
  %s9 = inlined_call_operand.vmem [shape: f32[2,1,96], index: 9, kind: input, shape index: {}]
  %s10 = inlined_call_operand.hbm [shape: f32[2,32,32], index: 10, kind: input, shape index: {}]
  %s11 = inlined_call_operand.vmem [shape: f32[2,1,32], index: 11, kind: input, shape index: {}, may-alias: {11,15,17,19}]
  %s12 = inlined_call_operand.vmem [shape: f32[2,32,64], index: 12, kind: input, shape index: {}]
  %s13 = inlined_call_operand.vmem [shape: f32[2,1,64], index: 13, kind: input, shape index: {}]
  %s14 = inlined_call_operand.hbm [shape: f32[2,64,32], index: 14, kind: input, shape index: {}]
  %s15 = inlined_call_operand.vmem [shape: f32[2,1,32], index: 15, kind: input, shape index: {}, may-alias: {11,15,17,19}]
  %s16 = inlined_call_operand.vmem [shape: f32[2,1,32], index: 16, kind: input, shape index: {}, may-alias: {16,18}]
  %s17 = inlined_call_operand.vmem [shape: f32[2,1,32], index: 17, kind: input, shape index: {}, may-alias: {11,15,17,19}]
  %s18 = inlined_call_operand.vmem [shape: f32[2,1,32], index: 18, kind: input, shape index: {}, may-alias: {16,18}]
  %s19 = inlined_call_operand.vmem [shape: f32[2,1,32], index: 19, kind: input, shape index: {}, may-alias: {11,15,17,19}]
  %s20 = inlined_call_operand.hbm [shape: f32[32,32], index: 20, kind: input, shape index: {}]
  %s21 = inlined_call_operand.vmem [shape: f32[1,32], index: 21, kind: input, shape index: {}, may-alias: {7,21}]
  %s22 = inlined_call_operand.vmem [shape: f32[32,128], index: 22, kind: input, shape index: {}]
  %s23 = inlined_call_operand.vmem [shape: f32[1,128], index: 23, kind: input, shape index: {}]
  %s24 = inlined_call_operand.hbm [shape: f32[2,128], index: 24, kind: output, shape index: {}]
  %s25 = sld [smem:[#allocation0]]
  $region130: #{intent_classifier_forward.1} parent=0
    _
  %s27 = ssub.s32 1, %s25
  %s28 = scalar_select 0, %s27, %s25
  $region1: #{intent_classifier_forward.1} parent=0
    #allocation3 [shape = 'u8[53248]{0}', space=vmem, size = 0xd000, scoped, tag = 'input window, operand 3, single buffered']
    #allocation4 [shape = 's32[1]{0}', space=sflag, size = 0x4, scoped, tag = 'scoped memory for intent_classifier_forward.1']
    #allocation5 [shape = 's32[1]{0}', space=sflag, size = 0x4, scoped, tag = 'scoped memory for intent_classifier_forward.1']
    #allocation6 [shape = 'u8[8192]{0}', space=vmem, size = 0x2000, scoped, tag = 'input window, operand 5, single buffered']
    #allocation7 [shape = 's32[1]{0}', space=sflag, size = 0x4, scoped, tag = 'scoped memory for intent_classifier_forward.1']
    #allocation8 [shape = 'u8[32768]{0}', space=vmem, size = 0x8000, scoped, tag = 'input window, operand 8, single buffered']
    #allocation9 [shape = 'u8[32768]{0}', space=vmem, size = 0x8000, scoped, tag = 'input window, operand 10, single buffered']
    #allocation10 [shape = 's32[1]{0}', space=sflag, size = 0x4, scoped, tag = 'scoped memory for intent_classifier_forward.1']
    #allocation11 [shape = 'u8[65536]{0}', space=vmem, size = 0x10000, scoped, tag = 'input window, operand 14, single buffered']
    #allocation12 [shape = 'u8[16384]{0}', space=vmem, size = 0x4000, scoped, tag = 'input window, operand 20, single buffered']
    #allocation13 [shape = 's32[1]{0}', space=sflag, size = 0x4, scoped, tag = 'scoped memory for intent_classifier_forward.1']
    #allocation14 [shape = 'u8[1024]{0}', space=vmem, size = 0x400, scoped, tag = 'output window, operand 0, single buffered']
    %29 = vsyncpa [#allocation4], 0
    %30 = vsyncpa [#allocation7], 0
    %31 = vsyncpa [#allocation10], 0
    %32 = vsyncpa [#allocation13], 0
    %33 = vsyncpa [#allocation5], 0
    // Predicated region
    $region2: #{intent_classifier_forward.1} parent=1 // pred_check
      _
    $region3: #{intent_classifier_forward.1} parent=1 // pred_check_branch
      %35 = sbr.rel (0) target = $region5
    $region4: #{intent_classifier_forward.1} parent=1 // pred_region
      _
    $region5: #{intent_classifier_forward.1} parent=1 // pred_fallthru
      _
    // Predicated region
    $region6: #{intent_classifier_forward.1} parent=1 // pred_check
      _
    $region7: #{intent_classifier_forward.1} parent=1 // pred_check_branch
      %37 = sbr.rel (0) target = $region9
    $region8: #{intent_classifier_forward.1} parent=1 // pred_region
      _
    $region9: #{intent_classifier_forward.1} parent=1 // pred_fallthru
      _
    // Predicated region
    $region10: #{intent_classifier_forward.1} parent=1 // pred_check
      _
    $region11: #{intent_classifier_forward.1} parent=1 // pred_check_branch
      %39 = sbr.rel (0) target = $region13
    $region12: #{intent_classifier_forward.1} parent=1 // pred_region
      _
    $region13: #{intent_classifier_forward.1} parent=1 // pred_fallthru
      _
    // Predicated region
    $region14: #{intent_classifier_forward.1} parent=1 // pred_check
      _
    $region15: #{intent_classifier_forward.1} parent=1 // pred_check_branch
      %41 = sbr.rel (0) target = $region17
    $region16: #{intent_classifier_forward.1} parent=1 // pred_region
      %s43 = ssub.s32 1664, 1664
      %44 = vsyncadd [#allocation4], %s43
      %s45 = sshll.u32 [#allocation3], 4
      %s46 = int_to_ptr.vmem [resolvable:$true] %s45
      %51 = dma.hbm_to_vmem [thread:$0]  %s3, 1664, %s46, [#allocation4], 128, 128, 8
    $region17: #{intent_classifier_forward.1} parent=1 // pred_fallthru
      _
    // Predicated region
    $region18: #{intent_classifier_forward.1} parent=1 // pred_check
      _
    $region19: #{intent_classifier_forward.1} parent=1 // pred_check_branch
      %53 = sbr.rel (0) target = $region21
    $region20: #{intent_classifier_forward.1} parent=1 // pred_region
      _
    $region21: #{intent_classifier_forward.1} parent=1 // pred_fallthru
      _
    // Predicated region
    $region22: #{intent_classifier_forward.1} parent=1 // pred_check
      _
    $region23: #{intent_classifier_forward.1} parent=1 // pred_check_branch
      %55 = sbr.rel (0) target = $region25
    $region24: #{intent_classifier_forward.1} parent=1 // pred_region
      %s57 = ssub.s32 256, 256
      %58 = vsyncadd [#allocation7], %s57
      %s59 = sshll.u32 [#allocation6], 4
      %s60 = int_to_ptr.vmem [resolvable:$true] %s59
      %65 = dma.hbm_to_vmem [thread:$0]  %s5, 256, %s60, [#allocation7], 128, 128, 8
    $region25: #{intent_classifier_forward.1} parent=1 // pred_fallthru
      _
    // Predicated region
    $region26: #{intent_classifier_forward.1} parent=1 // pred_check
      _
    $region27: #{intent_classifier_forward.1} parent=1 // pred_check_branch
      %67 = sbr.rel (0) target = $region29
    $region28: #{intent_classifier_forward.1} parent=1 // pred_region
      _
    $region29: #{intent_classifier_forward.1} parent=1 // pred_fallthru
      _
    // Predicated region
    $region30: #{intent_classifier_forward.1} parent=1 // pred_check
      _
    $region31: #{intent_classifier_forward.1} parent=1 // pred_check_branch
      %69 = sbr.rel (0) target = $region33
    $region32: #{intent_classifier_forward.1} parent=1 // pred_region
      _
    $region33: #{intent_classifier_forward.1} parent=1 // pred_fallthru
      _
    // Predicated region
    $region34: #{intent_classifier_forward.1} parent=1 // pred_check
      _
    $region35: #{intent_classifier_forward.1} parent=1 // pred_check_branch
      %71 = sbr.rel (0) target = $region37
    $region36: #{intent_classifier_forward.1} parent=1 // pred_region
      %s73 = ssub.s32 1024, 1024
      %74 = vsyncadd [#allocation7], %s73
      %s75 = sshll.u32 [#allocation8], 4
      %s76 = int_to_ptr.vmem [resolvable:$true] %s75
      %81 = dma.hbm_to_vmem [thread:$0]  %s8, 1024, %s76, [#allocation7], 128, 128, 8
    $region37: #{intent_classifier_forward.1} parent=1 // pred_fallthru
      _
    // Predicated region
    $region38: #{intent_classifier_forward.1} parent=1 // pred_check
      _
    $region39: #{intent_classifier_forward.1} parent=1 // pred_check_branch
      %83 = sbr.rel (0) target = $region41
    $region40: #{intent_classifier_forward.1} parent=1 // pred_region
      _
    $region41: #{intent_classifier_forward.1} parent=1 // pred_fallthru
      _
    // Predicated region
    $region42: #{intent_classifier_forward.1} parent=1 // pred_check
      _
    $region43: #{intent_classifier_forward.1} parent=1 // pred_check_branch
      %85 = sbr.rel (0) target = $region45
    $region44: #{intent_classifier_forward.1} parent=1 // pred_region
      %s87 = ssub.s32 1024, 1024
      %88 = vsyncadd [#allocation10], %s87
      %s89 = sshll.u32 [#allocation9], 4
      %s90 = int_to_ptr.vmem [resolvable:$true] %s89
      %95 = dma.hbm_to_vmem [thread:$0]  %s10, 1024, %s90, [#allocation10], 128, 128, 8
    $region45: #{intent_classifier_forward.1} parent=1 // pred_fallthru
      _
    // Predicated region
    $region46: #{intent_classifier_forward.1} parent=1 // pred_check
      _
    $region47: #{intent_classifier_forward.1} parent=1 // pred_check_branch
      %97 = sbr.rel (0) target = $region49
    $region48: #{intent_classifier_forward.1} parent=1 // pred_region
      _
    $region49: #{intent_classifier_forward.1} parent=1 // pred_fallthru
      _
    // Predicated region
    $region50: #{intent_classifier_forward.1} parent=1 // pred_check
      _
    $region51: #{intent_classifier_forward.1} parent=1 // pred_check_branch
      %99 = sbr.rel (0) target = $region53
    $region52: #{intent_classifier_forward.1} parent=1 // pred_region
      _
    $region53: #{intent_classifier_forward.1} parent=1 // pred_fallthru
      _
    // Predicated region
    $region54: #{intent_classifier_forward.1} parent=1 // pred_check
      _
    $region55: #{intent_classifier_forward.1} parent=1 // pred_check_branch
      %101 = sbr.rel (0) target = $region57
    $region56: #{intent_classifier_forward.1} parent=1 // pred_region
      _
    $region57: #{intent_classifier_forward.1} parent=1 // pred_fallthru
      _
    // Predicated region
    $region58: #{intent_classifier_forward.1} parent=1 // pred_check
      _
    $region59: #{intent_classifier_forward.1} parent=1 // pred_check_branch
      %103 = sbr.rel (0) target = $region61
    $region60: #{intent_classifier_forward.1} parent=1 // pred_region
      %s105 = ssub.s32 2048, 2048
      %106 = vsyncadd [#allocation10], %s105
      %s107 = sshll.u32 [#allocation11], 4
      %s108 = int_to_ptr.vmem [resolvable:$true] %s107
      %113 = dma.hbm_to_vmem [thread:$0]  %s14, 2048, %s108, [#allocation10], 128, 128, 8
    $region61: #{intent_classifier_forward.1} parent=1 // pred_fallthru
      _
    // Predicated region
    $region62: #{intent_classifier_forward.1} parent=1 // pred_check
      _
    $region63: #{intent_classifier_forward.1} parent=1 // pred_check_branch
      %115 = sbr.rel (0) target = $region65
    $region64: #{intent_classifier_forward.1} parent=1 // pred_region
      _
    $region65: #{intent_classifier_forward.1} parent=1 // pred_fallthru
      _
    // Predicated region
    $region66: #{intent_classifier_forward.1} parent=1 // pred_check
      _
    $region67: #{intent_classifier_forward.1} parent=1 // pred_check_branch
      %117 = sbr.rel (0) target = $region69
    $region68: #{intent_classifier_forward.1} parent=1 // pred_region
      _
    $region69: #{intent_classifier_forward.1} parent=1 // pred_fallthru
      _
    // Predicated region
    $region70: #{intent_classifier_forward.1} parent=1 // pred_check
      _
    $region71: #{intent_classifier_forward.1} parent=1 // pred_check_branch
      %119 = sbr.rel (0) target = $region73
    $region72: #{intent_classifier_forward.1} parent=1 // pred_region
      _
    $region73: #{intent_classifier_forward.1} parent=1 // pred_fallthru
      _
    // Predicated region
    $region74: #{intent_classifier_forward.1} parent=1 // pred_check
      _
    $region75: #{intent_classifier_forward.1} parent=1 // pred_check_branch
      %121 = sbr.rel (0) target = $region77
    $region76: #{intent_classifier_forward.1} parent=1 // pred_region
      _
    $region77: #{intent_classifier_forward.1} parent=1 // pred_fallthru
      _
    // Predicated region
    $region78: #{intent_classifier_forward.1} parent=1 // pred_check
      _
    $region79: #{intent_classifier_forward.1} parent=1 // pred_check_branch
      %123 = sbr.rel (0) target = $region81
    $region80: #{intent_classifier_forward.1} parent=1 // pred_region
      _
    $region81: #{intent_classifier_forward.1} parent=1 // pred_fallthru
      _
    // Predicated region
    $region82: #{intent_classifier_forward.1} parent=1 // pred_check
      _
    $region83: #{intent_classifier_forward.1} parent=1 // pred_check_branch
      %125 = sbr.rel (0) target = $region85
    $region84: #{intent_classifier_forward.1} parent=1 // pred_region
      %s127 = ssub.s32 512, 512
      %128 = vsyncadd [#allocation13], %s127
      %s129 = sshll.u32 [#allocation12], 4
      %s130 = int_to_ptr.vmem [resolvable:$true] %s129
      %135 = dma.hbm_to_vmem [thread:$0]  %s20, 512, %s130, [#allocation13], 128, 128, 8
    $region85: #{intent_classifier_forward.1} parent=1 // pred_fallthru
      _
    // Predicated region
    $region86: #{intent_classifier_forward.1} parent=1 // pred_check
      _
    $region87: #{intent_classifier_forward.1} parent=1 // pred_check_branch
      %137 = sbr.rel (0) target = $region89
    $region88: #{intent_classifier_forward.1} parent=1 // pred_region
      _
    $region89: #{intent_classifier_forward.1} parent=1 // pred_fallthru
      _
    // Predicated region
    $region90: #{intent_classifier_forward.1} parent=1 // pred_check
      _
    $region91: #{intent_classifier_forward.1} parent=1 // pred_check_branch
      %139 = sbr.rel (0) target = $region93
    $region92: #{intent_classifier_forward.1} parent=1 // pred_region
      _
    $region93: #{intent_classifier_forward.1} parent=1 // pred_fallthru
      _
    // Predicated region
    $region94: #{intent_classifier_forward.1} parent=1 // pred_check
      _
    $region95: #{intent_classifier_forward.1} parent=1 // pred_check_branch
      %141 = sbr.rel (0) target = $region97
    $region96: #{intent_classifier_forward.1} parent=1 // pred_region
      _
    $region97: #{intent_classifier_forward.1} parent=1 // pred_fallthru
      _
    // Predicated region
    $region98: #{intent_classifier_forward.1} parent=1 // pred_check
      _
    $region99: #{intent_classifier_forward.1} parent=1 // pred_check_branch
      %143 = sbr.rel (0) target = $region101
    $region100: #{intent_classifier_forward.1} parent=1 // pred_region
      %144 = dma.done [#allocation4], 1664
    $region101: #{intent_classifier_forward.1} parent=1 // pred_fallthru
      _
    // Predicated region
    $region102: #{intent_classifier_forward.1} parent=1 // pred_check
      _
    $region103: #{intent_classifier_forward.1} parent=1 // pred_check_branch
      %146 = sbr.rel (0) target = $region105
    $region104: #{intent_classifier_forward.1} parent=1 // pred_region
      %147 = dma.done [#allocation7], 256
    $region105: #{intent_classifier_forward.1} parent=1 // pred_fallthru
      _
    // Predicated region
    $region106: #{intent_classifier_forward.1} parent=1 // pred_check
      _
    $region107: #{intent_classifier_forward.1} parent=1 // pred_check_branch
      %149 = sbr.rel (0) target = $region109
    $region108: #{intent_classifier_forward.1} parent=1 // pred_region
      %150 = dma.done [#allocation7], 1024
    $region109: #{intent_classifier_forward.1} parent=1 // pred_fallthru
      _
    // Predicated region
    $region110: #{intent_classifier_forward.1} parent=1 // pred_check
      _
    $region111: #{intent_classifier_forward.1} parent=1 // pred_check_branch
      %152 = sbr.rel (0) target = $region113
    $region112: #{intent_classifier_forward.1} parent=1 // pred_region
      %153 = dma.done [#allocation10], 1024
    $region113: #{intent_classifier_forward.1} parent=1 // pred_fallthru
      _
    // Predicated region
    $region114: #{intent_classifier_forward.1} parent=1 // pred_check
      _
    $region115: #{intent_classifier_forward.1} parent=1 // pred_check_branch
      %155 = sbr.rel (0) target = $region117
    $region116: #{intent_classifier_forward.1} parent=1 // pred_region
      %156 = dma.done [#allocation10], 2048
    $region117: #{intent_classifier_forward.1} parent=1 // pred_fallthru
      _
    // Predicated region
    $region118: #{intent_classifier_forward.1} parent=1 // pred_check
      _
    $region119: #{intent_classifier_forward.1} parent=1 // pred_check_branch
      %158 = sbr.rel (0) target = $region121
    $region120: #{intent_classifier_forward.1} parent=1 // pred_region
      %159 = dma.done [#allocation13], 512
    $region121: #{intent_classifier_forward.1} parent=1 // pred_fallthru
      _
    %v160 = vld [vmem:[%s0] sm:$0xff]
    %v161 = vld [vmem:[%s0 + $0x8] sm:$0xff]
    %v162 = vlaneseq
    %v163 = vand.u32 %v162, 127
    %164 = vset.pattern.permute.xlu0 0
    %165 = vperm.xlu0 %164, %v160
    %v166 = vpop.permute.xlu0 %165
    %167 = vset.pattern.permute.xlu0 0
    %168 = vperm.xlu0 %167, %v161
    %v169 = vpop.permute.xlu0 %168
    %vm170 = vcmp.eq.s32.totalorder %v166, %v163
    %vm171 = vcmp.eq.s32.totalorder %v169, %v163
    %v172 = vsel %vm170, 1.0, 0.0
    %v173 = vsel %vm171, 1.0, 0.0
    %v174 = vld [vmem:[#allocation3] sm:$0xff]
    %v175 = vld [vmem:[#allocation3 + $0x8] sm:$0xff]
    %v176 = vld [vmem:[#allocation3 + $0x10] sm:$0xff]
    %v177 = vld [vmem:[#allocation3 + $0x18] sm:$0xff]
    %v178 = vld [vmem:[#allocation3 + $0x20] sm:$0xff]
    %v179 = vld [vmem:[#allocation3 + $0x28] sm:$0xff]
    %v180 = vld [vmem:[#allocation3 + $0x30] sm:$0xff]
    %v181 = vld [vmem:[#allocation3 + $0x38] sm:$0xff]
    %v182 = vld [vmem:[#allocation3 + $0x40] sm:$0xff]
    %v183 = vld [vmem:[#allocation3 + $0x48] sm:$0xff]
    %v184 = vld [vmem:[#allocation3 + $0x50] sm:$0xff]
    %v185 = vld [vmem:[#allocation3 + $0x58] sm:$0xff]
    %v186 = vld [vmem:[#allocation3 + $0x60] sm:$0xf]
    %v187 = vld [vmem:[%s1] sm:$0xff]
    %v188 = vld [vmem:[%s1 + $0x8] sm:$0xff]
    %v189 = vld [vmem:[%s4] sm:$0x1]
    %v190 = vld [vmem:[%s4 + $0x1] sm:$0x1]
    %v191 = vsub.f32 %v190, %v189
    %193 = vset.pattern.permute.xlu0 0
    %194 = vperm.xlu0 %193, %v187
    %v195 = vpop.permute.xlu0 %194
    %198 = vset.pattern.permute.xlu0 0
    %199 = vperm.xlu0 %198, %v188
    %v200 = vpop.permute.xlu0 %199
    %v202 = vlaneseq
    %v203 = vshrl.u32 %v202, 7
    %v204 = vsub.s32 0, %v203
    %v205 = vrot.slane %v191, %v204
    %v206 = vmul.f32 %v195, %v205
    %v207 = vmul.f32 %v200, %v205
    %v208 = vlaneseq
    %v209 = vshrl.u32 %v208, 7
    %v210 = vsub.s32 0, %v209
    %v211 = vrot.slane %v189, %v210
    %v212 = vadd.f32 %v211, %v206
    %v213 = vadd.f32 %v211, %v207
    %v214 = vld [vmem:[#allocation6] sm:$0xff]
    %vm215 = vcmask 818176
    %v217 = vsel %vm215, %v172, 0
    %v220 = vsel %vm215, %v173, 0
    %vm222 = vcmask 1043456
    %v224 = vsel %vm222, %v186, 0
    %226 = vmatprep.subr.mxu0 0.0
    %227 = vmatpush1.msra.mxu0 %v174
    %228 = vmatprep.subr.mxu0 0.0
    %229 = vmatpush1.msra.mxu0 %v175
    %230 = vmatprep.subr.mxu0 0.0
    %231 = vmatpush1.msra.mxu0 %v176
    %232 = vmatprep.subr.mxu0 0.0
    %233 = vmatpush1.msra.mxu0 %v177
    %234 = vmatprep.subr.mxu0 0.0
    %235 = vmatpush1.msra.mxu0 %v178
    %236 = vmatprep.subr.mxu0 0.0
    %237 = vmatpush1.msra.mxu0 %v179
    %238 = vmatprep.subr.mxu0 0.0
    %239 = vmatpush1.msra.mxu0 %v180
    %240 = vmatprep.subr.mxu0 0.0
    %241 = vmatpush1.msra.mxu0 %v181
    %242 = vmatprep.subr.mxu0 0.0
    %243 = vmatpush1.msra.mxu0 %v182
    %244 = vmatprep.subr.mxu0 0.0
    %245 = vmatpush1.msra.mxu0 %v183
    %246 = vmatprep.subr.mxu0 0.0
    %247 = vmatpush1.msra.mxu0 %v184
    %248 = vmatprep.subr.mxu0 0.0
    %249 = vmatpush1.msra.mxu0 %v185
    %250 = vmatprep.subr.mxu0 0.0
    %251 = vmatpush1.msra.mxu0 %v224
    %252 = vmatprep.subr.mxu0 0.0
    %253 = vmatpush1.msra.mxu0 0.0
    %254 = vmatprep.subr.mxu0 0.0
    %255 = vmatpush1.msra.mxu0 0.0
    %256 = vmatprep.subr.mxu0 0.0
    %257 = vmatpush1.msra.mxu0 0.0
    %258 = vmatprep.subr.mxu0 0.0
    %259 = vmatpush1.msra.mxu0 0.0
    %260 = vmatprep.subr.mxu0 0.0
    %261 = vmatpush1.msra.mxu0 0.0
    %262 = vmatprep.subr.mxu0 0.0
    %263 = vmatpush1.msra.mxu0 0.0
    %264 = vmatprep.subr.mxu0 0.0
    %265 = vmatpush1.msra.mxu0 0.0
    %266 = vmatprep.subr.mxu0 0.0
    %267 = vmatpush1.msra.mxu0 0.0
    %268 = vmatprep.subr.mxu0 0.0
    %269 = vmatpush1.msra.mxu0 0.0
    %270 = vmatprep.subr.mxu0 0.0
    %271 = vmatpush1.msra.mxu0 0.0
    %272 = vmatprep.subr.mxu0 0.0
    %273 = vmatpush1.msra.mxu0 0.0
    %274 = vmatprep.subr.mxu0 0.0
    %275 = vmatpush1.msra.mxu0 0.0
    %276 = vmatprep.subr.mxu0 0.0
    %277 = vmatpush1.msra.mxu0 0.0
    %278 = vmatprep.subr.mxu0 0.0
    %279 = vmatpush1.msra.mxu0 0.0
    %280 = vmatprep.subr.mxu0 0.0
    %281 = vmatpush1.msra.mxu0 0.0
    %282 = vmatprep.subr.mxu0 0.0
    %283 = vmatpush1.msra.mxu0 0.0
    %284 = vmatprep.subr.mxu0 0.0
    %285 = vmatpush1.msra.mxu0 0.0
    %286 = vmatprep.subr.mxu0 0.0
    %287 = vmatpush1.msra.mxu0 0.0
    %288 = vmatprep.subr.mxu0 0.0
    %289 = vmatpush1.msra.mxu0 0.0
    %290 = vmatprep.mubr.f32.mxu0 0.0
    %291 = vmatmul.mubr.f32.gmra.mrb[0].mxu0 %v217
    %v292 = vpop.f32.mrb[0].mxu0
    %v293 = vadd.f32 %v212, %v292
    %v294 = vpop.f32.mrb[0].mxu0
    %295 = vmatprep.mubr.f32.mxu0 0.0
    %296 = vmatmul.mubr.f32.gmra.mrb[0].mxu0 %v220
    %v297 = vpop.f32.mrb[0].mxu0
    %v298 = vadd.f32 %v213, %v297
    %v299 = vpop.f32.mrb[0].mxu0
    %300 = vdwg.mxu0
    %v301 = vadd.f32 %v293, %v214
    %v302 = vadd.f32 %v298, %v214
    %v303 = vld [vmem:[%s6] sm:$0x1]
    %v304 = vld [vmem:[%s7] sm:$0x1]
    %vm305 = vcmask 261120
    %v306 = vsel %vm305, %v301, 0.0
    %307 = vadd.xlane.f32.xlu0 %v306
    %v308 = vpop.xlane.xlu0 %307
    %v309 = vsel %vm305, %v302, 0.0
    %310 = vadd.xlane.f32.xlu0 %v309
    %v311 = vpop.xlane.xlu0 %310
    %v312 = vrcp.pop 32.0
    %v313 = vmul.f32 %v308, %v312
    %v314 = vmul.f32 %v311, %v312
    %v315 = vsub.f32 %v301, %v313
    %v316 = vsub.f32 %v302, %v314
    %v317 = vmul.f32 %v315, %v315
    %v318 = vmul.f32 %v316, %v316
    %v319 = vsel %vm305, %v317, 0.0
    %320 = vadd.xlane.f32.xlu0 %v319
    %v321 = vpop.xlane.xlu0 %320
    %v322 = vsel %vm305, %v318, 0.0
    %323 = vadd.xlane.f32.xlu0 %v322
    %v324 = vpop.xlane.xlu0 %323
    %v325 = vmul.f32 %v321, %v312
    %v326 = vmul.f32 %v324, %v312
    %v327 = vadd.f32 %v325, 1e-12
    %v328 = vadd.f32 %v326, 1e-12
    %v329 = vrsqrt.pop %v327
    %v330 = vrsqrt.pop %v328
    %v331 = vmul.f32 %v315, %v329
    %v332 = vmul.f32 %v316, %v330
    %v334 = vlaneseq
    %v335 = vshrl.u32 %v334, 7
    %v336 = vsub.s32 0, %v335
    %v337 = vrot.slane %v303, %v336
    %v339 = vmul.f32 %v331, %v337
    %v340 = vmul.f32 %v332, %v337
    %v342 = vlaneseq
    %v343 = vshrl.u32 %v342, 7
    %v344 = vsub.s32 0, %v343
    %v345 = vrot.slane %v304, %v344
    %v347 = vadd.f32 %v339, %v345
    %v348 = vadd.f32 %v340, %v345
    %v349 = vld [vmem:[%s2] sm:$0x3]
    %v350 = vsub.f32 1.0, %v349
    %v351 = vmul.f32 %v350, -1e+09
    %v352 = vld [vmem:[#allocation8] sm:$0xff]
    %v353 = vld [vmem:[#allocation8 + $0x8] sm:$0xff]
    %v354 = vld [vmem:[#allocation8 + $0x10] sm:$0xff]
    %v355 = vld [vmem:[#allocation8 + $0x18] sm:$0xff]
    %v356 = vld [vmem:[%s9] sm:$0x1]
    %v358 = vlaneseq
    %v359 = vshrl.u32 %v358, 7
    %v360 = vsub.s32 0, %v359
    %v361 = vrot.slane %v356, %v360
    %v364 = vsel %vm305, %v347, 0
    %v367 = vsel %vm305, %v348, 0
    %369 = vmatprep.subr.mxu0 0.0
    %370 = vmatpush1.msra.mxu0 %v352
    %371 = vmatprep.subr.mxu0 0.0
    %372 = vmatpush1.msra.mxu0 %v353
    %373 = vmatprep.subr.mxu0 0.0
    %374 = vmatpush1.msra.mxu0 %v354
    %375 = vmatprep.subr.mxu0 0.0
    %376 = vmatpush1.msra.mxu0 %v355
    %377 = vmatprep.subr.mxu0 0.0
    %378 = vmatpush1.msra.mxu0 0.0
    %379 = vmatprep.subr.mxu0 0.0
    %380 = vmatpush1.msra.mxu0 0.0
    %381 = vmatprep.subr.mxu0 0.0
    %382 = vmatpush1.msra.mxu0 0.0
    %383 = vmatprep.subr.mxu0 0.0
    %384 = vmatpush1.msra.mxu0 0.0
    %385 = vmatprep.subr.mxu0 0.0
    %386 = vmatpush1.msra.mxu0 0.0
    %387 = vmatprep.subr.mxu0 0.0
    %388 = vmatpush1.msra.mxu0 0.0
    %389 = vmatprep.subr.mxu0 0.0
    %390 = vmatpush1.msra.mxu0 0.0
    %391 = vmatprep.subr.mxu0 0.0
    %392 = vmatpush1.msra.mxu0 0.0
    %393 = vmatprep.subr.mxu0 0.0
    %394 = vmatpush1.msra.mxu0 0.0
    %395 = vmatprep.subr.mxu0 0.0
    %396 = vmatpush1.msra.mxu0 0.0
    %397 = vmatprep.subr.mxu0 0.0
    %398 = vmatpush1.msra.mxu0 0.0
    %399 = vmatprep.subr.mxu0 0.0
    %400 = vmatpush1.msra.mxu0 0.0
    %401 = vmatprep.subr.mxu0 0.0
    %402 = vmatpush1.msra.mxu0 0.0
    %403 = vmatprep.subr.mxu0 0.0
    %404 = vmatpush1.msra.mxu0 0.0
    %405 = vmatprep.subr.mxu0 0.0
    %406 = vmatpush1.msra.mxu0 0.0
    %407 = vmatprep.subr.mxu0 0.0
    %408 = vmatpush1.msra.mxu0 0.0
    %409 = vmatprep.subr.mxu0 0.0
    %410 = vmatpush1.msra.mxu0 0.0
    %411 = vmatprep.subr.mxu0 0.0
    %412 = vmatpush1.msra.mxu0 0.0
    %413 = vmatprep.subr.mxu0 0.0
    %414 = vmatpush1.msra.mxu0 0.0
    %415 = vmatprep.subr.mxu0 0.0
    %416 = vmatpush1.msra.mxu0 0.0
    %417 = vmatprep.subr.mxu0 0.0
    %418 = vmatpush1.msra.mxu0 0.0
    %419 = vmatprep.subr.mxu0 0.0
    %420 = vmatpush1.msra.mxu0 0.0
    %421 = vmatprep.subr.mxu0 0.0
    %422 = vmatpush1.msra.mxu0 0.0
    %423 = vmatprep.subr.mxu0 0.0
    %424 = vmatpush1.msra.mxu0 0.0
    %425 = vmatprep.subr.mxu0 0.0
    %426 = vmatpush1.msra.mxu0 0.0
    %427 = vmatprep.subr.mxu0 0.0
    %428 = vmatpush1.msra.mxu0 0.0
    %429 = vmatprep.subr.mxu0 0.0
    %430 = vmatpush1.msra.mxu0 0.0
    %431 = vmatprep.subr.mxu0 0.0
    %432 = vmatpush1.msra.mxu0 0.0
    %433 = vmatprep.mubr.f32.mxu0 0.0
    %434 = vmatmul.mubr.f32.gmra.mrb[0].mxu0 %v364
    %v435 = vpop.f32.mrb[0].mxu0
    %v436 = vadd.f32 %v361, %v435
    %v437 = vpop.f32.mrb[0].mxu0
    %438 = vmatprep.mubr.f32.mxu0 0.0
    %439 = vmatmul.mubr.f32.gmra.mrb[0].mxu0 %v367
    %v440 = vpop.f32.mrb[0].mxu0
    %v441 = vadd.f32 %v361, %v440
    %v442 = vpop.f32.mrb[0].mxu0
    %443 = vdwg.mxu0
    %v444 = vlaneseq
    %v445 = vshrl.u32 %v444, 7
    %v446 = vsub.s32 0, %v445
    %v447 = vrot.slane %v351, %v446
    %449 = vrot.lane.b32.xlu0 %v436, 96
    %v450 = vpop.permute.xlu0 %449
    %vm451 = vcmask 130048
    %v452 = vsel %vm451, %v436, 0
    %v454 = vsel %vm451, %v450, 0
    %456 = vmatprep.subr.mxu0 0.0
    %457 = vmatpush1.xpose.msra.mxu0 %v454
    %458 = vmatprep.subr.mxu0 0.0
    %459 = vmatpush1.xpose.msra.mxu0 0.0
    %460 = vmatprep.subr.mxu0 0.0
    %461 = vmatpush1.xpose.msra.mxu0 0.0
    %462 = vmatprep.subr.mxu0 0.0
    %463 = vmatpush1.xpose.msra.mxu0 0.0
    %464 = vmatprep.subr.mxu0 0.0
    %465 = vmatpush1.xpose.msra.mxu0 0.0
    %466 = vmatprep.subr.mxu0 0.0
    %467 = vmatpush1.xpose.msra.mxu0 0.0
    %468 = vmatprep.subr.mxu0 0.0
    %469 = vmatpush1.xpose.msra.mxu0 0.0
    %470 = vmatprep.subr.mxu0 0.0
    %471 = vmatpush1.xpose.msra.mxu0 0.0
    %472 = vmatprep.subr.mxu0 0.0
    %473 = vmatpush1.xpose.msra.mxu0 0.0
    %474 = vmatprep.subr.mxu0 0.0
    %475 = vmatpush1.xpose.msra.mxu0 0.0
    %476 = vmatprep.subr.mxu0 0.0
    %477 = vmatpush1.xpose.msra.mxu0 0.0
    %478 = vmatprep.subr.mxu0 0.0
    %479 = vmatpush1.xpose.msra.mxu0 0.0
    %480 = vmatprep.subr.mxu0 0.0
    %481 = vmatpush1.xpose.msra.mxu0 0.0
    %482 = vmatprep.subr.mxu0 0.0
    %483 = vmatpush1.xpose.msra.mxu0 0.0
    %484 = vmatprep.subr.mxu0 0.0
    %485 = vmatpush1.xpose.msra.mxu0 0.0
    %486 = vmatprep.subr.mxu0 0.0
    %487 = vmatpush1.xpose.msra.mxu0 0.0
    %488 = vmatprep.subr.mxu0 0.0
    %489 = vmatpush1.xpose.msra.mxu0 0.0
    %490 = vmatprep.subr.mxu0 0.0
    %491 = vmatpush1.xpose.msra.mxu0 0.0
    %492 = vmatprep.subr.mxu0 0.0
    %493 = vmatpush1.xpose.msra.mxu0 0.0
    %494 = vmatprep.subr.mxu0 0.0
    %495 = vmatpush1.xpose.msra.mxu0 0.0
    %496 = vmatprep.subr.mxu0 0.0
    %497 = vmatpush1.xpose.msra.mxu0 0.0
    %498 = vmatprep.subr.mxu0 0.0
    %499 = vmatpush1.xpose.msra.mxu0 0.0
    %500 = vmatprep.subr.mxu0 0.0
    %501 = vmatpush1.xpose.msra.mxu0 0.0
    %502 = vmatprep.subr.mxu0 0.0
    %503 = vmatpush1.xpose.msra.mxu0 0.0
    %504 = vmatprep.subr.mxu0 0.0
    %505 = vmatpush1.xpose.msra.mxu0 0.0
    %506 = vmatprep.subr.mxu0 0.0
    %507 = vmatpush1.xpose.msra.mxu0 0.0
    %508 = vmatprep.subr.mxu0 0.0
    %509 = vmatpush1.xpose.msra.mxu0 0.0
    %510 = vmatprep.subr.mxu0 0.0
    %511 = vmatpush1.xpose.msra.mxu0 0.0
    %512 = vmatprep.subr.mxu0 0.0
    %513 = vmatpush1.xpose.msra.mxu0 0.0
    %514 = vmatprep.subr.mxu0 0.0
    %515 = vmatpush1.xpose.msra.mxu0 0.0
    %516 = vmatprep.subr.mxu0 0.0
    %517 = vmatpush1.xpose.msra.mxu0 0.0
    %518 = vmatprep.subr.mxu0 0.0
    %519 = vmatpush1.xpose.msra.mxu0 0.0
    %520 = vmatprep.mubr.f32.mxu0 0.0
    %521 = vmatmul.mubr.f32.gmra.mrb[0].mxu0 %v452
    %v522 = vpop.f32.mrb[0].mxu0
    %v523 = vadd.f32 %v447, %v522
    %v524 = vpop.f32.mrb[0].mxu0
    %525 = vdwg.mxu0
    %vm526 = vcmask 64512
    %v527 = vsel %vm526, %v523, -inf
    %528 = vmax.xlane.f32.xlu0 %v527
    %v529 = vpop.xlane.xlu0 %528
    %v530 = vsub.f32 %v523, %v529
    %v531 = vmul.f32 %v530, 1.442695
    %v532 = vpow.pop %v531
    %v533 = vsel %vm526, %v532, 0.0
    %534 = vadd.xlane.f32.xlu0 %v533
    %v535 = vpop.xlane.xlu0 %534
    %v536 = vrcp.pop %v535
    %v537 = vmul.f32 %v532, %v536
    %538 = vrot.lane.b32.xlu0 %v436, 64
    %v539 = vpop.permute.xlu0 %538
    %v542 = vsel %vm526, %v537, 0
    %544 = vmatprep.subr.mxu0 0.0
    %545 = vmatpush1.msra.mxu0 %v539
    %546 = vmatprep.subr.mxu0 0.0
    %547 = vmatpush1.msra.mxu0 0.0
    %548 = vmatprep.subr.mxu0 0.0
    %549 = vmatpush1.msra.mxu0 0.0
    %550 = vmatprep.subr.mxu0 0.0
    %551 = vmatpush1.msra.mxu0 0.0
    %552 = vmatprep.subr.mxu0 0.0
    %553 = vmatpush1.msra.mxu0 0.0
    %554 = vmatprep.subr.mxu0 0.0
    %555 = vmatpush1.msra.mxu0 0.0
    %556 = vmatprep.subr.mxu0 0.0
    %557 = vmatpush1.msra.mxu0 0.0
    %558 = vmatprep.subr.mxu0 0.0
    %559 = vmatpush1.msra.mxu0 0.0
    %560 = vmatprep.subr.mxu0 0.0
    %561 = vmatpush1.msra.mxu0 0.0
    %562 = vmatprep.subr.mxu0 0.0
    %563 = vmatpush1.msra.mxu0 0.0
    %564 = vmatprep.subr.mxu0 0.0
    %565 = vmatpush1.msra.mxu0 0.0
    %566 = vmatprep.subr.mxu0 0.0
    %567 = vmatpush1.msra.mxu0 0.0
    %568 = vmatprep.subr.mxu0 0.0
    %569 = vmatpush1.msra.mxu0 0.0
    %570 = vmatprep.subr.mxu0 0.0
    %571 = vmatpush1.msra.mxu0 0.0
    %572 = vmatprep.subr.mxu0 0.0
    %573 = vmatpush1.msra.mxu0 0.0
    %574 = vmatprep.subr.mxu0 0.0
    %575 = vmatpush1.msra.mxu0 0.0
    %576 = vmatprep.subr.mxu0 0.0
    %577 = vmatpush1.msra.mxu0 0.0
    %578 = vmatprep.subr.mxu0 0.0
    %579 = vmatpush1.msra.mxu0 0.0
    %580 = vmatprep.subr.mxu0 0.0
    %581 = vmatpush1.msra.mxu0 0.0
    %582 = vmatprep.subr.mxu0 0.0
    %583 = vmatpush1.msra.mxu0 0.0
    %584 = vmatprep.subr.mxu0 0.0
    %585 = vmatpush1.msra.mxu0 0.0
    %586 = vmatprep.subr.mxu0 0.0
    %587 = vmatpush1.msra.mxu0 0.0
    %588 = vmatprep.subr.mxu0 0.0
    %589 = vmatpush1.msra.mxu0 0.0
    %590 = vmatprep.subr.mxu0 0.0
    %591 = vmatpush1.msra.mxu0 0.0
    %592 = vmatprep.subr.mxu0 0.0
    %593 = vmatpush1.msra.mxu0 0.0
    %594 = vmatprep.subr.mxu0 0.0
    %595 = vmatpush1.msra.mxu0 0.0
    %596 = vmatprep.subr.mxu0 0.0
    %597 = vmatpush1.msra.mxu0 0.0
    %598 = vmatprep.subr.mxu0 0.0
    %599 = vmatpush1.msra.mxu0 0.0
    %600 = vmatprep.subr.mxu0 0.0
    %601 = vmatpush1.msra.mxu0 0.0
    %602 = vmatprep.subr.mxu0 0.0
    %603 = vmatpush1.msra.mxu0 0.0
    %604 = vmatprep.subr.mxu0 0.0
    %605 = vmatpush1.msra.mxu0 0.0
    %606 = vmatprep.subr.mxu0 0.0
    %607 = vmatpush1.msra.mxu0 0.0
    %608 = vmatprep.mubr.f32.mxu0 0.0
    %609 = vmatmul.mubr.f32.gmra.mrb[0].mxu0 %v542
    %v610 = vpop.f32.mrb[0].mxu0
    %v611 = vadd.f32 0.0, %v610
    %v612 = vpop.f32.mrb[0].mxu0
    %613 = vdwg.mxu0
    %614 = vst.msk [vmem:[#allocation2] sm:$0xff] %vm451, %v611
    %615 = vrot.lane.b32.xlu0 %v436, 112
    %v616 = vpop.permute.xlu0 %615
    %617 = vrot.lane.b32.xlu0 %v436, 80
    %v618 = vpop.permute.xlu0 %617
    %v619 = vsel %vm451, %v616, 0
    %v621 = vsel %vm451, %v618, 0
    %623 = vmatprep.subr.mxu0 0.0
    %624 = vmatpush1.xpose.msra.mxu0 %v621
    %625 = vmatprep.subr.mxu0 0.0
    %626 = vmatpush1.xpose.msra.mxu0 0.0
    %627 = vmatprep.subr.mxu0 0.0
    %628 = vmatpush1.xpose.msra.mxu0 0.0
    %629 = vmatprep.subr.mxu0 0.0
    %630 = vmatpush1.xpose.msra.mxu0 0.0
    %631 = vmatprep.subr.mxu0 0.0
    %632 = vmatpush1.xpose.msra.mxu0 0.0
    %633 = vmatprep.subr.mxu0 0.0
    %634 = vmatpush1.xpose.msra.mxu0 0.0
    %635 = vmatprep.subr.mxu0 0.0
    %636 = vmatpush1.xpose.msra.mxu0 0.0
    %637 = vmatprep.subr.mxu0 0.0
    %638 = vmatpush1.xpose.msra.mxu0 0.0
    %639 = vmatprep.subr.mxu0 0.0
    %640 = vmatpush1.xpose.msra.mxu0 0.0
    %641 = vmatprep.subr.mxu0 0.0
    %642 = vmatpush1.xpose.msra.mxu0 0.0
    %643 = vmatprep.subr.mxu0 0.0
    %644 = vmatpush1.xpose.msra.mxu0 0.0
    %645 = vmatprep.subr.mxu0 0.0
    %646 = vmatpush1.xpose.msra.mxu0 0.0
    %647 = vmatprep.subr.mxu0 0.0
    %648 = vmatpush1.xpose.msra.mxu0 0.0
    %649 = vmatprep.subr.mxu0 0.0
    %650 = vmatpush1.xpose.msra.mxu0 0.0
    %651 = vmatprep.subr.mxu0 0.0
    %652 = vmatpush1.xpose.msra.mxu0 0.0
    %653 = vmatprep.subr.mxu0 0.0
    %654 = vmatpush1.xpose.msra.mxu0 0.0
    %655 = vmatprep.subr.mxu0 0.0
    %656 = vmatpush1.xpose.msra.mxu0 0.0
    %657 = vmatprep.subr.mxu0 0.0
    %658 = vmatpush1.xpose.msra.mxu0 0.0
    %659 = vmatprep.subr.mxu0 0.0
    %660 = vmatpush1.xpose.msra.mxu0 0.0
    %661 = vmatprep.subr.mxu0 0.0
    %662 = vmatpush1.xpose.msra.mxu0 0.0
    %663 = vmatprep.subr.mxu0 0.0
    %664 = vmatpush1.xpose.msra.mxu0 0.0
    %665 = vmatprep.subr.mxu0 0.0
    %666 = vmatpush1.xpose.msra.mxu0 0.0
    %667 = vmatprep.subr.mxu0 0.0
    %668 = vmatpush1.xpose.msra.mxu0 0.0
    %669 = vmatprep.subr.mxu0 0.0
    %670 = vmatpush1.xpose.msra.mxu0 0.0
    %671 = vmatprep.subr.mxu0 0.0
    %672 = vmatpush1.xpose.msra.mxu0 0.0
    %673 = vmatprep.subr.mxu0 0.0
    %674 = vmatpush1.xpose.msra.mxu0 0.0
    %675 = vmatprep.subr.mxu0 0.0
    %676 = vmatpush1.xpose.msra.mxu0 0.0
    %677 = vmatprep.subr.mxu0 0.0
    %678 = vmatpush1.xpose.msra.mxu0 0.0
    %679 = vmatprep.subr.mxu0 0.0
    %680 = vmatpush1.xpose.msra.mxu0 0.0
    %681 = vmatprep.subr.mxu0 0.0
    %682 = vmatpush1.xpose.msra.mxu0 0.0
    %683 = vmatprep.subr.mxu0 0.0
    %684 = vmatpush1.xpose.msra.mxu0 0.0
    %685 = vmatprep.subr.mxu0 0.0
    %686 = vmatpush1.xpose.msra.mxu0 0.0
    %687 = vmatprep.mubr.f32.mxu0 0.0
    %688 = vmatmul.mubr.f32.gmra.mrb[0].mxu0 %v619
    %v689 = vpop.f32.mrb[0].mxu0
    %v690 = vadd.f32 %v447, %v689
    %v691 = vpop.f32.mrb[0].mxu0
    %692 = vdwg.mxu0
    %v693 = vsel %vm526, %v690, -inf
    %694 = vmax.xlane.f32.xlu0 %v693
    %v695 = vpop.xlane.xlu0 %694
    %v696 = vsub.f32 %v690, %v695
    %v697 = vmul.f32 %v696, 1.442695
    %v698 = vpow.pop %v697
    %v699 = vsel %vm526, %v698, 0.0
    %700 = vadd.xlane.f32.xlu0 %v699
    %v701 = vpop.xlane.xlu0 %700
    %v702 = vrcp.pop %v701
    %v703 = vmul.f32 %v698, %v702
    %704 = vrot.lane.b32.xlu0 %v436, 48
    %v705 = vpop.permute.xlu0 %704
    %v708 = vsel %vm526, %v703, 0
    %710 = vmatprep.subr.mxu0 0.0
    %711 = vmatpush1.msra.mxu0 %v705
    %712 = vmatprep.subr.mxu0 0.0
    %713 = vmatpush1.msra.mxu0 0.0
    %714 = vmatprep.subr.mxu0 0.0
    %715 = vmatpush1.msra.mxu0 0.0
    %716 = vmatprep.subr.mxu0 0.0
    %717 = vmatpush1.msra.mxu0 0.0
    %718 = vmatprep.subr.mxu0 0.0
    %719 = vmatpush1.msra.mxu0 0.0
    %720 = vmatprep.subr.mxu0 0.0
    %721 = vmatpush1.msra.mxu0 0.0
    %722 = vmatprep.subr.mxu0 0.0
    %723 = vmatpush1.msra.mxu0 0.0
    %724 = vmatprep.subr.mxu0 0.0
    %725 = vmatpush1.msra.mxu0 0.0
    %726 = vmatprep.subr.mxu0 0.0
    %727 = vmatpush1.msra.mxu0 0.0
    %728 = vmatprep.subr.mxu0 0.0
    %729 = vmatpush1.msra.mxu0 0.0
    %730 = vmatprep.subr.mxu0 0.0
    %731 = vmatpush1.msra.mxu0 0.0
    %732 = vmatprep.subr.mxu0 0.0
    %733 = vmatpush1.msra.mxu0 0.0
    %734 = vmatprep.subr.mxu0 0.0
    %735 = vmatpush1.msra.mxu0 0.0
    %736 = vmatprep.subr.mxu0 0.0
    %737 = vmatpush1.msra.mxu0 0.0
    %738 = vmatprep.subr.mxu0 0.0
    %739 = vmatpush1.msra.mxu0 0.0
    %740 = vmatprep.subr.mxu0 0.0
    %741 = vmatpush1.msra.mxu0 0.0
    %742 = vmatprep.subr.mxu0 0.0
    %743 = vmatpush1.msra.mxu0 0.0
    %744 = vmatprep.subr.mxu0 0.0
    %745 = vmatpush1.msra.mxu0 0.0
    %746 = vmatprep.subr.mxu0 0.0
    %747 = vmatpush1.msra.mxu0 0.0
    %748 = vmatprep.subr.mxu0 0.0
    %749 = vmatpush1.msra.mxu0 0.0
    %750 = vmatprep.subr.mxu0 0.0
    %751 = vmatpush1.msra.mxu0 0.0
    %752 = vmatprep.subr.mxu0 0.0
    %753 = vmatpush1.msra.mxu0 0.0
    %754 = vmatprep.subr.mxu0 0.0
    %755 = vmatpush1.msra.mxu0 0.0
    %756 = vmatprep.subr.mxu0 0.0
    %757 = vmatpush1.msra.mxu0 0.0
    %758 = vmatprep.subr.mxu0 0.0
    %759 = vmatpush1.msra.mxu0 0.0
    %760 = vmatprep.subr.mxu0 0.0
    %761 = vmatpush1.msra.mxu0 0.0
    %762 = vmatprep.subr.mxu0 0.0
    %763 = vmatpush1.msra.mxu0 0.0
    %764 = vmatprep.subr.mxu0 0.0
    %765 = vmatpush1.msra.mxu0 0.0
    %766 = vmatprep.subr.mxu0 0.0
    %767 = vmatpush1.msra.mxu0 0.0
    %768 = vmatprep.subr.mxu0 0.0
    %769 = vmatpush1.msra.mxu0 0.0
    %770 = vmatprep.subr.mxu0 0.0
    %771 = vmatpush1.msra.mxu0 0.0
    %772 = vmatprep.subr.mxu0 0.0
    %773 = vmatpush1.msra.mxu0 0.0
    %774 = vmatprep.mubr.f32.mxu0 0.0
    %775 = vmatmul.mubr.f32.gmra.mrb[0].mxu0 %v708
    %v776 = vpop.f32.mrb[0].mxu0
    %v777 = vadd.f32 0.0, %v776
    %v778 = vpop.f32.mrb[0].mxu0
    %779 = vdwg.mxu0
    %781 = vrot.lane.b32.xlu0 %v777, 16
    %v782 = vpop.permute.xlu0 %781
    %vm784 = vcmask 261248
    %785 = vst.msk [vmem:[#allocation2] sm:$0xff] %vm784, %v782
    %v786 = vlaneseq
    %v787 = vshrl.u32 %v786, 7
    %v788 = vsub.s32 1, %v787
    %v789 = vrot.slane %v351, %v788
    %791 = vrot.lane.b32.xlu0 %v441, 96
    %v792 = vpop.permute.xlu0 %791
    %v793 = vsel %vm451, %v441, 0
    %v795 = vsel %vm451, %v792, 0
    %797 = vmatprep.subr.mxu0 0.0
    %798 = vmatpush1.xpose.msra.mxu0 %v795
    %799 = vmatprep.subr.mxu0 0.0
    %800 = vmatpush1.xpose.msra.mxu0 0.0
    %801 = vmatprep.subr.mxu0 0.0
    %802 = vmatpush1.xpose.msra.mxu0 0.0
    %803 = vmatprep.subr.mxu0 0.0
    %804 = vmatpush1.xpose.msra.mxu0 0.0
    %805 = vmatprep.subr.mxu0 0.0
    %806 = vmatpush1.xpose.msra.mxu0 0.0
    %807 = vmatprep.subr.mxu0 0.0
    %808 = vmatpush1.xpose.msra.mxu0 0.0
    %809 = vmatprep.subr.mxu0 0.0
    %810 = vmatpush1.xpose.msra.mxu0 0.0
    %811 = vmatprep.subr.mxu0 0.0
    %812 = vmatpush1.xpose.msra.mxu0 0.0
    %813 = vmatprep.subr.mxu0 0.0
    %814 = vmatpush1.xpose.msra.mxu0 0.0
    %815 = vmatprep.subr.mxu0 0.0
    %816 = vmatpush1.xpose.msra.mxu0 0.0
    %817 = vmatprep.subr.mxu0 0.0
    %818 = vmatpush1.xpose.msra.mxu0 0.0
    %819 = vmatprep.subr.mxu0 0.0
    %820 = vmatpush1.xpose.msra.mxu0 0.0
    %821 = vmatprep.subr.mxu0 0.0
    %822 = vmatpush1.xpose.msra.mxu0 0.0
    %823 = vmatprep.subr.mxu0 0.0
    %824 = vmatpush1.xpose.msra.mxu0 0.0
    %825 = vmatprep.subr.mxu0 0.0
    %826 = vmatpush1.xpose.msra.mxu0 0.0
    %827 = vmatprep.subr.mxu0 0.0
    %828 = vmatpush1.xpose.msra.mxu0 0.0
    %829 = vmatprep.subr.mxu0 0.0
    %830 = vmatpush1.xpose.msra.mxu0 0.0
    %831 = vmatprep.subr.mxu0 0.0
    %832 = vmatpush1.xpose.msra.mxu0 0.0
    %833 = vmatprep.subr.mxu0 0.0
    %834 = vmatpush1.xpose.msra.mxu0 0.0
    %835 = vmatprep.subr.mxu0 0.0
    %836 = vmatpush1.xpose.msra.mxu0 0.0
    %837 = vmatprep.subr.mxu0 0.0
    %838 = vmatpush1.xpose.msra.mxu0 0.0
    %839 = vmatprep.subr.mxu0 0.0
    %840 = vmatpush1.xpose.msra.mxu0 0.0
    %841 = vmatprep.subr.mxu0 0.0
    %842 = vmatpush1.xpose.msra.mxu0 0.0
    %843 = vmatprep.subr.mxu0 0.0
    %844 = vmatpush1.xpose.msra.mxu0 0.0
    %845 = vmatprep.subr.mxu0 0.0
    %846 = vmatpush1.xpose.msra.mxu0 0.0
    %847 = vmatprep.subr.mxu0 0.0
    %848 = vmatpush1.xpose.msra.mxu0 0.0
    %849 = vmatprep.subr.mxu0 0.0
    %850 = vmatpush1.xpose.msra.mxu0 0.0
    %851 = vmatprep.subr.mxu0 0.0
    %852 = vmatpush1.xpose.msra.mxu0 0.0
    %853 = vmatprep.subr.mxu0 0.0
    %854 = vmatpush1.xpose.msra.mxu0 0.0
    %855 = vmatprep.subr.mxu0 0.0
    %856 = vmatpush1.xpose.msra.mxu0 0.0
    %857 = vmatprep.subr.mxu0 0.0
    %858 = vmatpush1.xpose.msra.mxu0 0.0
    %859 = vmatprep.subr.mxu0 0.0
    %860 = vmatpush1.xpose.msra.mxu0 0.0
    %861 = vmatprep.mubr.f32.mxu0 0.0
    %862 = vmatmul.mubr.f32.gmra.mrb[0].mxu0 %v793
    %v863 = vpop.f32.mrb[0].mxu0
    %v864 = vadd.f32 %v789, %v863
    %v865 = vpop.f32.mrb[0].mxu0
    %866 = vdwg.mxu0
    %v867 = vsel %vm526, %v864, -inf
    %868 = vmax.xlane.f32.xlu0 %v867
    %v869 = vpop.xlane.xlu0 %868
    %v870 = vsub.f32 %v864, %v869
    %v871 = vmul.f32 %v870, 1.442695
    %v872 = vpow.pop %v871
    %v873 = vsel %vm526, %v872, 0.0
    %874 = vadd.xlane.f32.xlu0 %v873
    %v875 = vpop.xlane.xlu0 %874
    %v876 = vrcp.pop %v875
    %v877 = vmul.f32 %v872, %v876
    %878 = vrot.lane.b32.xlu0 %v441, 64
    %v879 = vpop.permute.xlu0 %878
    %v882 = vsel %vm526, %v877, 0
    %884 = vmatprep.subr.mxu0 0.0
    %885 = vmatpush1.msra.mxu0 %v879
    %886 = vmatprep.subr.mxu0 0.0
    %887 = vmatpush1.msra.mxu0 0.0
    %888 = vmatprep.subr.mxu0 0.0
    %889 = vmatpush1.msra.mxu0 0.0
    %890 = vmatprep.subr.mxu0 0.0
    %891 = vmatpush1.msra.mxu0 0.0
    %892 = vmatprep.subr.mxu0 0.0
    %893 = vmatpush1.msra.mxu0 0.0
    %894 = vmatprep.subr.mxu0 0.0
    %895 = vmatpush1.msra.mxu0 0.0
    %896 = vmatprep.subr.mxu0 0.0
    %897 = vmatpush1.msra.mxu0 0.0
    %898 = vmatprep.subr.mxu0 0.0
    %899 = vmatpush1.msra.mxu0 0.0
    %900 = vmatprep.subr.mxu0 0.0
    %901 = vmatpush1.msra.mxu0 0.0
    %902 = vmatprep.subr.mxu0 0.0
    %903 = vmatpush1.msra.mxu0 0.0
    %904 = vmatprep.subr.mxu0 0.0
    %905 = vmatpush1.msra.mxu0 0.0
    %906 = vmatprep.subr.mxu0 0.0
    %907 = vmatpush1.msra.mxu0 0.0
    %908 = vmatprep.subr.mxu0 0.0
    %909 = vmatpush1.msra.mxu0 0.0
    %910 = vmatprep.subr.mxu0 0.0
    %911 = vmatpush1.msra.mxu0 0.0
    %912 = vmatprep.subr.mxu0 0.0
    %913 = vmatpush1.msra.mxu0 0.0
    %914 = vmatprep.subr.mxu0 0.0
    %915 = vmatpush1.msra.mxu0 0.0
    %916 = vmatprep.subr.mxu0 0.0
    %917 = vmatpush1.msra.mxu0 0.0
    %918 = vmatprep.subr.mxu0 0.0
    %919 = vmatpush1.msra.mxu0 0.0
    %920 = vmatprep.subr.mxu0 0.0
    %921 = vmatpush1.msra.mxu0 0.0
    %922 = vmatprep.subr.mxu0 0.0
    %923 = vmatpush1.msra.mxu0 0.0
    %924 = vmatprep.subr.mxu0 0.0
    %925 = vmatpush1.msra.mxu0 0.0
    %926 = vmatprep.subr.mxu0 0.0
    %927 = vmatpush1.msra.mxu0 0.0
    %928 = vmatprep.subr.mxu0 0.0
    %929 = vmatpush1.msra.mxu0 0.0
    %930 = vmatprep.subr.mxu0 0.0
    %931 = vmatpush1.msra.mxu0 0.0
    %932 = vmatprep.subr.mxu0 0.0
    %933 = vmatpush1.msra.mxu0 0.0
    %934 = vmatprep.subr.mxu0 0.0
    %935 = vmatpush1.msra.mxu0 0.0
    %936 = vmatprep.subr.mxu0 0.0
    %937 = vmatpush1.msra.mxu0 0.0
    %938 = vmatprep.subr.mxu0 0.0
    %939 = vmatpush1.msra.mxu0 0.0
    %940 = vmatprep.subr.mxu0 0.0
    %941 = vmatpush1.msra.mxu0 0.0
    %942 = vmatprep.subr.mxu0 0.0
    %943 = vmatpush1.msra.mxu0 0.0
    %944 = vmatprep.subr.mxu0 0.0
    %945 = vmatpush1.msra.mxu0 0.0
    %946 = vmatprep.subr.mxu0 0.0
    %947 = vmatpush1.msra.mxu0 0.0
    %948 = vmatprep.mubr.f32.mxu0 0.0
    %949 = vmatmul.mubr.f32.gmra.mrb[0].mxu0 %v882
    %v950 = vpop.f32.mrb[0].mxu0
    %v951 = vadd.f32 0.0, %v950
    %v952 = vpop.f32.mrb[0].mxu0
    %953 = vdwg.mxu0
    %954 = vst.msk [vmem:[#allocation2 + $0x8] sm:$0xff] %vm451, %v951
    %955 = vrot.lane.b32.xlu0 %v441, 112
    %v956 = vpop.permute.xlu0 %955
    %957 = vrot.lane.b32.xlu0 %v441, 80
    %v958 = vpop.permute.xlu0 %957
    %v959 = vsel %vm451, %v956, 0
    %v961 = vsel %vm451, %v958, 0
    %963 = vmatprep.subr.mxu0 0.0
    %964 = vmatpush1.xpose.msra.mxu0 %v961
    %965 = vmatprep.subr.mxu0 0.0
    %966 = vmatpush1.xpose.msra.mxu0 0.0
    %967 = vmatprep.subr.mxu0 0.0
    %968 = vmatpush1.xpose.msra.mxu0 0.0
    %969 = vmatprep.subr.mxu0 0.0
    %970 = vmatpush1.xpose.msra.mxu0 0.0
    %971 = vmatprep.subr.mxu0 0.0
    %972 = vmatpush1.xpose.msra.mxu0 0.0
    %973 = vmatprep.subr.mxu0 0.0
    %974 = vmatpush1.xpose.msra.mxu0 0.0
    %975 = vmatprep.subr.mxu0 0.0
    %976 = vmatpush1.xpose.msra.mxu0 0.0
    %977 = vmatprep.subr.mxu0 0.0
    %978 = vmatpush1.xpose.msra.mxu0 0.0
    %979 = vmatprep.subr.mxu0 0.0
    %980 = vmatpush1.xpose.msra.mxu0 0.0
    %981 = vmatprep.subr.mxu0 0.0
    %982 = vmatpush1.xpose.msra.mxu0 0.0
    %983 = vmatprep.subr.mxu0 0.0
    %984 = vmatpush1.xpose.msra.mxu0 0.0
    %985 = vmatprep.subr.mxu0 0.0
    %986 = vmatpush1.xpose.msra.mxu0 0.0
    %987 = vmatprep.subr.mxu0 0.0
    %988 = vmatpush1.xpose.msra.mxu0 0.0
    %989 = vmatprep.subr.mxu0 0.0
    %990 = vmatpush1.xpose.msra.mxu0 0.0
    %991 = vmatprep.subr.mxu0 0.0
    %992 = vmatpush1.xpose.msra.mxu0 0.0
    %993 = vmatprep.subr.mxu0 0.0
    %994 = vmatpush1.xpose.msra.mxu0 0.0
    %995 = vmatprep.subr.mxu0 0.0
    %996 = vmatpush1.xpose.msra.mxu0 0.0
    %997 = vmatprep.subr.mxu0 0.0
    %998 = vmatpush1.xpose.msra.mxu0 0.0
    %999 = vmatprep.subr.mxu0 0.0
    %1000 = vmatpush1.xpose.msra.mxu0 0.0
    %1001 = vmatprep.subr.mxu0 0.0
    %1002 = vmatpush1.xpose.msra.mxu0 0.0
    %1003 = vmatprep.subr.mxu0 0.0
    %1004 = vmatpush1.xpose.msra.mxu0 0.0
    %1005 = vmatprep.subr.mxu0 0.0
    %1006 = vmatpush1.xpose.msra.mxu0 0.0
    %1007 = vmatprep.subr.mxu0 0.0
    %1008 = vmatpush1.xpose.msra.mxu0 0.0
    %1009 = vmatprep.subr.mxu0 0.0
    %1010 = vmatpush1.xpose.msra.mxu0 0.0
    %1011 = vmatprep.subr.mxu0 0.0
    %1012 = vmatpush1.xpose.msra.mxu0 0.0
    %1013 = vmatprep.subr.mxu0 0.0
    %1014 = vmatpush1.xpose.msra.mxu0 0.0
    %1015 = vmatprep.subr.mxu0 0.0
    %1016 = vmatpush1.xpose.msra.mxu0 0.0
    %1017 = vmatprep.subr.mxu0 0.0
    %1018 = vmatpush1.xpose.msra.mxu0 0.0
    %1019 = vmatprep.subr.mxu0 0.0
    %1020 = vmatpush1.xpose.msra.mxu0 0.0
    %1021 = vmatprep.subr.mxu0 0.0
    %1022 = vmatpush1.xpose.msra.mxu0 0.0
    %1023 = vmatprep.subr.mxu0 0.0
    %1024 = vmatpush1.xpose.msra.mxu0 0.0
    %1025 = vmatprep.subr.mxu0 0.0
    %1026 = vmatpush1.xpose.msra.mxu0 0.0
    %1027 = vmatprep.mubr.f32.mxu0 0.0
    %1028 = vmatmul.mubr.f32.gmra.mrb[0].mxu0 %v959
    %v1029 = vpop.f32.mrb[0].mxu0
    %v1030 = vadd.f32 %v789, %v1029
    %v1031 = vpop.f32.mrb[0].mxu0
    %1032 = vdwg.mxu0
    %v1033 = vsel %vm526, %v1030, -inf
    %1034 = vmax.xlane.f32.xlu0 %v1033
    %v1035 = vpop.xlane.xlu0 %1034
    %v1036 = vsub.f32 %v1030, %v1035
    %v1037 = vmul.f32 %v1036, 1.442695
    %v1038 = vpow.pop %v1037
    %v1039 = vsel %vm526, %v1038, 0.0
    %1040 = vadd.xlane.f32.xlu0 %v1039
    %v1041 = vpop.xlane.xlu0 %1040
    %v1042 = vrcp.pop %v1041
    %v1043 = vmul.f32 %v1038, %v1042
    %1044 = vrot.lane.b32.xlu0 %v441, 48
    %v1045 = vpop.permute.xlu0 %1044
    %v1048 = vsel %vm526, %v1043, 0
    %1050 = vmatprep.subr.mxu0 0.0
    %1051 = vmatpush1.msra.mxu0 %v1045
    %1052 = vmatprep.subr.mxu0 0.0
    %1053 = vmatpush1.msra.mxu0 0.0
    %1054 = vmatprep.subr.mxu0 0.0
    %1055 = vmatpush1.msra.mxu0 0.0
    %1056 = vmatprep.subr.mxu0 0.0
    %1057 = vmatpush1.msra.mxu0 0.0
    %1058 = vmatprep.subr.mxu0 0.0
    %1059 = vmatpush1.msra.mxu0 0.0
    %1060 = vmatprep.subr.mxu0 0.0
    %1061 = vmatpush1.msra.mxu0 0.0
    %1062 = vmatprep.subr.mxu0 0.0
    %1063 = vmatpush1.msra.mxu0 0.0
    %1064 = vmatprep.subr.mxu0 0.0
    %1065 = vmatpush1.msra.mxu0 0.0
    %1066 = vmatprep.subr.mxu0 0.0
    %1067 = vmatpush1.msra.mxu0 0.0
    %1068 = vmatprep.subr.mxu0 0.0
    %1069 = vmatpush1.msra.mxu0 0.0
    %1070 = vmatprep.subr.mxu0 0.0
    %1071 = vmatpush1.msra.mxu0 0.0
    %1072 = vmatprep.subr.mxu0 0.0
    %1073 = vmatpush1.msra.mxu0 0.0
    %1074 = vmatprep.subr.mxu0 0.0
    %1075 = vmatpush1.msra.mxu0 0.0
    %1076 = vmatprep.subr.mxu0 0.0
    %1077 = vmatpush1.msra.mxu0 0.0
    %1078 = vmatprep.subr.mxu0 0.0
    %1079 = vmatpush1.msra.mxu0 0.0
    %1080 = vmatprep.subr.mxu0 0.0
    %1081 = vmatpush1.msra.mxu0 0.0
    %1082 = vmatprep.subr.mxu0 0.0
    %1083 = vmatpush1.msra.mxu0 0.0
    %1084 = vmatprep.subr.mxu0 0.0
    %1085 = vmatpush1.msra.mxu0 0.0
    %1086 = vmatprep.subr.mxu0 0.0
    %1087 = vmatpush1.msra.mxu0 0.0
    %1088 = vmatprep.subr.mxu0 0.0
    %1089 = vmatpush1.msra.mxu0 0.0
    %1090 = vmatprep.subr.mxu0 0.0
    %1091 = vmatpush1.msra.mxu0 0.0
    %1092 = vmatprep.subr.mxu0 0.0
    %1093 = vmatpush1.msra.mxu0 0.0
    %1094 = vmatprep.subr.mxu0 0.0
    %1095 = vmatpush1.msra.mxu0 0.0
    %1096 = vmatprep.subr.mxu0 0.0
    %1097 = vmatpush1.msra.mxu0 0.0
    %1098 = vmatprep.subr.mxu0 0.0
    %1099 = vmatpush1.msra.mxu0 0.0
    %1100 = vmatprep.subr.mxu0 0.0
    %1101 = vmatpush1.msra.mxu0 0.0
    %1102 = vmatprep.subr.mxu0 0.0
    %1103 = vmatpush1.msra.mxu0 0.0
    %1104 = vmatprep.subr.mxu0 0.0
    %1105 = vmatpush1.msra.mxu0 0.0
    %1106 = vmatprep.subr.mxu0 0.0
    %1107 = vmatpush1.msra.mxu0 0.0
    %1108 = vmatprep.subr.mxu0 0.0
    %1109 = vmatpush1.msra.mxu0 0.0
    %1110 = vmatprep.subr.mxu0 0.0
    %1111 = vmatpush1.msra.mxu0 0.0
    %1112 = vmatprep.subr.mxu0 0.0
    %1113 = vmatpush1.msra.mxu0 0.0
    %1114 = vmatprep.mubr.f32.mxu0 0.0
    %1115 = vmatmul.mubr.f32.gmra.mrb[0].mxu0 %v1048
    %v1116 = vpop.f32.mrb[0].mxu0
    %v1117 = vadd.f32 0.0, %v1116
    %v1118 = vpop.f32.mrb[0].mxu0
    %1119 = vdwg.mxu0
    %1121 = vrot.lane.b32.xlu0 %v1117, 16
    %v1122 = vpop.permute.xlu0 %1121
    %1124 = vst.msk [vmem:[#allocation2 + $0x8] sm:$0xff] %vm784, %v1122
    %v1125 = vld [vmem:[#allocation2] sm:$0xff]
    %v1126 = vld [vmem:[#allocation2 + $0x8] sm:$0xff]
    %v1127 = vld [vmem:[#allocation9] sm:$0xff]
    %v1128 = vld [vmem:[#allocation9 + $0x8] sm:$0xff]
    %v1129 = vld [vmem:[#allocation9 + $0x10] sm:$0xff]
    %v1130 = vld [vmem:[#allocation9 + $0x18] sm:$0xff]
    %v1131 = vld [vmem:[%s11] sm:$0x1]
    %v1133 = vlaneseq
    %v1134 = vshrl.u32 %v1133, 7
    %v1135 = vsub.s32 0, %v1134
    %v1136 = vrot.slane %v1131, %v1135
    %v1139 = vsel %vm305, %v1125, 0
    %v1142 = vsel %vm305, %v1126, 0
    %1144 = vmatprep.subr.mxu0 0.0
    %1145 = vmatpush1.msra.mxu0 %v1127
    %1146 = vmatprep.subr.mxu0 0.0
    %1147 = vmatpush1.msra.mxu0 %v1128
    %1148 = vmatprep.subr.mxu0 0.0
    %1149 = vmatpush1.msra.mxu0 %v1129
    %1150 = vmatprep.subr.mxu0 0.0
    %1151 = vmatpush1.msra.mxu0 %v1130
    %1152 = vmatprep.subr.mxu0 0.0
    %1153 = vmatpush1.msra.mxu0 0.0
    %1154 = vmatprep.subr.mxu0 0.0
    %1155 = vmatpush1.msra.mxu0 0.0
    %1156 = vmatprep.subr.mxu0 0.0
    %1157 = vmatpush1.msra.mxu0 0.0
    %1158 = vmatprep.subr.mxu0 0.0
    %1159 = vmatpush1.msra.mxu0 0.0
    %1160 = vmatprep.subr.mxu0 0.0
    %1161 = vmatpush1.msra.mxu0 0.0
    %1162 = vmatprep.subr.mxu0 0.0
    %1163 = vmatpush1.msra.mxu0 0.0
    %1164 = vmatprep.subr.mxu0 0.0
    %1165 = vmatpush1.msra.mxu0 0.0
    %1166 = vmatprep.subr.mxu0 0.0
    %1167 = vmatpush1.msra.mxu0 0.0
    %1168 = vmatprep.subr.mxu0 0.0
    %1169 = vmatpush1.msra.mxu0 0.0
    %1170 = vmatprep.subr.mxu0 0.0
    %1171 = vmatpush1.msra.mxu0 0.0
    %1172 = vmatprep.subr.mxu0 0.0
    %1173 = vmatpush1.msra.mxu0 0.0
    %1174 = vmatprep.subr.mxu0 0.0
    %1175 = vmatpush1.msra.mxu0 0.0
    %1176 = vmatprep.subr.mxu0 0.0
    %1177 = vmatpush1.msra.mxu0 0.0
    %1178 = vmatprep.subr.mxu0 0.0
    %1179 = vmatpush1.msra.mxu0 0.0
    %1180 = vmatprep.subr.mxu0 0.0
    %1181 = vmatpush1.msra.mxu0 0.0
    %1182 = vmatprep.subr.mxu0 0.0
    %1183 = vmatpush1.msra.mxu0 0.0
    %1184 = vmatprep.subr.mxu0 0.0
    %1185 = vmatpush1.msra.mxu0 0.0
    %1186 = vmatprep.subr.mxu0 0.0
    %1187 = vmatpush1.msra.mxu0 0.0
    %1188 = vmatprep.subr.mxu0 0.0
    %1189 = vmatpush1.msra.mxu0 0.0
    %1190 = vmatprep.subr.mxu0 0.0
    %1191 = vmatpush1.msra.mxu0 0.0
    %1192 = vmatprep.subr.mxu0 0.0
    %1193 = vmatpush1.msra.mxu0 0.0
    %1194 = vmatprep.subr.mxu0 0.0
    %1195 = vmatpush1.msra.mxu0 0.0
    %1196 = vmatprep.subr.mxu0 0.0
    %1197 = vmatpush1.msra.mxu0 0.0
    %1198 = vmatprep.subr.mxu0 0.0
    %1199 = vmatpush1.msra.mxu0 0.0
    %1200 = vmatprep.subr.mxu0 0.0
    %1201 = vmatpush1.msra.mxu0 0.0
    %1202 = vmatprep.subr.mxu0 0.0
    %1203 = vmatpush1.msra.mxu0 0.0
    %1204 = vmatprep.subr.mxu0 0.0
    %1205 = vmatpush1.msra.mxu0 0.0
    %1206 = vmatprep.subr.mxu0 0.0
    %1207 = vmatpush1.msra.mxu0 0.0
    %1208 = vmatprep.mubr.f32.mxu0 0.0
    %1209 = vmatmul.mubr.f32.gmra.mrb[0].mxu0 %v1139
    %v1210 = vpop.f32.mrb[0].mxu0
    %v1211 = vadd.f32 %v1136, %v1210
    %v1212 = vpop.f32.mrb[0].mxu0
    %1213 = vmatprep.mubr.f32.mxu0 0.0
    %1214 = vmatmul.mubr.f32.gmra.mrb[0].mxu0 %v1142
    %v1215 = vpop.f32.mrb[0].mxu0
    %v1216 = vadd.f32 %v1136, %v1215
    %v1217 = vpop.f32.mrb[0].mxu0
    %1218 = vdwg.mxu0
    %v1219 = vadd.f32 %v347, %v1211
    %v1220 = vadd.f32 %v348, %v1216
    %v1221 = vld [vmem:[%s16] sm:$0x1]
    %v1222 = vld [vmem:[%s17] sm:$0x1]
    %v1223 = vsel %vm305, %v1219, 0.0
    %1224 = vadd.xlane.f32.xlu0 %v1223
    %v1225 = vpop.xlane.xlu0 %1224
    %v1226 = vsel %vm305, %v1220, 0.0
    %1227 = vadd.xlane.f32.xlu0 %v1226
    %v1228 = vpop.xlane.xlu0 %1227
    %v1229 = vmul.f32 %v1225, %v312
    %v1230 = vmul.f32 %v1228, %v312
    %v1231 = vsub.f32 %v1219, %v1229
    %v1232 = vsub.f32 %v1220, %v1230
    %v1233 = vmul.f32 %v1231, %v1231
    %v1234 = vmul.f32 %v1232, %v1232
    %v1235 = vsel %vm305, %v1233, 0.0
    %1236 = vadd.xlane.f32.xlu0 %v1235
    %v1237 = vpop.xlane.xlu0 %1236
    %v1238 = vsel %vm305, %v1234, 0.0
    %1239 = vadd.xlane.f32.xlu0 %v1238
    %v1240 = vpop.xlane.xlu0 %1239
    %v1241 = vmul.f32 %v1237, %v312
    %v1242 = vmul.f32 %v1240, %v312
    %v1243 = vadd.f32 %v1241, 1e-12
    %v1244 = vadd.f32 %v1242, 1e-12
    %v1245 = vrsqrt.pop %v1243
    %v1246 = vrsqrt.pop %v1244
    %v1247 = vmul.f32 %v1231, %v1245
    %v1248 = vmul.f32 %v1232, %v1246
    %v1250 = vlaneseq
    %v1251 = vshrl.u32 %v1250, 7
    %v1252 = vsub.s32 0, %v1251
    %v1253 = vrot.slane %v1221, %v1252
    %v1255 = vmul.f32 %v1247, %v1253
    %v1256 = vmul.f32 %v1248, %v1253
    %v1258 = vlaneseq
    %v1259 = vshrl.u32 %v1258, 7
    %v1260 = vsub.s32 0, %v1259
    %v1261 = vrot.slane %v1222, %v1260
    %v1263 = vadd.f32 %v1255, %v1261
    %v1264 = vadd.f32 %v1256, %v1261
    %v1265 = vld [vmem:[%s12] sm:$0xff]
    %v1266 = vld [vmem:[%s12 + $0x8] sm:$0xff]
    %v1267 = vld [vmem:[%s12 + $0x10] sm:$0xff]
    %v1268 = vld [vmem:[%s12 + $0x18] sm:$0xff]
    %v1269 = vld [vmem:[%s13] sm:$0x1]
    %v1271 = vlaneseq
    %v1272 = vshrl.u32 %v1271, 7
    %v1273 = vsub.s32 0, %v1272
    %v1274 = vrot.slane %v1269, %v1273
    %v1277 = vsel %vm305, %v1263, 0
    %v1280 = vsel %vm305, %v1264, 0
    %1282 = vmatprep.subr.mxu0 0.0
    %1283 = vmatpush1.msra.mxu0 %v1265
    %1284 = vmatprep.subr.mxu0 0.0
    %1285 = vmatpush1.msra.mxu0 %v1266
    %1286 = vmatprep.subr.mxu0 0.0
    %1287 = vmatpush1.msra.mxu0 %v1267
    %1288 = vmatprep.subr.mxu0 0.0
    %1289 = vmatpush1.msra.mxu0 %v1268
    %1290 = vmatprep.subr.mxu0 0.0
    %1291 = vmatpush1.msra.mxu0 0.0
    %1292 = vmatprep.subr.mxu0 0.0
    %1293 = vmatpush1.msra.mxu0 0.0
    %1294 = vmatprep.subr.mxu0 0.0
    %1295 = vmatpush1.msra.mxu0 0.0
    %1296 = vmatprep.subr.mxu0 0.0
    %1297 = vmatpush1.msra.mxu0 0.0
    %1298 = vmatprep.subr.mxu0 0.0
    %1299 = vmatpush1.msra.mxu0 0.0
    %1300 = vmatprep.subr.mxu0 0.0
    %1301 = vmatpush1.msra.mxu0 0.0
    %1302 = vmatprep.subr.mxu0 0.0
    %1303 = vmatpush1.msra.mxu0 0.0
    %1304 = vmatprep.subr.mxu0 0.0
    %1305 = vmatpush1.msra.mxu0 0.0
    %1306 = vmatprep.subr.mxu0 0.0
    %1307 = vmatpush1.msra.mxu0 0.0
    %1308 = vmatprep.subr.mxu0 0.0
    %1309 = vmatpush1.msra.mxu0 0.0
    %1310 = vmatprep.subr.mxu0 0.0
    %1311 = vmatpush1.msra.mxu0 0.0
    %1312 = vmatprep.subr.mxu0 0.0
    %1313 = vmatpush1.msra.mxu0 0.0
    %1314 = vmatprep.subr.mxu0 0.0
    %1315 = vmatpush1.msra.mxu0 0.0
    %1316 = vmatprep.subr.mxu0 0.0
    %1317 = vmatpush1.msra.mxu0 0.0
    %1318 = vmatprep.subr.mxu0 0.0
    %1319 = vmatpush1.msra.mxu0 0.0
    %1320 = vmatprep.subr.mxu0 0.0
    %1321 = vmatpush1.msra.mxu0 0.0
    %1322 = vmatprep.subr.mxu0 0.0
    %1323 = vmatpush1.msra.mxu0 0.0
    %1324 = vmatprep.subr.mxu0 0.0
    %1325 = vmatpush1.msra.mxu0 0.0
    %1326 = vmatprep.subr.mxu0 0.0
    %1327 = vmatpush1.msra.mxu0 0.0
    %1328 = vmatprep.subr.mxu0 0.0
    %1329 = vmatpush1.msra.mxu0 0.0
    %1330 = vmatprep.subr.mxu0 0.0
    %1331 = vmatpush1.msra.mxu0 0.0
    %1332 = vmatprep.subr.mxu0 0.0
    %1333 = vmatpush1.msra.mxu0 0.0
    %1334 = vmatprep.subr.mxu0 0.0
    %1335 = vmatpush1.msra.mxu0 0.0
    %1336 = vmatprep.subr.mxu0 0.0
    %1337 = vmatpush1.msra.mxu0 0.0
    %1338 = vmatprep.subr.mxu0 0.0
    %1339 = vmatpush1.msra.mxu0 0.0
    %1340 = vmatprep.subr.mxu0 0.0
    %1341 = vmatpush1.msra.mxu0 0.0
    %1342 = vmatprep.subr.mxu0 0.0
    %1343 = vmatpush1.msra.mxu0 0.0
    %1344 = vmatprep.subr.mxu0 0.0
    %1345 = vmatpush1.msra.mxu0 0.0
    %1346 = vmatprep.mubr.f32.mxu0 0.0
    %1347 = vmatmul.mubr.f32.gmra.mrb[0].mxu0 %v1277
    %v1348 = vpop.f32.mrb[0].mxu0
    %v1349 = vadd.f32 %v1274, %v1348
    %v1350 = vpop.f32.mrb[0].mxu0
    %1351 = vmatprep.mubr.f32.mxu0 0.0
    %1352 = vmatmul.mubr.f32.gmra.mrb[0].mxu0 %v1280
    %v1353 = vpop.f32.mrb[0].mxu0
    %v1354 = vadd.f32 %v1274, %v1353
    %v1355 = vpop.f32.mrb[0].mxu0
    %1356 = vdwg.mxu0
    %v1357 = vmul.f32 %v1349, %v1349
    %v1358 = vmul.f32 %v1354, %v1354
    %v1359 = vmul.f32 %v1349, %v1357
    %v1360 = vmul.f32 %v1354, %v1358
    %v1361 = vmul.f32 %v1359, 0.044715
    %v1362 = vmul.f32 %v1360, 0.044715
    %v1363 = vadd.f32 %v1349, %v1361
    %v1364 = vadd.f32 %v1354, %v1362
    %v1365 = vmul.f32 %v1363, 0.7978846
    %v1366 = vmul.f32 %v1364, 0.7978846
    %v1367 = vtanh.pop %v1365
    %v1368 = vtanh.pop %v1366
    %v1369 = vadd.f32 %v1367, 1.0
    %v1370 = vadd.f32 %v1368, 1.0
    %v1371 = vmul.f32 %v1369, 0.5
    %v1372 = vmul.f32 %v1370, 0.5
    %v1373 = vmul.f32 %v1349, %v1371
    %v1374 = vmul.f32 %v1354, %v1372
    %v1375 = vld [vmem:[#allocation11] sm:$0xff]
    %v1376 = vld [vmem:[#allocation11 + $0x8] sm:$0xff]
    %v1377 = vld [vmem:[#allocation11 + $0x10] sm:$0xff]
    %v1378 = vld [vmem:[#allocation11 + $0x18] sm:$0xff]
    %v1379 = vld [vmem:[#allocation11 + $0x20] sm:$0xff]
    %v1380 = vld [vmem:[#allocation11 + $0x28] sm:$0xff]
    %v1381 = vld [vmem:[#allocation11 + $0x30] sm:$0xff]
    %v1382 = vld [vmem:[#allocation11 + $0x38] sm:$0xff]
    %v1383 = vld [vmem:[%s15] sm:$0x1]
    %v1385 = vlaneseq
    %v1386 = vshrl.u32 %v1385, 7
    %v1387 = vsub.s32 0, %v1386
    %v1388 = vrot.slane %v1383, %v1387
    %vm1390 = vcmask 523264
    %v1392 = vsel %vm1390, %v1373, 0
    %v1395 = vsel %vm1390, %v1374, 0
    %1397 = vmatprep.subr.mxu0 0.0
    %1398 = vmatpush1.msra.mxu0 %v1375
    %1399 = vmatprep.subr.mxu0 0.0
    %1400 = vmatpush1.msra.mxu0 %v1376
    %1401 = vmatprep.subr.mxu0 0.0
    %1402 = vmatpush1.msra.mxu0 %v1377
    %1403 = vmatprep.subr.mxu0 0.0
    %1404 = vmatpush1.msra.mxu0 %v1378
    %1405 = vmatprep.subr.mxu0 0.0
    %1406 = vmatpush1.msra.mxu0 %v1379
    %1407 = vmatprep.subr.mxu0 0.0
    %1408 = vmatpush1.msra.mxu0 %v1380
    %1409 = vmatprep.subr.mxu0 0.0
    %1410 = vmatpush1.msra.mxu0 %v1381
    %1411 = vmatprep.subr.mxu0 0.0
    %1412 = vmatpush1.msra.mxu0 %v1382
    %1413 = vmatprep.subr.mxu0 0.0
    %1414 = vmatpush1.msra.mxu0 0.0
    %1415 = vmatprep.subr.mxu0 0.0
    %1416 = vmatpush1.msra.mxu0 0.0
    %1417 = vmatprep.subr.mxu0 0.0
    %1418 = vmatpush1.msra.mxu0 0.0
    %1419 = vmatprep.subr.mxu0 0.0
    %1420 = vmatpush1.msra.mxu0 0.0
    %1421 = vmatprep.subr.mxu0 0.0
    %1422 = vmatpush1.msra.mxu0 0.0
    %1423 = vmatprep.subr.mxu0 0.0
    %1424 = vmatpush1.msra.mxu0 0.0
    %1425 = vmatprep.subr.mxu0 0.0
    %1426 = vmatpush1.msra.mxu0 0.0
    %1427 = vmatprep.subr.mxu0 0.0
    %1428 = vmatpush1.msra.mxu0 0.0
    %1429 = vmatprep.subr.mxu0 0.0
    %1430 = vmatpush1.msra.mxu0 0.0
    %1431 = vmatprep.subr.mxu0 0.0
    %1432 = vmatpush1.msra.mxu0 0.0
    %1433 = vmatprep.subr.mxu0 0.0
    %1434 = vmatpush1.msra.mxu0 0.0
    %1435 = vmatprep.subr.mxu0 0.0
    %1436 = vmatpush1.msra.mxu0 0.0
    %1437 = vmatprep.subr.mxu0 0.0
    %1438 = vmatpush1.msra.mxu0 0.0
    %1439 = vmatprep.subr.mxu0 0.0
    %1440 = vmatpush1.msra.mxu0 0.0
    %1441 = vmatprep.subr.mxu0 0.0
    %1442 = vmatpush1.msra.mxu0 0.0
    %1443 = vmatprep.subr.mxu0 0.0
    %1444 = vmatpush1.msra.mxu0 0.0
    %1445 = vmatprep.subr.mxu0 0.0
    %1446 = vmatpush1.msra.mxu0 0.0
    %1447 = vmatprep.subr.mxu0 0.0
    %1448 = vmatpush1.msra.mxu0 0.0
    %1449 = vmatprep.subr.mxu0 0.0
    %1450 = vmatpush1.msra.mxu0 0.0
    %1451 = vmatprep.subr.mxu0 0.0
    %1452 = vmatpush1.msra.mxu0 0.0
    %1453 = vmatprep.subr.mxu0 0.0
    %1454 = vmatpush1.msra.mxu0 0.0
    %1455 = vmatprep.subr.mxu0 0.0
    %1456 = vmatpush1.msra.mxu0 0.0
    %1457 = vmatprep.subr.mxu0 0.0
    %1458 = vmatpush1.msra.mxu0 0.0
    %1459 = vmatprep.subr.mxu0 0.0
    %1460 = vmatpush1.msra.mxu0 0.0
    %1461 = vmatprep.mubr.f32.mxu0 0.0
    %1462 = vmatmul.mubr.f32.gmra.mrb[0].mxu0 %v1392
    %v1463 = vpop.f32.mrb[0].mxu0
    %v1464 = vadd.f32 %v1388, %v1463
    %v1465 = vpop.f32.mrb[0].mxu0
    %1466 = vmatprep.mubr.f32.mxu0 0.0
    %1467 = vmatmul.mubr.f32.gmra.mrb[0].mxu0 %v1395
    %v1468 = vpop.f32.mrb[0].mxu0
    %v1469 = vadd.f32 %v1388, %v1468
    %v1470 = vpop.f32.mrb[0].mxu0
    %1471 = vdwg.mxu0
    %v1472 = vadd.f32 %v1263, %v1464
    %v1473 = vadd.f32 %v1264, %v1469
    %v1474 = vld [vmem:[%s18] sm:$0x1]
    %v1475 = vld [vmem:[%s19] sm:$0x1]
    %v1476 = vsel %vm305, %v1472, 0.0
    %1477 = vadd.xlane.f32.xlu0 %v1476
    %v1478 = vpop.xlane.xlu0 %1477
    %v1479 = vsel %vm305, %v1473, 0.0
    %1480 = vadd.xlane.f32.xlu0 %v1479
    %v1481 = vpop.xlane.xlu0 %1480
    %v1482 = vmul.f32 %v1478, %v312
    %v1483 = vmul.f32 %v1481, %v312
    %v1484 = vsub.f32 %v1472, %v1482
    %v1485 = vsub.f32 %v1473, %v1483
    %v1486 = vmul.f32 %v1484, %v1484
    %v1487 = vmul.f32 %v1485, %v1485
    %v1488 = vsel %vm305, %v1486, 0.0
    %1489 = vadd.xlane.f32.xlu0 %v1488
    %v1490 = vpop.xlane.xlu0 %1489
    %v1491 = vsel %vm305, %v1487, 0.0
    %1492 = vadd.xlane.f32.xlu0 %v1491
    %v1493 = vpop.xlane.xlu0 %1492
    %v1494 = vmul.f32 %v1490, %v312
    %v1495 = vmul.f32 %v1493, %v312
    %v1496 = vadd.f32 %v1494, 1e-12
    %v1497 = vadd.f32 %v1495, 1e-12
    %v1498 = vrsqrt.pop %v1496
    %v1499 = vrsqrt.pop %v1497
    %v1500 = vmul.f32 %v1484, %v1498
    %v1501 = vmul.f32 %v1485, %v1499
    %v1503 = vlaneseq
    %v1504 = vshrl.u32 %v1503, 7
    %v1505 = vsub.s32 0, %v1504
    %v1506 = vrot.slane %v1474, %v1505
    %v1508 = vmul.f32 %v1500, %v1506
    %v1509 = vmul.f32 %v1501, %v1506
    %v1511 = vlaneseq
    %v1512 = vshrl.u32 %v1511, 7
    %v1513 = vsub.s32 0, %v1512
    %v1514 = vrot.slane %v1475, %v1513
    %v1516 = vadd.f32 %v1508, %v1514
    %v1517 = vadd.f32 %v1509, %v1514
    %s1518 = scalar_lea.vmem [#allocation8], 32
    %v1519 = vld [vmem:[%s1518] sm:$0xff]
    %v1520 = vld [vmem:[%s1518 + $0x8] sm:$0xff]
    %v1521 = vld [vmem:[%s1518 + $0x10] sm:$0xff]
    %v1522 = vld [vmem:[%s1518 + $0x18] sm:$0xff]
    %s1523 = scalar_lea.vmem %s9, 1
    %v1524 = vld [vmem:[%s1523] sm:$0x1]
    %v1526 = vlaneseq
    %v1527 = vshrl.u32 %v1526, 7
    %v1528 = vsub.s32 0, %v1527
    %v1529 = vrot.slane %v1524, %v1528
    %v1532 = vsel %vm305, %v1516, 0
    %v1535 = vsel %vm305, %v1517, 0
    %1537 = vmatprep.subr.mxu0 0.0
    %1538 = vmatpush1.msra.mxu0 %v1519
    %1539 = vmatprep.subr.mxu0 0.0
    %1540 = vmatpush1.msra.mxu0 %v1520
    %1541 = vmatprep.subr.mxu0 0.0
    %1542 = vmatpush1.msra.mxu0 %v1521
    %1543 = vmatprep.subr.mxu0 0.0
    %1544 = vmatpush1.msra.mxu0 %v1522
    %1545 = vmatprep.subr.mxu0 0.0
    %1546 = vmatpush1.msra.mxu0 0.0
    %1547 = vmatprep.subr.mxu0 0.0
    %1548 = vmatpush1.msra.mxu0 0.0
    %1549 = vmatprep.subr.mxu0 0.0
    %1550 = vmatpush1.msra.mxu0 0.0
    %1551 = vmatprep.subr.mxu0 0.0
    %1552 = vmatpush1.msra.mxu0 0.0
    %1553 = vmatprep.subr.mxu0 0.0
    %1554 = vmatpush1.msra.mxu0 0.0
    %1555 = vmatprep.subr.mxu0 0.0
    %1556 = vmatpush1.msra.mxu0 0.0
    %1557 = vmatprep.subr.mxu0 0.0
    %1558 = vmatpush1.msra.mxu0 0.0
    %1559 = vmatprep.subr.mxu0 0.0
    %1560 = vmatpush1.msra.mxu0 0.0
    %1561 = vmatprep.subr.mxu0 0.0
    %1562 = vmatpush1.msra.mxu0 0.0
    %1563 = vmatprep.subr.mxu0 0.0
    %1564 = vmatpush1.msra.mxu0 0.0
    %1565 = vmatprep.subr.mxu0 0.0
    %1566 = vmatpush1.msra.mxu0 0.0
    %1567 = vmatprep.subr.mxu0 0.0
    %1568 = vmatpush1.msra.mxu0 0.0
    %1569 = vmatprep.subr.mxu0 0.0
    %1570 = vmatpush1.msra.mxu0 0.0
    %1571 = vmatprep.subr.mxu0 0.0
    %1572 = vmatpush1.msra.mxu0 0.0
    %1573 = vmatprep.subr.mxu0 0.0
    %1574 = vmatpush1.msra.mxu0 0.0
    %1575 = vmatprep.subr.mxu0 0.0
    %1576 = vmatpush1.msra.mxu0 0.0
    %1577 = vmatprep.subr.mxu0 0.0
    %1578 = vmatpush1.msra.mxu0 0.0
    %1579 = vmatprep.subr.mxu0 0.0
    %1580 = vmatpush1.msra.mxu0 0.0
    %1581 = vmatprep.subr.mxu0 0.0
    %1582 = vmatpush1.msra.mxu0 0.0
    %1583 = vmatprep.subr.mxu0 0.0
    %1584 = vmatpush1.msra.mxu0 0.0
    %1585 = vmatprep.subr.mxu0 0.0
    %1586 = vmatpush1.msra.mxu0 0.0
    %1587 = vmatprep.subr.mxu0 0.0
    %1588 = vmatpush1.msra.mxu0 0.0
    %1589 = vmatprep.subr.mxu0 0.0
    %1590 = vmatpush1.msra.mxu0 0.0
    %1591 = vmatprep.subr.mxu0 0.0
    %1592 = vmatpush1.msra.mxu0 0.0
    %1593 = vmatprep.subr.mxu0 0.0
    %1594 = vmatpush1.msra.mxu0 0.0
    %1595 = vmatprep.subr.mxu0 0.0
    %1596 = vmatpush1.msra.mxu0 0.0
    %1597 = vmatprep.subr.mxu0 0.0
    %1598 = vmatpush1.msra.mxu0 0.0
    %1599 = vmatprep.subr.mxu0 0.0
    %1600 = vmatpush1.msra.mxu0 0.0
    %1601 = vmatprep.mubr.f32.mxu0 0.0
    %1602 = vmatmul.mubr.f32.gmra.mrb[0].mxu0 %v1532
    %v1603 = vpop.f32.mrb[0].mxu0
    %v1604 = vadd.f32 %v1529, %v1603
    %v1605 = vpop.f32.mrb[0].mxu0
    %1606 = vmatprep.mubr.f32.mxu0 0.0
    %1607 = vmatmul.mubr.f32.gmra.mrb[0].mxu0 %v1535
    %v1608 = vpop.f32.mrb[0].mxu0
    %v1609 = vadd.f32 %v1529, %v1608
    %v1610 = vpop.f32.mrb[0].mxu0
    %1611 = vdwg.mxu0
    %1613 = vrot.lane.b32.xlu0 %v1604, 96
    %v1614 = vpop.permute.xlu0 %1613
    %v1615 = vsel %vm451, %v1604, 0
    %v1617 = vsel %vm451, %v1614, 0
    %1619 = vmatprep.subr.mxu0 0.0
    %1620 = vmatpush1.xpose.msra.mxu0 %v1617
    %1621 = vmatprep.subr.mxu0 0.0
    %1622 = vmatpush1.xpose.msra.mxu0 0.0
    %1623 = vmatprep.subr.mxu0 0.0
    %1624 = vmatpush1.xpose.msra.mxu0 0.0
    %1625 = vmatprep.subr.mxu0 0.0
    %1626 = vmatpush1.xpose.msra.mxu0 0.0
    %1627 = vmatprep.subr.mxu0 0.0
    %1628 = vmatpush1.xpose.msra.mxu0 0.0
    %1629 = vmatprep.subr.mxu0 0.0
    %1630 = vmatpush1.xpose.msra.mxu0 0.0
    %1631 = vmatprep.subr.mxu0 0.0
    %1632 = vmatpush1.xpose.msra.mxu0 0.0
    %1633 = vmatprep.subr.mxu0 0.0
    %1634 = vmatpush1.xpose.msra.mxu0 0.0
    %1635 = vmatprep.subr.mxu0 0.0
    %1636 = vmatpush1.xpose.msra.mxu0 0.0
    %1637 = vmatprep.subr.mxu0 0.0
    %1638 = vmatpush1.xpose.msra.mxu0 0.0
    %1639 = vmatprep.subr.mxu0 0.0
    %1640 = vmatpush1.xpose.msra.mxu0 0.0
    %1641 = vmatprep.subr.mxu0 0.0
    %1642 = vmatpush1.xpose.msra.mxu0 0.0
    %1643 = vmatprep.subr.mxu0 0.0
    %1644 = vmatpush1.xpose.msra.mxu0 0.0
    %1645 = vmatprep.subr.mxu0 0.0
    %1646 = vmatpush1.xpose.msra.mxu0 0.0
    %1647 = vmatprep.subr.mxu0 0.0
    %1648 = vmatpush1.xpose.msra.mxu0 0.0
    %1649 = vmatprep.subr.mxu0 0.0
    %1650 = vmatpush1.xpose.msra.mxu0 0.0
    %1651 = vmatprep.subr.mxu0 0.0
    %1652 = vmatpush1.xpose.msra.mxu0 0.0
    %1653 = vmatprep.subr.mxu0 0.0
    %1654 = vmatpush1.xpose.msra.mxu0 0.0
    %1655 = vmatprep.subr.mxu0 0.0
    %1656 = vmatpush1.xpose.msra.mxu0 0.0
    %1657 = vmatprep.subr.mxu0 0.0
    %1658 = vmatpush1.xpose.msra.mxu0 0.0
    %1659 = vmatprep.subr.mxu0 0.0
    %1660 = vmatpush1.xpose.msra.mxu0 0.0
    %1661 = vmatprep.subr.mxu0 0.0
    %1662 = vmatpush1.xpose.msra.mxu0 0.0
    %1663 = vmatprep.subr.mxu0 0.0
    %1664 = vmatpush1.xpose.msra.mxu0 0.0
    %1665 = vmatprep.subr.mxu0 0.0
    %1666 = vmatpush1.xpose.msra.mxu0 0.0
    %1667 = vmatprep.subr.mxu0 0.0
    %1668 = vmatpush1.xpose.msra.mxu0 0.0
    %1669 = vmatprep.subr.mxu0 0.0
    %1670 = vmatpush1.xpose.msra.mxu0 0.0
    %1671 = vmatprep.subr.mxu0 0.0
    %1672 = vmatpush1.xpose.msra.mxu0 0.0
    %1673 = vmatprep.subr.mxu0 0.0
    %1674 = vmatpush1.xpose.msra.mxu0 0.0
    %1675 = vmatprep.subr.mxu0 0.0
    %1676 = vmatpush1.xpose.msra.mxu0 0.0
    %1677 = vmatprep.subr.mxu0 0.0
    %1678 = vmatpush1.xpose.msra.mxu0 0.0
    %1679 = vmatprep.subr.mxu0 0.0
    %1680 = vmatpush1.xpose.msra.mxu0 0.0
    %1681 = vmatprep.subr.mxu0 0.0
    %1682 = vmatpush1.xpose.msra.mxu0 0.0
    %1683 = vmatprep.mubr.f32.mxu0 0.0
    %1684 = vmatmul.mubr.f32.gmra.mrb[0].mxu0 %v1615
    %v1685 = vpop.f32.mrb[0].mxu0
    %v1686 = vadd.f32 %v447, %v1685
    %v1687 = vpop.f32.mrb[0].mxu0
    %1688 = vdwg.mxu0
    %v1689 = vsel %vm526, %v1686, -inf
    %1690 = vmax.xlane.f32.xlu0 %v1689
    %v1691 = vpop.xlane.xlu0 %1690
    %v1692 = vsub.f32 %v1686, %v1691
    %v1693 = vmul.f32 %v1692, 1.442695
    %v1694 = vpow.pop %v1693
    %v1695 = vsel %vm526, %v1694, 0.0
    %1696 = vadd.xlane.f32.xlu0 %v1695
    %v1697 = vpop.xlane.xlu0 %1696
    %v1698 = vrcp.pop %v1697
    %v1699 = vmul.f32 %v1694, %v1698
    %1700 = vrot.lane.b32.xlu0 %v1604, 64
    %v1701 = vpop.permute.xlu0 %1700
    %v1704 = vsel %vm526, %v1699, 0
    %1706 = vmatprep.subr.mxu0 0.0
    %1707 = vmatpush1.msra.mxu0 %v1701
    %1708 = vmatprep.subr.mxu0 0.0
    %1709 = vmatpush1.msra.mxu0 0.0
    %1710 = vmatprep.subr.mxu0 0.0
    %1711 = vmatpush1.msra.mxu0 0.0
    %1712 = vmatprep.subr.mxu0 0.0
    %1713 = vmatpush1.msra.mxu0 0.0
    %1714 = vmatprep.subr.mxu0 0.0
    %1715 = vmatpush1.msra.mxu0 0.0
    %1716 = vmatprep.subr.mxu0 0.0
    %1717 = vmatpush1.msra.mxu0 0.0
    %1718 = vmatprep.subr.mxu0 0.0
    %1719 = vmatpush1.msra.mxu0 0.0
    %1720 = vmatprep.subr.mxu0 0.0
    %1721 = vmatpush1.msra.mxu0 0.0
    %1722 = vmatprep.subr.mxu0 0.0
    %1723 = vmatpush1.msra.mxu0 0.0
    %1724 = vmatprep.subr.mxu0 0.0
    %1725 = vmatpush1.msra.mxu0 0.0
    %1726 = vmatprep.subr.mxu0 0.0
    %1727 = vmatpush1.msra.mxu0 0.0
    %1728 = vmatprep.subr.mxu0 0.0
    %1729 = vmatpush1.msra.mxu0 0.0
    %1730 = vmatprep.subr.mxu0 0.0
    %1731 = vmatpush1.msra.mxu0 0.0
    %1732 = vmatprep.subr.mxu0 0.0
    %1733 = vmatpush1.msra.mxu0 0.0
    %1734 = vmatprep.subr.mxu0 0.0
    %1735 = vmatpush1.msra.mxu0 0.0
    %1736 = vmatprep.subr.mxu0 0.0
    %1737 = vmatpush1.msra.mxu0 0.0
    %1738 = vmatprep.subr.mxu0 0.0
    %1739 = vmatpush1.msra.mxu0 0.0
    %1740 = vmatprep.subr.mxu0 0.0
    %1741 = vmatpush1.msra.mxu0 0.0
    %1742 = vmatprep.subr.mxu0 0.0
    %1743 = vmatpush1.msra.mxu0 0.0
    %1744 = vmatprep.subr.mxu0 0.0
    %1745 = vmatpush1.msra.mxu0 0.0
    %1746 = vmatprep.subr.mxu0 0.0
    %1747 = vmatpush1.msra.mxu0 0.0
    %1748 = vmatprep.subr.mxu0 0.0
    %1749 = vmatpush1.msra.mxu0 0.0
    %1750 = vmatprep.subr.mxu0 0.0
    %1751 = vmatpush1.msra.mxu0 0.0
    %1752 = vmatprep.subr.mxu0 0.0
    %1753 = vmatpush1.msra.mxu0 0.0
    %1754 = vmatprep.subr.mxu0 0.0
    %1755 = vmatpush1.msra.mxu0 0.0
    %1756 = vmatprep.subr.mxu0 0.0
    %1757 = vmatpush1.msra.mxu0 0.0
    %1758 = vmatprep.subr.mxu0 0.0
    %1759 = vmatpush1.msra.mxu0 0.0
    %1760 = vmatprep.subr.mxu0 0.0
    %1761 = vmatpush1.msra.mxu0 0.0
    %1762 = vmatprep.subr.mxu0 0.0
    %1763 = vmatpush1.msra.mxu0 0.0
    %1764 = vmatprep.subr.mxu0 0.0
    %1765 = vmatpush1.msra.mxu0 0.0
    %1766 = vmatprep.subr.mxu0 0.0
    %1767 = vmatpush1.msra.mxu0 0.0
    %1768 = vmatprep.subr.mxu0 0.0
    %1769 = vmatpush1.msra.mxu0 0.0
    %1770 = vmatprep.mubr.f32.mxu0 0.0
    %1771 = vmatmul.mubr.f32.gmra.mrb[0].mxu0 %v1704
    %v1772 = vpop.f32.mrb[0].mxu0
    %v1773 = vadd.f32 0.0, %v1772
    %v1774 = vpop.f32.mrb[0].mxu0
    %1775 = vdwg.mxu0
    %1776 = vst.msk [vmem:[#allocation2] sm:$0xff] %vm451, %v1773
    %1777 = vrot.lane.b32.xlu0 %v1604, 112
    %v1778 = vpop.permute.xlu0 %1777
    %1779 = vrot.lane.b32.xlu0 %v1604, 80
    %v1780 = vpop.permute.xlu0 %1779
    %v1781 = vsel %vm451, %v1778, 0
    %v1783 = vsel %vm451, %v1780, 0
    %1785 = vmatprep.subr.mxu0 0.0
    %1786 = vmatpush1.xpose.msra.mxu0 %v1783
    %1787 = vmatprep.subr.mxu0 0.0
    %1788 = vmatpush1.xpose.msra.mxu0 0.0
    %1789 = vmatprep.subr.mxu0 0.0
    %1790 = vmatpush1.xpose.msra.mxu0 0.0
    %1791 = vmatprep.subr.mxu0 0.0
    %1792 = vmatpush1.xpose.msra.mxu0 0.0
    %1793 = vmatprep.subr.mxu0 0.0
    %1794 = vmatpush1.xpose.msra.mxu0 0.0
    %1795 = vmatprep.subr.mxu0 0.0
    %1796 = vmatpush1.xpose.msra.mxu0 0.0
    %1797 = vmatprep.subr.mxu0 0.0
    %1798 = vmatpush1.xpose.msra.mxu0 0.0
    %1799 = vmatprep.subr.mxu0 0.0
    %1800 = vmatpush1.xpose.msra.mxu0 0.0
    %1801 = vmatprep.subr.mxu0 0.0
    %1802 = vmatpush1.xpose.msra.mxu0 0.0
    %1803 = vmatprep.subr.mxu0 0.0
    %1804 = vmatpush1.xpose.msra.mxu0 0.0
    %1805 = vmatprep.subr.mxu0 0.0
    %1806 = vmatpush1.xpose.msra.mxu0 0.0
    %1807 = vmatprep.subr.mxu0 0.0
    %1808 = vmatpush1.xpose.msra.mxu0 0.0
    %1809 = vmatprep.subr.mxu0 0.0
    %1810 = vmatpush1.xpose.msra.mxu0 0.0
    %1811 = vmatprep.subr.mxu0 0.0
    %1812 = vmatpush1.xpose.msra.mxu0 0.0
    %1813 = vmatprep.subr.mxu0 0.0
    %1814 = vmatpush1.xpose.msra.mxu0 0.0
    %1815 = vmatprep.subr.mxu0 0.0
    %1816 = vmatpush1.xpose.msra.mxu0 0.0
    %1817 = vmatprep.subr.mxu0 0.0
    %1818 = vmatpush1.xpose.msra.mxu0 0.0
    %1819 = vmatprep.subr.mxu0 0.0
    %1820 = vmatpush1.xpose.msra.mxu0 0.0
    %1821 = vmatprep.subr.mxu0 0.0
    %1822 = vmatpush1.xpose.msra.mxu0 0.0
    %1823 = vmatprep.subr.mxu0 0.0
    %1824 = vmatpush1.xpose.msra.mxu0 0.0
    %1825 = vmatprep.subr.mxu0 0.0
    %1826 = vmatpush1.xpose.msra.mxu0 0.0
    %1827 = vmatprep.subr.mxu0 0.0
    %1828 = vmatpush1.xpose.msra.mxu0 0.0
    %1829 = vmatprep.subr.mxu0 0.0
    %1830 = vmatpush1.xpose.msra.mxu0 0.0
    %1831 = vmatprep.subr.mxu0 0.0
    %1832 = vmatpush1.xpose.msra.mxu0 0.0
    %1833 = vmatprep.subr.mxu0 0.0
    %1834 = vmatpush1.xpose.msra.mxu0 0.0
    %1835 = vmatprep.subr.mxu0 0.0
    %1836 = vmatpush1.xpose.msra.mxu0 0.0
    %1837 = vmatprep.subr.mxu0 0.0
    %1838 = vmatpush1.xpose.msra.mxu0 0.0
    %1839 = vmatprep.subr.mxu0 0.0
    %1840 = vmatpush1.xpose.msra.mxu0 0.0
    %1841 = vmatprep.subr.mxu0 0.0
    %1842 = vmatpush1.xpose.msra.mxu0 0.0
    %1843 = vmatprep.subr.mxu0 0.0
    %1844 = vmatpush1.xpose.msra.mxu0 0.0
    %1845 = vmatprep.subr.mxu0 0.0
    %1846 = vmatpush1.xpose.msra.mxu0 0.0
    %1847 = vmatprep.subr.mxu0 0.0
    %1848 = vmatpush1.xpose.msra.mxu0 0.0
    %1849 = vmatprep.mubr.f32.mxu0 0.0
    %1850 = vmatmul.mubr.f32.gmra.mrb[0].mxu0 %v1781
    %v1851 = vpop.f32.mrb[0].mxu0
    %v1852 = vadd.f32 %v447, %v1851
    %v1853 = vpop.f32.mrb[0].mxu0
    %1854 = vdwg.mxu0
    %v1855 = vsel %vm526, %v1852, -inf
    %1856 = vmax.xlane.f32.xlu0 %v1855
    %v1857 = vpop.xlane.xlu0 %1856
    %v1858 = vsub.f32 %v1852, %v1857
    %v1859 = vmul.f32 %v1858, 1.442695
    %v1860 = vpow.pop %v1859
    %v1861 = vsel %vm526, %v1860, 0.0
    %1862 = vadd.xlane.f32.xlu0 %v1861
    %v1863 = vpop.xlane.xlu0 %1862
    %v1864 = vrcp.pop %v1863
    %v1865 = vmul.f32 %v1860, %v1864
    %1866 = vrot.lane.b32.xlu0 %v1604, 48
    %v1867 = vpop.permute.xlu0 %1866
    %v1870 = vsel %vm526, %v1865, 0
    %1872 = vmatprep.subr.mxu0 0.0
    %1873 = vmatpush1.msra.mxu0 %v1867
    %1874 = vmatprep.subr.mxu0 0.0
    %1875 = vmatpush1.msra.mxu0 0.0
    %1876 = vmatprep.subr.mxu0 0.0
    %1877 = vmatpush1.msra.mxu0 0.0
    %1878 = vmatprep.subr.mxu0 0.0
    %1879 = vmatpush1.msra.mxu0 0.0
    %1880 = vmatprep.subr.mxu0 0.0
    %1881 = vmatpush1.msra.mxu0 0.0
    %1882 = vmatprep.subr.mxu0 0.0
    %1883 = vmatpush1.msra.mxu0 0.0
    %1884 = vmatprep.subr.mxu0 0.0
    %1885 = vmatpush1.msra.mxu0 0.0
    %1886 = vmatprep.subr.mxu0 0.0
    %1887 = vmatpush1.msra.mxu0 0.0
    %1888 = vmatprep.subr.mxu0 0.0
    %1889 = vmatpush1.msra.mxu0 0.0
    %1890 = vmatprep.subr.mxu0 0.0
    %1891 = vmatpush1.msra.mxu0 0.0
    %1892 = vmatprep.subr.mxu0 0.0
    %1893 = vmatpush1.msra.mxu0 0.0
    %1894 = vmatprep.subr.mxu0 0.0
    %1895 = vmatpush1.msra.mxu0 0.0
    %1896 = vmatprep.subr.mxu0 0.0
    %1897 = vmatpush1.msra.mxu0 0.0
    %1898 = vmatprep.subr.mxu0 0.0
    %1899 = vmatpush1.msra.mxu0 0.0
    %1900 = vmatprep.subr.mxu0 0.0
    %1901 = vmatpush1.msra.mxu0 0.0
    %1902 = vmatprep.subr.mxu0 0.0
    %1903 = vmatpush1.msra.mxu0 0.0
    %1904 = vmatprep.subr.mxu0 0.0
    %1905 = vmatpush1.msra.mxu0 0.0
    %1906 = vmatprep.subr.mxu0 0.0
    %1907 = vmatpush1.msra.mxu0 0.0
    %1908 = vmatprep.subr.mxu0 0.0
    %1909 = vmatpush1.msra.mxu0 0.0
    %1910 = vmatprep.subr.mxu0 0.0
    %1911 = vmatpush1.msra.mxu0 0.0
    %1912 = vmatprep.subr.mxu0 0.0
    %1913 = vmatpush1.msra.mxu0 0.0
    %1914 = vmatprep.subr.mxu0 0.0
    %1915 = vmatpush1.msra.mxu0 0.0
    %1916 = vmatprep.subr.mxu0 0.0
    %1917 = vmatpush1.msra.mxu0 0.0
    %1918 = vmatprep.subr.mxu0 0.0
    %1919 = vmatpush1.msra.mxu0 0.0
    %1920 = vmatprep.subr.mxu0 0.0
    %1921 = vmatpush1.msra.mxu0 0.0
    %1922 = vmatprep.subr.mxu0 0.0
    %1923 = vmatpush1.msra.mxu0 0.0
    %1924 = vmatprep.subr.mxu0 0.0
    %1925 = vmatpush1.msra.mxu0 0.0
    %1926 = vmatprep.subr.mxu0 0.0
    %1927 = vmatpush1.msra.mxu0 0.0
    %1928 = vmatprep.subr.mxu0 0.0
    %1929 = vmatpush1.msra.mxu0 0.0
    %1930 = vmatprep.subr.mxu0 0.0
    %1931 = vmatpush1.msra.mxu0 0.0
    %1932 = vmatprep.subr.mxu0 0.0
    %1933 = vmatpush1.msra.mxu0 0.0
    %1934 = vmatprep.subr.mxu0 0.0
    %1935 = vmatpush1.msra.mxu0 0.0
    %1936 = vmatprep.mubr.f32.mxu0 0.0
    %1937 = vmatmul.mubr.f32.gmra.mrb[0].mxu0 %v1870
    %v1938 = vpop.f32.mrb[0].mxu0
    %v1939 = vadd.f32 0.0, %v1938
    %v1940 = vpop.f32.mrb[0].mxu0
    %1941 = vdwg.mxu0
    %1943 = vrot.lane.b32.xlu0 %v1939, 16
    %v1944 = vpop.permute.xlu0 %1943
    %1946 = vst.msk [vmem:[#allocation2] sm:$0xff] %vm784, %v1944
    %1948 = vrot.lane.b32.xlu0 %v1609, 96
    %v1949 = vpop.permute.xlu0 %1948
    %v1950 = vsel %vm451, %v1609, 0
    %v1952 = vsel %vm451, %v1949, 0
    %1954 = vmatprep.subr.mxu0 0.0
    %1955 = vmatpush1.xpose.msra.mxu0 %v1952
    %1956 = vmatprep.subr.mxu0 0.0
    %1957 = vmatpush1.xpose.msra.mxu0 0.0
    %1958 = vmatprep.subr.mxu0 0.0
    %1959 = vmatpush1.xpose.msra.mxu0 0.0
    %1960 = vmatprep.subr.mxu0 0.0
    %1961 = vmatpush1.xpose.msra.mxu0 0.0
    %1962 = vmatprep.subr.mxu0 0.0
    %1963 = vmatpush1.xpose.msra.mxu0 0.0
    %1964 = vmatprep.subr.mxu0 0.0
    %1965 = vmatpush1.xpose.msra.mxu0 0.0
    %1966 = vmatprep.subr.mxu0 0.0
    %1967 = vmatpush1.xpose.msra.mxu0 0.0
    %1968 = vmatprep.subr.mxu0 0.0
    %1969 = vmatpush1.xpose.msra.mxu0 0.0
    %1970 = vmatprep.subr.mxu0 0.0
    %1971 = vmatpush1.xpose.msra.mxu0 0.0
    %1972 = vmatprep.subr.mxu0 0.0
    %1973 = vmatpush1.xpose.msra.mxu0 0.0
    %1974 = vmatprep.subr.mxu0 0.0
    %1975 = vmatpush1.xpose.msra.mxu0 0.0
    %1976 = vmatprep.subr.mxu0 0.0
    %1977 = vmatpush1.xpose.msra.mxu0 0.0
    %1978 = vmatprep.subr.mxu0 0.0
    %1979 = vmatpush1.xpose.msra.mxu0 0.0
    %1980 = vmatprep.subr.mxu0 0.0
    %1981 = vmatpush1.xpose.msra.mxu0 0.0
    %1982 = vmatprep.subr.mxu0 0.0
    %1983 = vmatpush1.xpose.msra.mxu0 0.0
    %1984 = vmatprep.subr.mxu0 0.0
    %1985 = vmatpush1.xpose.msra.mxu0 0.0
    %1986 = vmatprep.subr.mxu0 0.0
    %1987 = vmatpush1.xpose.msra.mxu0 0.0
    %1988 = vmatprep.subr.mxu0 0.0
    %1989 = vmatpush1.xpose.msra.mxu0 0.0
    %1990 = vmatprep.subr.mxu0 0.0
    %1991 = vmatpush1.xpose.msra.mxu0 0.0
    %1992 = vmatprep.subr.mxu0 0.0
    %1993 = vmatpush1.xpose.msra.mxu0 0.0
    %1994 = vmatprep.subr.mxu0 0.0
    %1995 = vmatpush1.xpose.msra.mxu0 0.0
    %1996 = vmatprep.subr.mxu0 0.0
    %1997 = vmatpush1.xpose.msra.mxu0 0.0
    %1998 = vmatprep.subr.mxu0 0.0
    %1999 = vmatpush1.xpose.msra.mxu0 0.0
    %2000 = vmatprep.subr.mxu0 0.0
    %2001 = vmatpush1.xpose.msra.mxu0 0.0
    %2002 = vmatprep.subr.mxu0 0.0
    %2003 = vmatpush1.xpose.msra.mxu0 0.0
    %2004 = vmatprep.subr.mxu0 0.0
    %2005 = vmatpush1.xpose.msra.mxu0 0.0
    %2006 = vmatprep.subr.mxu0 0.0
    %2007 = vmatpush1.xpose.msra.mxu0 0.0
    %2008 = vmatprep.subr.mxu0 0.0
    %2009 = vmatpush1.xpose.msra.mxu0 0.0
    %2010 = vmatprep.subr.mxu0 0.0
    %2011 = vmatpush1.xpose.msra.mxu0 0.0
    %2012 = vmatprep.subr.mxu0 0.0
    %2013 = vmatpush1.xpose.msra.mxu0 0.0
    %2014 = vmatprep.subr.mxu0 0.0
    %2015 = vmatpush1.xpose.msra.mxu0 0.0
    %2016 = vmatprep.subr.mxu0 0.0
    %2017 = vmatpush1.xpose.msra.mxu0 0.0
    %2018 = vmatprep.mubr.f32.mxu0 0.0
    %2019 = vmatmul.mubr.f32.gmra.mrb[0].mxu0 %v1950
    %v2020 = vpop.f32.mrb[0].mxu0
    %v2021 = vadd.f32 %v789, %v2020
    %v2022 = vpop.f32.mrb[0].mxu0
    %2023 = vdwg.mxu0
    %v2024 = vsel %vm526, %v2021, -inf
    %2025 = vmax.xlane.f32.xlu0 %v2024
    %v2026 = vpop.xlane.xlu0 %2025
    %v2027 = vsub.f32 %v2021, %v2026
    %v2028 = vmul.f32 %v2027, 1.442695
    %v2029 = vpow.pop %v2028
    %v2030 = vsel %vm526, %v2029, 0.0
    %2031 = vadd.xlane.f32.xlu0 %v2030
    %v2032 = vpop.xlane.xlu0 %2031
    %v2033 = vrcp.pop %v2032
    %v2034 = vmul.f32 %v2029, %v2033
    %2035 = vrot.lane.b32.xlu0 %v1609, 64
    %v2036 = vpop.permute.xlu0 %2035
    %v2039 = vsel %vm526, %v2034, 0
    %2041 = vmatprep.subr.mxu0 0.0
    %2042 = vmatpush1.msra.mxu0 %v2036
    %2043 = vmatprep.subr.mxu0 0.0
    %2044 = vmatpush1.msra.mxu0 0.0
    %2045 = vmatprep.subr.mxu0 0.0
    %2046 = vmatpush1.msra.mxu0 0.0
    %2047 = vmatprep.subr.mxu0 0.0
    %2048 = vmatpush1.msra.mxu0 0.0
    %2049 = vmatprep.subr.mxu0 0.0
    %2050 = vmatpush1.msra.mxu0 0.0
    %2051 = vmatprep.subr.mxu0 0.0
    %2052 = vmatpush1.msra.mxu0 0.0
    %2053 = vmatprep.subr.mxu0 0.0
    %2054 = vmatpush1.msra.mxu0 0.0
    %2055 = vmatprep.subr.mxu0 0.0
    %2056 = vmatpush1.msra.mxu0 0.0
    %2057 = vmatprep.subr.mxu0 0.0
    %2058 = vmatpush1.msra.mxu0 0.0
    %2059 = vmatprep.subr.mxu0 0.0
    %2060 = vmatpush1.msra.mxu0 0.0
    %2061 = vmatprep.subr.mxu0 0.0
    %2062 = vmatpush1.msra.mxu0 0.0
    %2063 = vmatprep.subr.mxu0 0.0
    %2064 = vmatpush1.msra.mxu0 0.0
    %2065 = vmatprep.subr.mxu0 0.0
    %2066 = vmatpush1.msra.mxu0 0.0
    %2067 = vmatprep.subr.mxu0 0.0
    %2068 = vmatpush1.msra.mxu0 0.0
    %2069 = vmatprep.subr.mxu0 0.0
    %2070 = vmatpush1.msra.mxu0 0.0
    %2071 = vmatprep.subr.mxu0 0.0
    %2072 = vmatpush1.msra.mxu0 0.0
    %2073 = vmatprep.subr.mxu0 0.0
    %2074 = vmatpush1.msra.mxu0 0.0
    %2075 = vmatprep.subr.mxu0 0.0
    %2076 = vmatpush1.msra.mxu0 0.0
    %2077 = vmatprep.subr.mxu0 0.0
    %2078 = vmatpush1.msra.mxu0 0.0
    %2079 = vmatprep.subr.mxu0 0.0
    %2080 = vmatpush1.msra.mxu0 0.0
    %2081 = vmatprep.subr.mxu0 0.0
    %2082 = vmatpush1.msra.mxu0 0.0
    %2083 = vmatprep.subr.mxu0 0.0
    %2084 = vmatpush1.msra.mxu0 0.0
    %2085 = vmatprep.subr.mxu0 0.0
    %2086 = vmatpush1.msra.mxu0 0.0
    %2087 = vmatprep.subr.mxu0 0.0
    %2088 = vmatpush1.msra.mxu0 0.0
    %2089 = vmatprep.subr.mxu0 0.0
    %2090 = vmatpush1.msra.mxu0 0.0
    %2091 = vmatprep.subr.mxu0 0.0
    %2092 = vmatpush1.msra.mxu0 0.0
    %2093 = vmatprep.subr.mxu0 0.0
    %2094 = vmatpush1.msra.mxu0 0.0
    %2095 = vmatprep.subr.mxu0 0.0
    %2096 = vmatpush1.msra.mxu0 0.0
    %2097 = vmatprep.subr.mxu0 0.0
    %2098 = vmatpush1.msra.mxu0 0.0
    %2099 = vmatprep.subr.mxu0 0.0
    %2100 = vmatpush1.msra.mxu0 0.0
    %2101 = vmatprep.subr.mxu0 0.0
    %2102 = vmatpush1.msra.mxu0 0.0
    %2103 = vmatprep.subr.mxu0 0.0
    %2104 = vmatpush1.msra.mxu0 0.0
    %2105 = vmatprep.mubr.f32.mxu0 0.0
    %2106 = vmatmul.mubr.f32.gmra.mrb[0].mxu0 %v2039
    %v2107 = vpop.f32.mrb[0].mxu0
    %v2108 = vadd.f32 0.0, %v2107
    %v2109 = vpop.f32.mrb[0].mxu0
    %2110 = vdwg.mxu0
    %2111 = vst.msk [vmem:[#allocation2 + $0x8] sm:$0xff] %vm451, %v2108
    %2112 = vrot.lane.b32.xlu0 %v1609, 112
    %v2113 = vpop.permute.xlu0 %2112
    %2114 = vrot.lane.b32.xlu0 %v1609, 80
    %v2115 = vpop.permute.xlu0 %2114
    %v2116 = vsel %vm451, %v2113, 0
    %v2118 = vsel %vm451, %v2115, 0
    %2120 = vmatprep.subr.mxu0 0.0
    %2121 = vmatpush1.xpose.msra.mxu0 %v2118
    %2122 = vmatprep.subr.mxu0 0.0
    %2123 = vmatpush1.xpose.msra.mxu0 0.0
    %2124 = vmatprep.subr.mxu0 0.0
    %2125 = vmatpush1.xpose.msra.mxu0 0.0
    %2126 = vmatprep.subr.mxu0 0.0
    %2127 = vmatpush1.xpose.msra.mxu0 0.0
    %2128 = vmatprep.subr.mxu0 0.0
    %2129 = vmatpush1.xpose.msra.mxu0 0.0
    %2130 = vmatprep.subr.mxu0 0.0
    %2131 = vmatpush1.xpose.msra.mxu0 0.0
    %2132 = vmatprep.subr.mxu0 0.0
    %2133 = vmatpush1.xpose.msra.mxu0 0.0
    %2134 = vmatprep.subr.mxu0 0.0
    %2135 = vmatpush1.xpose.msra.mxu0 0.0
    %2136 = vmatprep.subr.mxu0 0.0
    %2137 = vmatpush1.xpose.msra.mxu0 0.0
    %2138 = vmatprep.subr.mxu0 0.0
    %2139 = vmatpush1.xpose.msra.mxu0 0.0
    %2140 = vmatprep.subr.mxu0 0.0
    %2141 = vmatpush1.xpose.msra.mxu0 0.0
    %2142 = vmatprep.subr.mxu0 0.0
    %2143 = vmatpush1.xpose.msra.mxu0 0.0
    %2144 = vmatprep.subr.mxu0 0.0
    %2145 = vmatpush1.xpose.msra.mxu0 0.0
    %2146 = vmatprep.subr.mxu0 0.0
    %2147 = vmatpush1.xpose.msra.mxu0 0.0
    %2148 = vmatprep.subr.mxu0 0.0
    %2149 = vmatpush1.xpose.msra.mxu0 0.0
    %2150 = vmatprep.subr.mxu0 0.0
    %2151 = vmatpush1.xpose.msra.mxu0 0.0
    %2152 = vmatprep.subr.mxu0 0.0
    %2153 = vmatpush1.xpose.msra.mxu0 0.0
    %2154 = vmatprep.subr.mxu0 0.0
    %2155 = vmatpush1.xpose.msra.mxu0 0.0
    %2156 = vmatprep.subr.mxu0 0.0
    %2157 = vmatpush1.xpose.msra.mxu0 0.0
    %2158 = vmatprep.subr.mxu0 0.0
    %2159 = vmatpush1.xpose.msra.mxu0 0.0
    %2160 = vmatprep.subr.mxu0 0.0
    %2161 = vmatpush1.xpose.msra.mxu0 0.0
    %2162 = vmatprep.subr.mxu0 0.0
    %2163 = vmatpush1.xpose.msra.mxu0 0.0
    %2164 = vmatprep.subr.mxu0 0.0
    %2165 = vmatpush1.xpose.msra.mxu0 0.0
    %2166 = vmatprep.subr.mxu0 0.0
    %2167 = vmatpush1.xpose.msra.mxu0 0.0
    %2168 = vmatprep.subr.mxu0 0.0
    %2169 = vmatpush1.xpose.msra.mxu0 0.0
    %2170 = vmatprep.subr.mxu0 0.0
    %2171 = vmatpush1.xpose.msra.mxu0 0.0
    %2172 = vmatprep.subr.mxu0 0.0
    %2173 = vmatpush1.xpose.msra.mxu0 0.0
    %2174 = vmatprep.subr.mxu0 0.0
    %2175 = vmatpush1.xpose.msra.mxu0 0.0
    %2176 = vmatprep.subr.mxu0 0.0
    %2177 = vmatpush1.xpose.msra.mxu0 0.0
    %2178 = vmatprep.subr.mxu0 0.0
    %2179 = vmatpush1.xpose.msra.mxu0 0.0
    %2180 = vmatprep.subr.mxu0 0.0
    %2181 = vmatpush1.xpose.msra.mxu0 0.0
    %2182 = vmatprep.subr.mxu0 0.0
    %2183 = vmatpush1.xpose.msra.mxu0 0.0
    %2184 = vmatprep.mubr.f32.mxu0 0.0
    %2185 = vmatmul.mubr.f32.gmra.mrb[0].mxu0 %v2116
    %v2186 = vpop.f32.mrb[0].mxu0
    %v2187 = vadd.f32 %v789, %v2186
    %v2188 = vpop.f32.mrb[0].mxu0
    %2189 = vdwg.mxu0
    %v2190 = vsel %vm526, %v2187, -inf
    %2191 = vmax.xlane.f32.xlu0 %v2190
    %v2192 = vpop.xlane.xlu0 %2191
    %v2193 = vsub.f32 %v2187, %v2192
    %v2194 = vmul.f32 %v2193, 1.442695
    %v2195 = vpow.pop %v2194
    %v2196 = vsel %vm526, %v2195, 0.0
    %2197 = vadd.xlane.f32.xlu0 %v2196
    %v2198 = vpop.xlane.xlu0 %2197
    %v2199 = vrcp.pop %v2198
    %v2200 = vmul.f32 %v2195, %v2199
    %2201 = vrot.lane.b32.xlu0 %v1609, 48
    %v2202 = vpop.permute.xlu0 %2201
    %v2205 = vsel %vm526, %v2200, 0
    %2207 = vmatprep.subr.mxu0 0.0
    %2208 = vmatpush1.msra.mxu0 %v2202
    %2209 = vmatprep.subr.mxu0 0.0
    %2210 = vmatpush1.msra.mxu0 0.0
    %2211 = vmatprep.subr.mxu0 0.0
    %2212 = vmatpush1.msra.mxu0 0.0
    %2213 = vmatprep.subr.mxu0 0.0
    %2214 = vmatpush1.msra.mxu0 0.0
    %2215 = vmatprep.subr.mxu0 0.0
    %2216 = vmatpush1.msra.mxu0 0.0
    %2217 = vmatprep.subr.mxu0 0.0
    %2218 = vmatpush1.msra.mxu0 0.0
    %2219 = vmatprep.subr.mxu0 0.0
    %2220 = vmatpush1.msra.mxu0 0.0
    %2221 = vmatprep.subr.mxu0 0.0
    %2222 = vmatpush1.msra.mxu0 0.0
    %2223 = vmatprep.subr.mxu0 0.0
    %2224 = vmatpush1.msra.mxu0 0.0
    %2225 = vmatprep.subr.mxu0 0.0
    %2226 = vmatpush1.msra.mxu0 0.0
    %2227 = vmatprep.subr.mxu0 0.0
    %2228 = vmatpush1.msra.mxu0 0.0
    %2229 = vmatprep.subr.mxu0 0.0
    %2230 = vmatpush1.msra.mxu0 0.0
    %2231 = vmatprep.subr.mxu0 0.0
    %2232 = vmatpush1.msra.mxu0 0.0
    %2233 = vmatprep.subr.mxu0 0.0
    %2234 = vmatpush1.msra.mxu0 0.0
    %2235 = vmatprep.subr.mxu0 0.0
    %2236 = vmatpush1.msra.mxu0 0.0
    %2237 = vmatprep.subr.mxu0 0.0
    %2238 = vmatpush1.msra.mxu0 0.0
    %2239 = vmatprep.subr.mxu0 0.0
    %2240 = vmatpush1.msra.mxu0 0.0
    %2241 = vmatprep.subr.mxu0 0.0
    %2242 = vmatpush1.msra.mxu0 0.0
    %2243 = vmatprep.subr.mxu0 0.0
    %2244 = vmatpush1.msra.mxu0 0.0
    %2245 = vmatprep.subr.mxu0 0.0
    %2246 = vmatpush1.msra.mxu0 0.0
    %2247 = vmatprep.subr.mxu0 0.0
    %2248 = vmatpush1.msra.mxu0 0.0
    %2249 = vmatprep.subr.mxu0 0.0
    %2250 = vmatpush1.msra.mxu0 0.0
    %2251 = vmatprep.subr.mxu0 0.0
    %2252 = vmatpush1.msra.mxu0 0.0
    %2253 = vmatprep.subr.mxu0 0.0
    %2254 = vmatpush1.msra.mxu0 0.0
    %2255 = vmatprep.subr.mxu0 0.0
    %2256 = vmatpush1.msra.mxu0 0.0
    %2257 = vmatprep.subr.mxu0 0.0
    %2258 = vmatpush1.msra.mxu0 0.0
    %2259 = vmatprep.subr.mxu0 0.0
    %2260 = vmatpush1.msra.mxu0 0.0
    %2261 = vmatprep.subr.mxu0 0.0
    %2262 = vmatpush1.msra.mxu0 0.0
    %2263 = vmatprep.subr.mxu0 0.0
    %2264 = vmatpush1.msra.mxu0 0.0
    %2265 = vmatprep.subr.mxu0 0.0
    %2266 = vmatpush1.msra.mxu0 0.0
    %2267 = vmatprep.subr.mxu0 0.0
    %2268 = vmatpush1.msra.mxu0 0.0
    %2269 = vmatprep.subr.mxu0 0.0
    %2270 = vmatpush1.msra.mxu0 0.0
    %2271 = vmatprep.mubr.f32.mxu0 0.0
    %2272 = vmatmul.mubr.f32.gmra.mrb[0].mxu0 %v2205
    %v2273 = vpop.f32.mrb[0].mxu0
    %v2274 = vadd.f32 0.0, %v2273
    %v2275 = vpop.f32.mrb[0].mxu0
    %2276 = vdwg.mxu0
    %2278 = vrot.lane.b32.xlu0 %v2274, 16
    %v2279 = vpop.permute.xlu0 %2278
    %2281 = vst.msk [vmem:[#allocation2 + $0x8] sm:$0xff] %vm784, %v2279
    %v2282 = vld [vmem:[#allocation2] sm:$0xff]
    %v2283 = vld [vmem:[#allocation2 + $0x8] sm:$0xff]
    %s2284 = scalar_lea.vmem [#allocation9], 32
    %v2285 = vld [vmem:[%s2284] sm:$0xff]
    %v2286 = vld [vmem:[%s2284 + $0x8] sm:$0xff]
    %v2287 = vld [vmem:[%s2284 + $0x10] sm:$0xff]
    %v2288 = vld [vmem:[%s2284 + $0x18] sm:$0xff]
    %s2289 = scalar_lea.vmem %s11, 1
    %v2290 = vld [vmem:[%s2289] sm:$0x1]
    %v2292 = vlaneseq
    %v2293 = vshrl.u32 %v2292, 7
    %v2294 = vsub.s32 0, %v2293
    %v2295 = vrot.slane %v2290, %v2294
    %v2298 = vsel %vm305, %v2282, 0
    %v2301 = vsel %vm305, %v2283, 0
    %2303 = vmatprep.subr.mxu0 0.0
    %2304 = vmatpush1.msra.mxu0 %v2285
    %2305 = vmatprep.subr.mxu0 0.0
    %2306 = vmatpush1.msra.mxu0 %v2286
    %2307 = vmatprep.subr.mxu0 0.0
    %2308 = vmatpush1.msra.mxu0 %v2287
    %2309 = vmatprep.subr.mxu0 0.0
    %2310 = vmatpush1.msra.mxu0 %v2288
    %2311 = vmatprep.subr.mxu0 0.0
    %2312 = vmatpush1.msra.mxu0 0.0
    %2313 = vmatprep.subr.mxu0 0.0
    %2314 = vmatpush1.msra.mxu0 0.0
    %2315 = vmatprep.subr.mxu0 0.0
    %2316 = vmatpush1.msra.mxu0 0.0
    %2317 = vmatprep.subr.mxu0 0.0
    %2318 = vmatpush1.msra.mxu0 0.0
    %2319 = vmatprep.subr.mxu0 0.0
    %2320 = vmatpush1.msra.mxu0 0.0
    %2321 = vmatprep.subr.mxu0 0.0
    %2322 = vmatpush1.msra.mxu0 0.0
    %2323 = vmatprep.subr.mxu0 0.0
    %2324 = vmatpush1.msra.mxu0 0.0
    %2325 = vmatprep.subr.mxu0 0.0
    %2326 = vmatpush1.msra.mxu0 0.0
    %2327 = vmatprep.subr.mxu0 0.0
    %2328 = vmatpush1.msra.mxu0 0.0
    %2329 = vmatprep.subr.mxu0 0.0
    %2330 = vmatpush1.msra.mxu0 0.0
    %2331 = vmatprep.subr.mxu0 0.0
    %2332 = vmatpush1.msra.mxu0 0.0
    %2333 = vmatprep.subr.mxu0 0.0
    %2334 = vmatpush1.msra.mxu0 0.0
    %2335 = vmatprep.subr.mxu0 0.0
    %2336 = vmatpush1.msra.mxu0 0.0
    %2337 = vmatprep.subr.mxu0 0.0
    %2338 = vmatpush1.msra.mxu0 0.0
    %2339 = vmatprep.subr.mxu0 0.0
    %2340 = vmatpush1.msra.mxu0 0.0
    %2341 = vmatprep.subr.mxu0 0.0
    %2342 = vmatpush1.msra.mxu0 0.0
    %2343 = vmatprep.subr.mxu0 0.0
    %2344 = vmatpush1.msra.mxu0 0.0
    %2345 = vmatprep.subr.mxu0 0.0
    %2346 = vmatpush1.msra.mxu0 0.0
    %2347 = vmatprep.subr.mxu0 0.0
    %2348 = vmatpush1.msra.mxu0 0.0
    %2349 = vmatprep.subr.mxu0 0.0
    %2350 = vmatpush1.msra.mxu0 0.0
    %2351 = vmatprep.subr.mxu0 0.0
    %2352 = vmatpush1.msra.mxu0 0.0
    %2353 = vmatprep.subr.mxu0 0.0
    %2354 = vmatpush1.msra.mxu0 0.0
    %2355 = vmatprep.subr.mxu0 0.0
    %2356 = vmatpush1.msra.mxu0 0.0
    %2357 = vmatprep.subr.mxu0 0.0
    %2358 = vmatpush1.msra.mxu0 0.0
    %2359 = vmatprep.subr.mxu0 0.0
    %2360 = vmatpush1.msra.mxu0 0.0
    %2361 = vmatprep.subr.mxu0 0.0
    %2362 = vmatpush1.msra.mxu0 0.0
    %2363 = vmatprep.subr.mxu0 0.0
    %2364 = vmatpush1.msra.mxu0 0.0
    %2365 = vmatprep.subr.mxu0 0.0
    %2366 = vmatpush1.msra.mxu0 0.0
    %2367 = vmatprep.mubr.f32.mxu0 0.0
    %2368 = vmatmul.mubr.f32.gmra.mrb[0].mxu0 %v2298
    %v2369 = vpop.f32.mrb[0].mxu0
    %v2370 = vadd.f32 %v2295, %v2369
    %v2371 = vpop.f32.mrb[0].mxu0
    %2372 = vmatprep.mubr.f32.mxu0 0.0
    %2373 = vmatmul.mubr.f32.gmra.mrb[0].mxu0 %v2301
    %v2374 = vpop.f32.mrb[0].mxu0
    %v2375 = vadd.f32 %v2295, %v2374
    %v2376 = vpop.f32.mrb[0].mxu0
    %2377 = vdwg.mxu0
    %v2378 = vadd.f32 %v1516, %v2370
    %v2379 = vadd.f32 %v1517, %v2375
    %s2380 = scalar_lea.vmem %s16, 1
    %v2381 = vld [vmem:[%s2380] sm:$0x1]
    %s2382 = scalar_lea.vmem %s17, 1
    %v2383 = vld [vmem:[%s2382] sm:$0x1]
    %v2384 = vsel %vm305, %v2378, 0.0
    %2385 = vadd.xlane.f32.xlu0 %v2384
    %v2386 = vpop.xlane.xlu0 %2385
    %v2387 = vsel %vm305, %v2379, 0.0
    %2388 = vadd.xlane.f32.xlu0 %v2387
    %v2389 = vpop.xlane.xlu0 %2388
    %v2390 = vmul.f32 %v2386, %v312
    %v2391 = vmul.f32 %v2389, %v312
    %v2392 = vsub.f32 %v2378, %v2390
    %v2393 = vsub.f32 %v2379, %v2391
    %v2394 = vmul.f32 %v2392, %v2392
    %v2395 = vmul.f32 %v2393, %v2393
    %v2396 = vsel %vm305, %v2394, 0.0
    %2397 = vadd.xlane.f32.xlu0 %v2396
    %v2398 = vpop.xlane.xlu0 %2397
    %v2399 = vsel %vm305, %v2395, 0.0
    %2400 = vadd.xlane.f32.xlu0 %v2399
    %v2401 = vpop.xlane.xlu0 %2400
    %v2402 = vmul.f32 %v2398, %v312
    %v2403 = vmul.f32 %v2401, %v312
    %v2404 = vadd.f32 %v2402, 1e-12
    %v2405 = vadd.f32 %v2403, 1e-12
    %v2406 = vrsqrt.pop %v2404
    %v2407 = vrsqrt.pop %v2405
    %v2408 = vmul.f32 %v2392, %v2406
    %v2409 = vmul.f32 %v2393, %v2407
    %v2411 = vlaneseq
    %v2412 = vshrl.u32 %v2411, 7
    %v2413 = vsub.s32 0, %v2412
    %v2414 = vrot.slane %v2381, %v2413
    %v2416 = vmul.f32 %v2408, %v2414
    %v2417 = vmul.f32 %v2409, %v2414
    %v2419 = vlaneseq
    %v2420 = vshrl.u32 %v2419, 7
    %v2421 = vsub.s32 0, %v2420
    %v2422 = vrot.slane %v2383, %v2421
    %v2424 = vadd.f32 %v2416, %v2422
    %v2425 = vadd.f32 %v2417, %v2422
    %s2426 = scalar_lea.vmem %s12, 32
    %v2427 = vld [vmem:[%s2426] sm:$0xff]
    %v2428 = vld [vmem:[%s2426 + $0x8] sm:$0xff]
    %v2429 = vld [vmem:[%s2426 + $0x10] sm:$0xff]
    %v2430 = vld [vmem:[%s2426 + $0x18] sm:$0xff]
    %s2431 = scalar_lea.vmem %s13, 1
    %v2432 = vld [vmem:[%s2431] sm:$0x1]
    %v2434 = vlaneseq
    %v2435 = vshrl.u32 %v2434, 7
    %v2436 = vsub.s32 0, %v2435
    %v2437 = vrot.slane %v2432, %v2436
    %v2440 = vsel %vm305, %v2424, 0
    %v2443 = vsel %vm305, %v2425, 0
    %2445 = vmatprep.subr.mxu0 0.0
    %2446 = vmatpush1.msra.mxu0 %v2427
    %2447 = vmatprep.subr.mxu0 0.0
    %2448 = vmatpush1.msra.mxu0 %v2428
    %2449 = vmatprep.subr.mxu0 0.0
    %2450 = vmatpush1.msra.mxu0 %v2429
    %2451 = vmatprep.subr.mxu0 0.0
    %2452 = vmatpush1.msra.mxu0 %v2430
    %2453 = vmatprep.subr.mxu0 0.0
    %2454 = vmatpush1.msra.mxu0 0.0
    %2455 = vmatprep.subr.mxu0 0.0
    %2456 = vmatpush1.msra.mxu0 0.0
    %2457 = vmatprep.subr.mxu0 0.0
    %2458 = vmatpush1.msra.mxu0 0.0
    %2459 = vmatprep.subr.mxu0 0.0
    %2460 = vmatpush1.msra.mxu0 0.0
    %2461 = vmatprep.subr.mxu0 0.0
    %2462 = vmatpush1.msra.mxu0 0.0
    %2463 = vmatprep.subr.mxu0 0.0
    %2464 = vmatpush1.msra.mxu0 0.0
    %2465 = vmatprep.subr.mxu0 0.0
    %2466 = vmatpush1.msra.mxu0 0.0
    %2467 = vmatprep.subr.mxu0 0.0
    %2468 = vmatpush1.msra.mxu0 0.0
    %2469 = vmatprep.subr.mxu0 0.0
    %2470 = vmatpush1.msra.mxu0 0.0
    %2471 = vmatprep.subr.mxu0 0.0
    %2472 = vmatpush1.msra.mxu0 0.0
    %2473 = vmatprep.subr.mxu0 0.0
    %2474 = vmatpush1.msra.mxu0 0.0
    %2475 = vmatprep.subr.mxu0 0.0
    %2476 = vmatpush1.msra.mxu0 0.0
    %2477 = vmatprep.subr.mxu0 0.0
    %2478 = vmatpush1.msra.mxu0 0.0
    %2479 = vmatprep.subr.mxu0 0.0
    %2480 = vmatpush1.msra.mxu0 0.0
    %2481 = vmatprep.subr.mxu0 0.0
    %2482 = vmatpush1.msra.mxu0 0.0
    %2483 = vmatprep.subr.mxu0 0.0
    %2484 = vmatpush1.msra.mxu0 0.0
    %2485 = vmatprep.subr.mxu0 0.0
    %2486 = vmatpush1.msra.mxu0 0.0
    %2487 = vmatprep.subr.mxu0 0.0
    %2488 = vmatpush1.msra.mxu0 0.0
    %2489 = vmatprep.subr.mxu0 0.0
    %2490 = vmatpush1.msra.mxu0 0.0
    %2491 = vmatprep.subr.mxu0 0.0
    %2492 = vmatpush1.msra.mxu0 0.0
    %2493 = vmatprep.subr.mxu0 0.0
    %2494 = vmatpush1.msra.mxu0 0.0
    %2495 = vmatprep.subr.mxu0 0.0
    %2496 = vmatpush1.msra.mxu0 0.0
    %2497 = vmatprep.subr.mxu0 0.0
    %2498 = vmatpush1.msra.mxu0 0.0
    %2499 = vmatprep.subr.mxu0 0.0
    %2500 = vmatpush1.msra.mxu0 0.0
    %2501 = vmatprep.subr.mxu0 0.0
    %2502 = vmatpush1.msra.mxu0 0.0
    %2503 = vmatprep.subr.mxu0 0.0
    %2504 = vmatpush1.msra.mxu0 0.0
    %2505 = vmatprep.subr.mxu0 0.0
    %2506 = vmatpush1.msra.mxu0 0.0
    %2507 = vmatprep.subr.mxu0 0.0
    %2508 = vmatpush1.msra.mxu0 0.0
    %2509 = vmatprep.mubr.f32.mxu0 0.0
    %2510 = vmatmul.mubr.f32.gmra.mrb[0].mxu0 %v2440
    %v2511 = vpop.f32.mrb[0].mxu0
    %v2512 = vadd.f32 %v2437, %v2511
    %v2513 = vpop.f32.mrb[0].mxu0
    %2514 = vmatprep.mubr.f32.mxu0 0.0
    %2515 = vmatmul.mubr.f32.gmra.mrb[0].mxu0 %v2443
    %v2516 = vpop.f32.mrb[0].mxu0
    %v2517 = vadd.f32 %v2437, %v2516
    %v2518 = vpop.f32.mrb[0].mxu0
    %2519 = vdwg.mxu0
    %v2520 = vmul.f32 %v2512, %v2512
    %v2521 = vmul.f32 %v2517, %v2517
    %v2522 = vmul.f32 %v2512, %v2520
    %v2523 = vmul.f32 %v2517, %v2521
    %v2524 = vmul.f32 %v2522, 0.044715
    %v2525 = vmul.f32 %v2523, 0.044715
    %v2526 = vadd.f32 %v2512, %v2524
    %v2527 = vadd.f32 %v2517, %v2525
    %v2528 = vmul.f32 %v2526, 0.7978846
    %v2529 = vmul.f32 %v2527, 0.7978846
    %v2530 = vtanh.pop %v2528
    %v2531 = vtanh.pop %v2529
    %v2532 = vadd.f32 %v2530, 1.0
    %v2533 = vadd.f32 %v2531, 1.0
    %v2534 = vmul.f32 %v2532, 0.5
    %v2535 = vmul.f32 %v2533, 0.5
    %v2536 = vmul.f32 %v2512, %v2534
    %v2537 = vmul.f32 %v2517, %v2535
    %s2538 = scalar_lea.vmem [#allocation11], 64
    %v2539 = vld [vmem:[%s2538] sm:$0xff]
    %v2540 = vld [vmem:[%s2538 + $0x8] sm:$0xff]
    %v2541 = vld [vmem:[%s2538 + $0x10] sm:$0xff]
    %v2542 = vld [vmem:[%s2538 + $0x18] sm:$0xff]
    %v2543 = vld [vmem:[%s2538 + $0x20] sm:$0xff]
    %v2544 = vld [vmem:[%s2538 + $0x28] sm:$0xff]
    %v2545 = vld [vmem:[%s2538 + $0x30] sm:$0xff]
    %v2546 = vld [vmem:[%s2538 + $0x38] sm:$0xff]
    %s2547 = scalar_lea.vmem %s15, 1
    %v2548 = vld [vmem:[%s2547] sm:$0x1]
    %v2550 = vlaneseq
    %v2551 = vshrl.u32 %v2550, 7
    %v2552 = vsub.s32 0, %v2551
    %v2553 = vrot.slane %v2548, %v2552
    %v2556 = vsel %vm1390, %v2536, 0
    %v2559 = vsel %vm1390, %v2537, 0
    %2561 = vmatprep.subr.mxu0 0.0
    %2562 = vmatpush1.msra.mxu0 %v2539
    %2563 = vmatprep.subr.mxu0 0.0
    %2564 = vmatpush1.msra.mxu0 %v2540
    %2565 = vmatprep.subr.mxu0 0.0
    %2566 = vmatpush1.msra.mxu0 %v2541
    %2567 = vmatprep.subr.mxu0 0.0
    %2568 = vmatpush1.msra.mxu0 %v2542
    %2569 = vmatprep.subr.mxu0 0.0
    %2570 = vmatpush1.msra.mxu0 %v2543
    %2571 = vmatprep.subr.mxu0 0.0
    %2572 = vmatpush1.msra.mxu0 %v2544
    %2573 = vmatprep.subr.mxu0 0.0
    %2574 = vmatpush1.msra.mxu0 %v2545
    %2575 = vmatprep.subr.mxu0 0.0
    %2576 = vmatpush1.msra.mxu0 %v2546
    %2577 = vmatprep.subr.mxu0 0.0
    %2578 = vmatpush1.msra.mxu0 0.0
    %2579 = vmatprep.subr.mxu0 0.0
    %2580 = vmatpush1.msra.mxu0 0.0
    %2581 = vmatprep.subr.mxu0 0.0
    %2582 = vmatpush1.msra.mxu0 0.0
    %2583 = vmatprep.subr.mxu0 0.0
    %2584 = vmatpush1.msra.mxu0 0.0
    %2585 = vmatprep.subr.mxu0 0.0
    %2586 = vmatpush1.msra.mxu0 0.0
    %2587 = vmatprep.subr.mxu0 0.0
    %2588 = vmatpush1.msra.mxu0 0.0
    %2589 = vmatprep.subr.mxu0 0.0
    %2590 = vmatpush1.msra.mxu0 0.0
    %2591 = vmatprep.subr.mxu0 0.0
    %2592 = vmatpush1.msra.mxu0 0.0
    %2593 = vmatprep.subr.mxu0 0.0
    %2594 = vmatpush1.msra.mxu0 0.0
    %2595 = vmatprep.subr.mxu0 0.0
    %2596 = vmatpush1.msra.mxu0 0.0
    %2597 = vmatprep.subr.mxu0 0.0
    %2598 = vmatpush1.msra.mxu0 0.0
    %2599 = vmatprep.subr.mxu0 0.0
    %2600 = vmatpush1.msra.mxu0 0.0
    %2601 = vmatprep.subr.mxu0 0.0
    %2602 = vmatpush1.msra.mxu0 0.0
    %2603 = vmatprep.subr.mxu0 0.0
    %2604 = vmatpush1.msra.mxu0 0.0
    %2605 = vmatprep.subr.mxu0 0.0
    %2606 = vmatpush1.msra.mxu0 0.0
    %2607 = vmatprep.subr.mxu0 0.0
    %2608 = vmatpush1.msra.mxu0 0.0
    %2609 = vmatprep.subr.mxu0 0.0
    %2610 = vmatpush1.msra.mxu0 0.0
    %2611 = vmatprep.subr.mxu0 0.0
    %2612 = vmatpush1.msra.mxu0 0.0
    %2613 = vmatprep.subr.mxu0 0.0
    %2614 = vmatpush1.msra.mxu0 0.0
    %2615 = vmatprep.subr.mxu0 0.0
    %2616 = vmatpush1.msra.mxu0 0.0
    %2617 = vmatprep.subr.mxu0 0.0
    %2618 = vmatpush1.msra.mxu0 0.0
    %2619 = vmatprep.subr.mxu0 0.0
    %2620 = vmatpush1.msra.mxu0 0.0
    %2621 = vmatprep.subr.mxu0 0.0
    %2622 = vmatpush1.msra.mxu0 0.0
    %2623 = vmatprep.subr.mxu0 0.0
    %2624 = vmatpush1.msra.mxu0 0.0
    %2625 = vmatprep.mubr.f32.mxu0 0.0
    %2626 = vmatmul.mubr.f32.gmra.mrb[0].mxu0 %v2556
    %v2627 = vpop.f32.mrb[0].mxu0
    %v2628 = vadd.f32 %v2553, %v2627
    %v2629 = vpop.f32.mrb[0].mxu0
    %2630 = vmatprep.mubr.f32.mxu0 0.0
    %2631 = vmatmul.mubr.f32.gmra.mrb[0].mxu0 %v2559
    %v2632 = vpop.f32.mrb[0].mxu0
    %v2633 = vadd.f32 %v2553, %v2632
    %v2634 = vpop.f32.mrb[0].mxu0
    %2635 = vdwg.mxu0
    %v2636 = vadd.f32 %v2424, %v2628
    %v2637 = vadd.f32 %v2425, %v2633
    %s2638 = scalar_lea.vmem %s18, 1
    %v2639 = vld [vmem:[%s2638] sm:$0x1]
    %s2640 = scalar_lea.vmem %s19, 1
    %v2641 = vld [vmem:[%s2640] sm:$0x1]
    %v2642 = vsel %vm305, %v2636, 0.0
    %2643 = vadd.xlane.f32.xlu0 %v2642
    %v2644 = vpop.xlane.xlu0 %2643
    %v2645 = vsel %vm305, %v2637, 0.0
    %2646 = vadd.xlane.f32.xlu0 %v2645
    %v2647 = vpop.xlane.xlu0 %2646
    %v2648 = vmul.f32 %v2644, %v312
    %v2649 = vmul.f32 %v2647, %v312
    %v2650 = vsub.f32 %v2636, %v2648
    %v2651 = vsub.f32 %v2637, %v2649
    %v2652 = vmul.f32 %v2650, %v2650
    %v2653 = vmul.f32 %v2651, %v2651
    %v2654 = vsel %vm305, %v2652, 0.0
    %2655 = vadd.xlane.f32.xlu0 %v2654
    %v2656 = vpop.xlane.xlu0 %2655
    %v2657 = vsel %vm305, %v2653, 0.0
    %2658 = vadd.xlane.f32.xlu0 %v2657
    %v2659 = vpop.xlane.xlu0 %2658
    %v2660 = vmul.f32 %v2656, %v312
    %v2661 = vmul.f32 %v2659, %v312
    %v2662 = vadd.f32 %v2660, 1e-12
    %v2663 = vadd.f32 %v2661, 1e-12
    %v2664 = vrsqrt.pop %v2662
    %v2665 = vrsqrt.pop %v2663
    %v2666 = vmul.f32 %v2650, %v2664
    %v2667 = vmul.f32 %v2651, %v2665
    %v2669 = vlaneseq
    %v2670 = vshrl.u32 %v2669, 7
    %v2671 = vsub.s32 0, %v2670
    %v2672 = vrot.slane %v2639, %v2671
    %v2674 = vmul.f32 %v2666, %v2672
    %v2675 = vmul.f32 %v2667, %v2672
    %v2677 = vlaneseq
    %v2678 = vshrl.u32 %v2677, 7
    %v2679 = vsub.s32 0, %v2678
    %v2680 = vrot.slane %v2641, %v2679
    %v2682 = vadd.f32 %v2674, %v2680
    %v2683 = vadd.f32 %v2675, %v2680
    %v2684 = vlaneseq
    %v2685 = vshrl.u32 %v2684, 7
    %v2686 = vmul.u32 %v2685, 8
    %vm2687 = vcmp.eq.s32.totalorder %v163, %v2686
    %v2688 = vsel %vm2687, 1.0, 0.0
    %v2690 = vsel %vm451, %v2688, 0
    %2692 = vmatprep.subr.mxu0 0.0
    %2693 = vmatpush1.msra.mxu0 %v2682
    %2694 = vmatprep.subr.mxu0 0.0
    %2695 = vmatpush1.msra.mxu0 %v2683
    %2696 = vmatprep.subr.mxu0 0.0
    %2697 = vmatpush1.msra.mxu0 0.0
    %2698 = vmatprep.subr.mxu0 0.0
    %2699 = vmatpush1.msra.mxu0 0.0
    %2700 = vmatprep.subr.mxu0 0.0
    %2701 = vmatpush1.msra.mxu0 0.0
    %2702 = vmatprep.subr.mxu0 0.0
    %2703 = vmatpush1.msra.mxu0 0.0
    %2704 = vmatprep.subr.mxu0 0.0
    %2705 = vmatpush1.msra.mxu0 0.0
    %2706 = vmatprep.subr.mxu0 0.0
    %2707 = vmatpush1.msra.mxu0 0.0
    %2708 = vmatprep.subr.mxu0 0.0
    %2709 = vmatpush1.msra.mxu0 0.0
    %2710 = vmatprep.subr.mxu0 0.0
    %2711 = vmatpush1.msra.mxu0 0.0
    %2712 = vmatprep.subr.mxu0 0.0
    %2713 = vmatpush1.msra.mxu0 0.0
    %2714 = vmatprep.subr.mxu0 0.0
    %2715 = vmatpush1.msra.mxu0 0.0
    %2716 = vmatprep.subr.mxu0 0.0
    %2717 = vmatpush1.msra.mxu0 0.0
    %2718 = vmatprep.subr.mxu0 0.0
    %2719 = vmatpush1.msra.mxu0 0.0
    %2720 = vmatprep.subr.mxu0 0.0
    %2721 = vmatpush1.msra.mxu0 0.0
    %2722 = vmatprep.subr.mxu0 0.0
    %2723 = vmatpush1.msra.mxu0 0.0
    %2724 = vmatprep.subr.mxu0 0.0
    %2725 = vmatpush1.msra.mxu0 0.0
    %2726 = vmatprep.subr.mxu0 0.0
    %2727 = vmatpush1.msra.mxu0 0.0
    %2728 = vmatprep.subr.mxu0 0.0
    %2729 = vmatpush1.msra.mxu0 0.0
    %2730 = vmatprep.subr.mxu0 0.0
    %2731 = vmatpush1.msra.mxu0 0.0
    %2732 = vmatprep.subr.mxu0 0.0
    %2733 = vmatpush1.msra.mxu0 0.0
    %2734 = vmatprep.subr.mxu0 0.0
    %2735 = vmatpush1.msra.mxu0 0.0
    %2736 = vmatprep.subr.mxu0 0.0
    %2737 = vmatpush1.msra.mxu0 0.0
    %2738 = vmatprep.subr.mxu0 0.0
    %2739 = vmatpush1.msra.mxu0 0.0
    %2740 = vmatprep.subr.mxu0 0.0
    %2741 = vmatpush1.msra.mxu0 0.0
    %2742 = vmatprep.subr.mxu0 0.0
    %2743 = vmatpush1.msra.mxu0 0.0
    %2744 = vmatprep.subr.mxu0 0.0
    %2745 = vmatpush1.msra.mxu0 0.0
    %2746 = vmatprep.subr.mxu0 0.0
    %2747 = vmatpush1.msra.mxu0 0.0
    %2748 = vmatprep.subr.mxu0 0.0
    %2749 = vmatpush1.msra.mxu0 0.0
    %2750 = vmatprep.subr.mxu0 0.0
    %2751 = vmatpush1.msra.mxu0 0.0
    %2752 = vmatprep.subr.mxu0 0.0
    %2753 = vmatpush1.msra.mxu0 0.0
    %2754 = vmatprep.subr.mxu0 0.0
    %2755 = vmatpush1.msra.mxu0 0.0
    %2756 = vmatprep.mubr.f32.mxu0 0.0
    %2757 = vmatmul.mubr.f32.gmra.mrb[0].mxu0 %v2690
    %v2758 = vpop.f32.mrb[0].mxu0
    %v2759 = vadd.f32 0.0, %v2758
    %v2760 = vpop.f32.mrb[0].mxu0
    %2761 = vdwg.mxu0
    %v2762 = vld [vmem:[#allocation12] sm:$0xff]
    %v2763 = vld [vmem:[#allocation12 + $0x8] sm:$0xff]
    %v2764 = vld [vmem:[#allocation12 + $0x10] sm:$0xff]
    %v2765 = vld [vmem:[#allocation12 + $0x18] sm:$0xff]
    %v2766 = vld [vmem:[%s21] sm:$0x1]
    %v2768 = vlaneseq
    %v2769 = vshrl.u32 %v2768, 7
    %v2770 = vsub.s32 0, %v2769
    %v2771 = vrot.slane %v2766, %v2770
    %v2774 = vsel %vm305, %v2759, 0
    %2776 = vmatprep.subr.mxu0 0.0
    %2777 = vmatpush1.msra.mxu0 %v2762
    %2778 = vmatprep.subr.mxu0 0.0
    %2779 = vmatpush1.msra.mxu0 %v2763
    %2780 = vmatprep.subr.mxu0 0.0
    %2781 = vmatpush1.msra.mxu0 %v2764
    %2782 = vmatprep.subr.mxu0 0.0
    %2783 = vmatpush1.msra.mxu0 %v2765
    %2784 = vmatprep.subr.mxu0 0.0
    %2785 = vmatpush1.msra.mxu0 0.0
    %2786 = vmatprep.subr.mxu0 0.0
    %2787 = vmatpush1.msra.mxu0 0.0
    %2788 = vmatprep.subr.mxu0 0.0
    %2789 = vmatpush1.msra.mxu0 0.0
    %2790 = vmatprep.subr.mxu0 0.0
    %2791 = vmatpush1.msra.mxu0 0.0
    %2792 = vmatprep.subr.mxu0 0.0
    %2793 = vmatpush1.msra.mxu0 0.0
    %2794 = vmatprep.subr.mxu0 0.0
    %2795 = vmatpush1.msra.mxu0 0.0
    %2796 = vmatprep.subr.mxu0 0.0
    %2797 = vmatpush1.msra.mxu0 0.0
    %2798 = vmatprep.subr.mxu0 0.0
    %2799 = vmatpush1.msra.mxu0 0.0
    %2800 = vmatprep.subr.mxu0 0.0
    %2801 = vmatpush1.msra.mxu0 0.0
    %2802 = vmatprep.subr.mxu0 0.0
    %2803 = vmatpush1.msra.mxu0 0.0
    %2804 = vmatprep.subr.mxu0 0.0
    %2805 = vmatpush1.msra.mxu0 0.0
    %2806 = vmatprep.subr.mxu0 0.0
    %2807 = vmatpush1.msra.mxu0 0.0
    %2808 = vmatprep.subr.mxu0 0.0
    %2809 = vmatpush1.msra.mxu0 0.0
    %2810 = vmatprep.subr.mxu0 0.0
    %2811 = vmatpush1.msra.mxu0 0.0
    %2812 = vmatprep.subr.mxu0 0.0
    %2813 = vmatpush1.msra.mxu0 0.0
    %2814 = vmatprep.subr.mxu0 0.0
    %2815 = vmatpush1.msra.mxu0 0.0
    %2816 = vmatprep.subr.mxu0 0.0
    %2817 = vmatpush1.msra.mxu0 0.0
    %2818 = vmatprep.subr.mxu0 0.0
    %2819 = vmatpush1.msra.mxu0 0.0
    %2820 = vmatprep.subr.mxu0 0.0
    %2821 = vmatpush1.msra.mxu0 0.0
    %2822 = vmatprep.subr.mxu0 0.0
    %2823 = vmatpush1.msra.mxu0 0.0
    %2824 = vmatprep.subr.mxu0 0.0
    %2825 = vmatpush1.msra.mxu0 0.0
    %2826 = vmatprep.subr.mxu0 0.0
    %2827 = vmatpush1.msra.mxu0 0.0
    %2828 = vmatprep.subr.mxu0 0.0
    %2829 = vmatpush1.msra.mxu0 0.0
    %2830 = vmatprep.subr.mxu0 0.0
    %2831 = vmatpush1.msra.mxu0 0.0
    %2832 = vmatprep.subr.mxu0 0.0
    %2833 = vmatpush1.msra.mxu0 0.0
    %2834 = vmatprep.subr.mxu0 0.0
    %2835 = vmatpush1.msra.mxu0 0.0
    %2836 = vmatprep.subr.mxu0 0.0
    %2837 = vmatpush1.msra.mxu0 0.0
    %2838 = vmatprep.subr.mxu0 0.0
    %2839 = vmatpush1.msra.mxu0 0.0
    %2840 = vmatprep.mubr.f32.mxu0 0.0
    %2841 = vmatmul.mubr.f32.gmra.mrb[0].mxu0 %v2774
    %v2842 = vpop.f32.mrb[0].mxu0
    %v2843 = vadd.f32 %v2771, %v2842
    %v2844 = vpop.f32.mrb[0].mxu0
    %2845 = vdwg.mxu0
    %v2846 = vtanh.pop %v2843
    %v2847 = vld [vmem:[%s22] sm:$0xff]
    %v2848 = vld [vmem:[%s22 + $0x8] sm:$0xff]
    %v2849 = vld [vmem:[%s22 + $0x10] sm:$0xff]
    %v2850 = vld [vmem:[%s22 + $0x18] sm:$0xff]
    %v2851 = vld [vmem:[%s23] sm:$0x1]
    %v2853 = vlaneseq
    %v2854 = vshrl.u32 %v2853, 7
    %v2855 = vsub.s32 0, %v2854
    %v2856 = vrot.slane %v2851, %v2855
    %v2859 = vsel %vm305, %v2846, 0
    %2861 = vmatprep.subr.mxu0 0.0
    %2862 = vmatpush1.msra.mxu0 %v2847
    %2863 = vmatprep.subr.mxu0 0.0
    %2864 = vmatpush1.msra.mxu0 %v2848
    %2865 = vmatprep.subr.mxu0 0.0
    %2866 = vmatpush1.msra.mxu0 %v2849
    %2867 = vmatprep.subr.mxu0 0.0
    %2868 = vmatpush1.msra.mxu0 %v2850
    %2869 = vmatprep.subr.mxu0 0.0
    %2870 = vmatpush1.msra.mxu0 0.0
    %2871 = vmatprep.subr.mxu0 0.0
    %2872 = vmatpush1.msra.mxu0 0.0
    %2873 = vmatprep.subr.mxu0 0.0
    %2874 = vmatpush1.msra.mxu0 0.0
    %2875 = vmatprep.subr.mxu0 0.0
    %2876 = vmatpush1.msra.mxu0 0.0
    %2877 = vmatprep.subr.mxu0 0.0
    %2878 = vmatpush1.msra.mxu0 0.0
    %2879 = vmatprep.subr.mxu0 0.0
    %2880 = vmatpush1.msra.mxu0 0.0
    %2881 = vmatprep.subr.mxu0 0.0
    %2882 = vmatpush1.msra.mxu0 0.0
    %2883 = vmatprep.subr.mxu0 0.0
    %2884 = vmatpush1.msra.mxu0 0.0
    %2885 = vmatprep.subr.mxu0 0.0
    %2886 = vmatpush1.msra.mxu0 0.0
    %2887 = vmatprep.subr.mxu0 0.0
    %2888 = vmatpush1.msra.mxu0 0.0
    %2889 = vmatprep.subr.mxu0 0.0
    %2890 = vmatpush1.msra.mxu0 0.0
    %2891 = vmatprep.subr.mxu0 0.0
    %2892 = vmatpush1.msra.mxu0 0.0
    %2893 = vmatprep.subr.mxu0 0.0
    %2894 = vmatpush1.msra.mxu0 0.0
    %2895 = vmatprep.subr.mxu0 0.0
    %2896 = vmatpush1.msra.mxu0 0.0
    %2897 = vmatprep.subr.mxu0 0.0
    %2898 = vmatpush1.msra.mxu0 0.0
    %2899 = vmatprep.subr.mxu0 0.0
    %2900 = vmatpush1.msra.mxu0 0.0
    %2901 = vmatprep.subr.mxu0 0.0
    %2902 = vmatpush1.msra.mxu0 0.0
    %2903 = vmatprep.subr.mxu0 0.0
    %2904 = vmatpush1.msra.mxu0 0.0
    %2905 = vmatprep.subr.mxu0 0.0
    %2906 = vmatpush1.msra.mxu0 0.0
    %2907 = vmatprep.subr.mxu0 0.0
    %2908 = vmatpush1.msra.mxu0 0.0
    %2909 = vmatprep.subr.mxu0 0.0
    %2910 = vmatpush1.msra.mxu0 0.0
    %2911 = vmatprep.subr.mxu0 0.0
    %2912 = vmatpush1.msra.mxu0 0.0
    %2913 = vmatprep.subr.mxu0 0.0
    %2914 = vmatpush1.msra.mxu0 0.0
    %2915 = vmatprep.subr.mxu0 0.0
    %2916 = vmatpush1.msra.mxu0 0.0
    %2917 = vmatprep.subr.mxu0 0.0
    %2918 = vmatpush1.msra.mxu0 0.0
    %2919 = vmatprep.subr.mxu0 0.0
    %2920 = vmatpush1.msra.mxu0 0.0
    %2921 = vmatprep.subr.mxu0 0.0
    %2922 = vmatpush1.msra.mxu0 0.0
    %2923 = vmatprep.subr.mxu0 0.0
    %2924 = vmatpush1.msra.mxu0 0.0
    %2925 = vmatprep.mubr.f32.mxu0 0.0
    %2926 = vmatmul.mubr.f32.gmra.mrb[0].mxu0 %v2859
    %v2927 = vpop.f32.mrb[0].mxu0
    %v2928 = vadd.f32 %v2856, %v2927
    %v2929 = vpop.f32.mrb[0].mxu0
    %2930 = vdwg.mxu0
    %2931 = vst [vmem:[#allocation14] sm:$0x3] %v2928
    // Predicated region
    $region122: #{intent_classifier_forward.1} parent=1 // pred_check
      _
    $region123: #{intent_classifier_forward.1} parent=1 // pred_check_branch
      %2933 = sbr.rel (0) target = $region125
    $region124: #{intent_classifier_forward.1} parent=1 // pred_region
      %s2935 = ssub.s32 32, 32
      %2936 = vsyncadd [#allocation5], %s2935
      %s2938 = sshll.u32 [#allocation14], 4
      %s2939 = int_to_ptr.vmem [resolvable:$true] %s2938
      %2941 = dma.vmem_to_hbm [thread:$0]  %s2939, 32, %s24, [#allocation5]
    $region125: #{intent_classifier_forward.1} parent=1 // pred_fallthru
      _
    // Predicated region
    $region126: #{intent_classifier_forward.1} parent=1 // pred_check
      _
    $region127: #{intent_classifier_forward.1} parent=1 // pred_check_branch
      %2943 = sbr.rel (0) target = $region129
    $region128: #{intent_classifier_forward.1} parent=1 // pred_region
      %2944 = dma.done [#allocation5], 32
    $region129: #{intent_classifier_forward.1} parent=1 // pred_fallthru
      _
    %2945 = vsyncpa [#allocation4], 1
    %2946 = vsyncpa [#allocation7], 1
    %2947 = vsyncpa [#allocation10], 1
    %2948 = vsyncpa [#allocation13], 1
    %2949 = vsyncpa [#allocation5], 1

</llo_original>
